<compile_context>
chip_gen: v5e
topology: v5e:2x2
jax: 0.10.0
libtpu: 0.0.40
codegen_flags: <defaults>
</compile_context>

<pallas_src>
import math

import jax
import jax.numpy as jnp
from jax import lax
from jax.experimental import pallas as pl
from jax.experimental.pallas import tpu as pltpu

EMBED_DIM = 768   # fixed in the PyTorch module (in_channels=768)
LANES = 128


def _round_up(v, m):
    return ((v + m - 1) // m) * m


def _cdiv(a, b):
    return -(-a // b)


# ----------------------------------------------------------------------------- #
# Pallas kernel: fused conv-bank matmul + tap projection + max-pool + MLP head.
# ----------------------------------------------------------------------------- #
def make_cnn1d_kernel(filter_sizes, n_filters, b_blk, seq_len):
    max_fs = max(filter_sizes)

    def kernel(x_ref, wall_ref, proj_ref, convb_ref, fcw_ref, fcb_ref,
               fc1w_ref, fc1b_ref, out_ref):
        m_rows = b_blk * seq_len
        x2d = x_ref[...].reshape(m_rows, EMBED_DIM)          # (M, 768) bf16

        # (1) ONE lane-dense MXU matmul: every filter size / tap packed into 128
        #     output columns (column off_g + k*nf + f).
        y = jnp.dot(x2d, wall_ref[...],
                    preferred_element_type=jnp.float32)      # (M, 128) f32

        # (2) realign taps k>=1 onto their group's tap-0 lane slot with a tiny
        #     0/1 projection matmul (full-width, MXU) + a time shift.  No 8-lane
        #     slicing, no lane masks needed: zero weight rows/cols make the
        #     contributions of non-participating lanes exactly zero.
        acc = y
        if max_fs > 1:
            z = jnp.dot(y.astype(jnp.bfloat16), proj_ref[...],
                        preferred_element_type=jnp.float32)  # (M, (max_fs-1)*128)
            for k in range(1, max_fs):
                zk = z[:, (k - 1) * LANES:k * LANES]         # 128-aligned slice
                # time shift by k rows; wrapped rows only land on positions that
                # are masked to -inf below (or on lanes where zk is all-zero).
                acc = acc + jnp.roll(zk, -k, axis=0)

        # (3) mask invalid tail time positions per filter size (iota masks), then
        #     one full-width max over time per batch row.
        acc3 = acc.reshape(b_blk, seq_len, LANES)
        lane = lax.broadcasted_iota(jnp.int32, (1, 1, LANES), 2)
        limit = jnp.full((1, 1, LANES), seq_len - 1, jnp.int32)
        off = 0
        for fs in filter_sizes:
            limit = jnp.where((lane >= off) & (lane < off + n_filters),
                              seq_len - fs, limit)
            off += fs * n_filters
        tpos = lax.broadcasted_iota(jnp.int32, (b_blk, seq_len, LANES), 1)
        acc3 = jnp.where(tpos <= limit, acc3, -jnp.inf)
        feat = jnp.max(acc3, axis=1)                         # (b_blk, 128) f32

        # conv bias + ReLU after pooling (valid: bias constant over time, ReLU
        # monotone, so ReLU(max(x)+b) == max(ReLU(x+b))).
        feat = jnp.maximum(feat + convb_ref[...], 0.0)

        # (4) MLP head, lane-dense; f32 epilogue, bf16 MXU operands only.
        h = jnp.maximum(
            jnp.dot(feat.astype(jnp.bfloat16), fcw_ref[...],
                    preferred_element_type=jnp.float32) + fcb_ref[...],
            0.0)                                             # (b_blk, 128) f32

        # fc1 (hidden -> 1) as an NT dot so the result is already (1, b_blk)
        # (lane-dense output, no transpose/relayout of a column vector).
        out_row = lax.dot_general(fc1w_ref[...], h, (((1,), (1,)), ((), ())),
                                  preferred_element_type=jnp.float32)  # (1, b_blk)
        out_row = out_row + fc1b_ref[0]                      # SMEM scalar bias
        out_ref[...] = out_row.reshape(1, 1, b_blk)

    return kernel


def _choose_b_blk(batch, seq_len):
    """~512 MXU rows per grid step, aligned to 256 rows, capped by VMEM budget."""
    b_blk = max(1, _cdiv(512, seq_len))
    step = 256 // math.gcd(seq_len, 256)
    aligned = _cdiv(b_blk, step) * step
    if aligned * seq_len * EMBED_DIM * 2 <= 8 * 2 ** 20:     # x tile <= 8 MiB (v7x)
        b_blk = aligned
    return b_blk


def cnn1d_forward(embedded_blc, params_k, filter_sizes, n_filters, hidden_size,
                  b_blk=None):
    """embedded_blc: (B, L, 768) channels-last embeddings (== langmodel output[0])."""
    B, L, C = embedded_blc.shape
    assert C == EMBED_DIM

    if b_blk is None:
        b_blk = _choose_b_blk(B, L)

    x = embedded_blc
    if x.dtype != jnp.bfloat16:
        # Only hit when upstream did not already produce bf16 activations.
        x = x.astype(jnp.bfloat16)

    Bp = _round_up(B, b_blk)
    if Bp != B:
        x = jnp.concatenate([x, jnp.zeros((Bp - B, L, C), x.dtype)], axis=0)
    nb = Bp // b_blk

    proj_n = params_k["proj"].shape[1]
    kernel = make_cnn1d_kernel(tuple(filter_sizes), n_filters, b_blk, L)

    grid_spec = pltpu.PrefetchScalarGridSpec(
        num_scalar_prefetch=0,
        grid=(nb,),
        in_specs=[
            pl.BlockSpec((b_blk, L, C), lambda b: (b, 0, 0)),      # x tile (pipelined)
            pl.BlockSpec((C, LANES), lambda b: (0, 0)),            # W_all (resident)
            pl.BlockSpec((LANES, proj_n), lambda b: (0, 0)),       # tap projection
            pl.BlockSpec((1, LANES), lambda b: (0, 0)),            # conv biases
            pl.BlockSpec((LANES, LANES), lambda b: (0, 0)),        # fc_w (padded)
            pl.BlockSpec((1, LANES), lambda b: (0, 0)),            # fc_b
            pl.BlockSpec((1, LANES), lambda b: (0, 0)),            # fc1_w row
            pl.BlockSpec(memory_space=pltpu.MemorySpace.SMEM),     # fc1_b scalar
        ],
        out_specs=pl.BlockSpec((1, 1, b_blk), lambda b: (b, 0, 0)),
    )

    # Advisory cost estimate so XLA schedules the surrounding gather correctly.
    flops = (2 * Bp * L * EMBED_DIM * LANES
             + 2 * Bp * L * LANES * proj_n
             + 2 * Bp * LANES * LANES)
    weight_bytes = (EMBED_DIM * LANES + LANES * proj_n + LANES * LANES) * 2 \
        + 3 * LANES * 4 + 4
    bytes_accessed = Bp * L * C * 2 + weight_bytes + Bp * 4
    cost = pl.CostEstimate(flops=flops, transcendentals=0,
                           bytes_accessed=bytes_accessed)

    # Raise scoped VMEM only if the tile actually needs it (big b_blk / long L).
    m_rows = b_blk * L
    est_vmem = (2 * m_rows * EMBED_DIM * 2                    # double-buffered x
                + 3 * m_rows * (LANES + proj_n) * 4           # y / z / acc temps
                + 2 * weight_bytes + (1 << 20))
    vmem_limit = None
    if est_vmem > 14 * 2 ** 20:
        vmem_limit = int(min(max(est_vmem * 3 // 2, 16 * 2 ** 20), 48 * 2 ** 20))

    out = pl.pallas_call(
        kernel,
        out_shape=jax.ShapeDtypeStruct((nb, 1, b_blk), jnp.float32),
        grid_spec=grid_spec,
        compiler_params=pltpu.CompilerParams(
            dimension_semantics=("parallel",),   # lets v7x shard the batch grid
            vmem_limit_bytes=vmem_limit,
        ),
        cost_estimate=cost,
    )(x, params_k["w_all"], params_k["proj"], params_k["convb"],
      params_k["fc_w"], params_k["fc_b"], params_k["fc1_w"], params_k["fc1_b"])

    return out.reshape(Bp)[:B].reshape(B, 1)


# ----------------------------------------------------------------------------- #
# Pure-JAX reference that mirrors the PyTorch forward (for validation).
# ----------------------------------------------------------------------------- #
def torch_like_reference(embedded_ncl, params_pt, filter_sizes):
    pooled = []
    for i, _ in enumerate(filter_sizes):
        w = params_pt[f"conv{i}_w"]     # (nf, C, fs) -- torch Conv1d weight layout
        b = params_pt[f"conv{i}_b"]     # (nf,)
        conv = lax.conv_general_dilated(
            embedded_ncl, w, window_strides=(1,), padding="VALID",
            dimension_numbers=("NCH", "OIH", "NCH"),
        ) + b[None, :, None]
        conv = jnp.maximum(conv, 0.0)
        pooled.append(jnp.max(conv, axis=2))
    cat = jnp.concatenate(pooled, axis=1)
    h = jnp.maximum(cat @ params_pt["fc_w"].T + params_pt["fc_b"], 0.0)
    return h @ params_pt["fc1_w"].T + params_pt["fc1_b"]


# ----------------------------------------------------------------------------- #
# Deterministic parameter construction (torch layouts -> fused kernel layouts).
# ----------------------------------------------------------------------------- #
def init_params(key, filter_sizes, n_filters, hidden_size):
    n = len(filter_sizes)
    keys = jax.random.split(key, 2 * n + 4)
    params_pt = {}

    for i, fs in enumerate(filter_sizes):
        scale = 1.0 / jnp.sqrt(jnp.float32(EMBED_DIM * fs))
        w = jax.random.normal(keys[2 * i], (n_filters, EMBED_DIM, fs),
                              jnp.float32) * scale
        b = jax.random.normal(keys[2 * i + 1], (n_filters,), jnp.float32) * 0.01
        params_pt[f"conv{i}_w"] = w
        params_pt[f"conv{i}_b"] = b

    f_total = n * n_filters
    fc_w = jax.random.normal(keys[2 * n], (hidden_size, f_total),
                             jnp.float32) / jnp.sqrt(jnp.float32(f_total))
    fc_b = jax.random.normal(keys[2 * n + 1], (hidden_size,), jnp.float32) * 0.01
    fc1_w = jax.random.normal(keys[2 * n + 2], (1, hidden_size),
                              jnp.float32) / jnp.sqrt(jnp.float32(hidden_size))
    fc1_b = jax.random.normal(keys[2 * n + 3], (1,), jnp.float32) * 0.01
    params_pt.update(fc_w=fc_w, fc_b=fc_b, fc1_w=fc1_w, fc1_b=fc1_b)

    # --- fused / padded kernel layouts --------------------------------------- #
    max_fs = max(filter_sizes)
    tap_total = sum(filter_sizes) * n_filters
    assert tap_total <= LANES, "packed conv taps must fit in 128 lanes"
    assert hidden_size <= LANES
    proj_n = max(max_fs - 1, 1) * LANES

    # W_all: column off_g + k*nf + f  <-  conv weight (group g, tap k, filter f).
    w_all = jnp.zeros((EMBED_DIM, LANES), jnp.float32)
    off = 0
    for i, fs in enumerate(filter_sizes):
        w = params_pt[f"conv{i}_w"]                          # (nf, C, fs)
        for k in range(fs):
            w_all = w_all.at[:, off + k * n_filters:
                             off + (k + 1) * n_filters].set(w[:, :, k].T)
        off += fs * n_filters

    # Tap projection: block (k-1) maps tap-k columns back onto the group's tap-0
    # lanes; zero everywhere else.
    proj = jnp.zeros((LANES, proj_n), jnp.float32)
    off = 0
    for i, fs in enumerate(filter_sizes):
        for k in range(1, fs):
            r0 = off + k * n_filters
            c0 = (k - 1) * LANES + off
            proj = proj.at[r0:r0 + n_filters, c0:c0 + n_filters].set(
                jnp.eye(n_filters, dtype=jnp.float32))
        off += fs * n_filters

    # Conv bias / fc weight rows placed at the tap-0 lane slots (off_g + f).
    convb = jnp.zeros((1, LANES), jnp.float32)
    fcw_pad = jnp.zeros((LANES, LANES), jnp.float32)
    off = 0
    for i, fs in enumerate(filter_sizes):
        convb = convb.at[0, off:off + n_filters].set(params_pt[f"conv{i}_b"])
        fcw_pad = fcw_pad.at[off:off + n_filters, :hidden_size].set(
            fc_w.T[i * n_filters:(i + 1) * n_filters, :])
        off += fs * n_filters

    fcb_pad = jnp.zeros((1, LANES), jnp.float32).at[0, :hidden_size].set(fc_b)
    fc1w_pad = jnp.zeros((1, LANES), jnp.float32).at[0, :hidden_size].set(fc1_w[0])

    params_k = dict(
        w_all=w_all.astype(jnp.bfloat16),    # bf16 MXU operand
        proj=proj.astype(jnp.bfloat16),      # bf16 MXU operand (0/1 selection)
        convb=convb,                         # f32 epilogue
        fc_w=fcw_pad.astype(jnp.bfloat16),   # bf16 MXU operand
        fc_b=fcb_pad,
        fc1_w=fc1w_pad,
        fc1_b=fc1_b.astype(jnp.float32),     # (1,) SMEM scalar
    )
    return params_pt, params_k


if __name__ == "__main__":
    B, L = 2, 16
    vocab = 100
    n_filters = 8
    filter_sizes = (2, 3, 4)
    hidden_size = 32

    key = jax.random.PRNGKey(0)
    k_ids, k_emb, k_par = jax.random.split(key, 3)

    # TODO(synk): `langmodel` (pretrained transformer returning embedded[0]) has no
    #             clean in-kernel equivalent; stand in with a deterministic bf16
    #             embedding-table lookup so the gather already emits bf16 (no extra
    #             f32->bf16 HBM pass in the wrapper).
    input_ids = jax.random.randint(k_ids, (B, L), 0, vocab)
    embed_table = (jax.random.normal(k_emb, (vocab, EMBED_DIM), jnp.float32)
                   * 0.5).astype(jnp.bfloat16)
    embedded_blc = embed_table[input_ids]                    # (B, L, 768) bf16

    params_pt, params_k = init_params(k_par, filter_sizes, n_filters, hidden_size)

    out = cnn1d_forward(embedded_blc, params_k, filter_sizes, n_filters,
                        hidden_size)
    out = jax.block_until_ready(out)

    # Torch-parity reference in f32 (NCW layout built only for the reference path).
    embedded_ncl = jnp.transpose(embedded_blc.astype(jnp.float32), (0, 2, 1))
    ref = jax.block_until_ready(
        torch_like_reference(embedded_ncl, params_pt, filter_sizes))

    assert out.shape == (B, 1), out.shape
    # bf16 MXU operands -> slightly looser tolerance than an all-f32 path.
    if not jnp.allclose(out, ref, rtol=3e-2, atol=3e-2):
        raise AssertionError(f"kernel/reference mismatch: {out} vs {ref}")

    print("KERNEL_OK")
</pallas_src>

<mosaic_0001>
module attributes {stable_mosaic.version = 11 : i64} {
  func.func @kernel(%arg0: i32, %arg1: memref<32x16x768xbf16, #tpu.memory_space<vmem>>, %arg2: memref<768x128xbf16, #tpu.memory_space<vmem>>, %arg3: memref<128x384xbf16, #tpu.memory_space<vmem>>, %arg4: memref<1x128xf32, #tpu.memory_space<vmem>>, %arg5: memref<128x128xbf16, #tpu.memory_space<vmem>>, %arg6: memref<1x128xf32, #tpu.memory_space<vmem>>, %arg7: memref<1x128xf32, #tpu.memory_space<vmem>>, %arg8: memref<1xf32, #tpu.memory_space<smem>>, %arg9: memref<1x1x32xf32, #tpu.memory_space<vmem>>) attributes {dimension_semantics = [#tpu.dimension_semantics<parallel>], iteration_bounds = array<i64: 1>, scalar_prefetch = 0 : i64, scratch_operands = 0 : i64, tpu.core_type = #tpu.core_type<tc>, window_params = [{transform_indices = @transform_0, window_bounds = array<i64: 32, 16, 768>}, {pipeline_mode = #tpu.pipeline_mode<synchronous>, transform_indices = @transform_1, window_bounds = array<i64: 768, 128>}, {pipeline_mode = #tpu.pipeline_mode<synchronous>, transform_indices = @transform_2, window_bounds = array<i64: 128, 384>}, {pipeline_mode = #tpu.pipeline_mode<synchronous>, transform_indices = @transform_3, window_bounds = array<i64: 1, 128>}, {pipeline_mode = #tpu.pipeline_mode<synchronous>, transform_indices = @transform_4, window_bounds = array<i64: 128, 128>}, {pipeline_mode = #tpu.pipeline_mode<synchronous>, transform_indices = @transform_5, window_bounds = array<i64: 1, 128>}, {pipeline_mode = #tpu.pipeline_mode<synchronous>, transform_indices = @transform_6, window_bounds = array<i64: 1, 128>}, {transform_indices = @transform_7, window_bounds = array<i64: 1>}, {transform_indices = @transform_8, window_bounds = array<i64: 1, 1, 32>}]} {
    %c0 = arith.constant 0 : index
    %c0_0 = arith.constant 0 : index
    %c0_1 = arith.constant 0 : index
    %0 = vector.load %arg1[%c0, %c0_0, %c0_1] : memref<32x16x768xbf16, #tpu.memory_space<vmem>>, vector<32x16x768xbf16>
    %1 = vector.shape_cast %0 : vector<32x16x768xbf16> to vector<512x768xbf16>
    %c0_2 = arith.constant 0 : index
    %c0_3 = arith.constant 0 : index
    %2 = vector.load %arg2[%c0_2, %c0_3] : memref<768x128xbf16, #tpu.memory_space<vmem>>, vector<768x128xbf16>
    %cst = arith.constant dense<0.000000e+00> : vector<512x128xf32>
    %3 = tpu.matmul %1, %2, %cst {dimension_numbers = #tpu.dot_dimension_numbers<[1], [0], [0], [1], [0, 0, 1, 1], [], []>} : vector<512x768xbf16>, vector<768x128xbf16>, vector<512x128xf32> -> vector<512x128xf32>
    %4 = arith.truncf %3 : vector<512x128xf32> to vector<512x128xbf16>
    %c0_4 = arith.constant 0 : index
    %c0_5 = arith.constant 0 : index
    %5 = vector.load %arg3[%c0_4, %c0_5] : memref<128x384xbf16, #tpu.memory_space<vmem>>, vector<128x384xbf16>
    %cst_6 = arith.constant dense<0.000000e+00> : vector<512x384xf32>
    %6 = tpu.matmul %4, %5, %cst_6 {dimension_numbers = #tpu.dot_dimension_numbers<[1], [0], [0], [1], [0, 0, 1, 1], [], []>} : vector<512x128xbf16>, vector<128x384xbf16>, vector<512x384xf32> -> vector<512x384xf32>
    %7 = vector.extract_strided_slice %6 {offsets = [0, 0], sizes = [512, 128], strides = [1, 1]} : vector<512x384xf32> to vector<512x128xf32>
    %8 = vector.extract_strided_slice %7 {offsets = [1, 0], sizes = [511, 128], strides = [1, 1]} : vector<512x128xf32> to vector<511x128xf32>
    %9 = vector.extract_strided_slice %7 {offsets = [0, 0], sizes = [1, 128], strides = [1, 1]} : vector<512x128xf32> to vector<1x128xf32>
    %10 = tpu.concatenate %8, %9 in 0 : vector<511x128xf32>, vector<1x128xf32> -> vector<512x128xf32>
    %11 = arith.addf %3, %10 : vector<512x128xf32>
    %12 = vector.extract_strided_slice %6 {offsets = [0, 128], sizes = [512, 128], strides = [1, 1]} : vector<512x384xf32> to vector<512x128xf32>
    %13 = vector.extract_strided_slice %12 {offsets = [2, 0], sizes = [510, 128], strides = [1, 1]} : vector<512x128xf32> to vector<510x128xf32>
    %14 = vector.extract_strided_slice %12 {offsets = [0, 0], sizes = [2, 128], strides = [1, 1]} : vector<512x128xf32> to vector<2x128xf32>
    %15 = tpu.concatenate %13, %14 in 0 : vector<510x128xf32>, vector<2x128xf32> -> vector<512x128xf32>
    %16 = arith.addf %11, %15 : vector<512x128xf32>
    %17 = vector.extract_strided_slice %6 {offsets = [0, 256], sizes = [512, 128], strides = [1, 1]} : vector<512x384xf32> to vector<512x128xf32>
    %18 = vector.extract_strided_slice %17 {offsets = [3, 0], sizes = [509, 128], strides = [1, 1]} : vector<512x128xf32> to vector<509x128xf32>
    %19 = vector.extract_strided_slice %17 {offsets = [0, 0], sizes = [3, 128], strides = [1, 1]} : vector<512x128xf32> to vector<3x128xf32>
    %20 = tpu.concatenate %18, %19 in 0 : vector<509x128xf32>, vector<3x128xf32> -> vector<512x128xf32>
    %21 = arith.addf %16, %20 : vector<512x128xf32>
    %22 = vector.shape_cast %21 : vector<512x128xf32> to vector<32x16x128xf32>
    %23 = tpu.iota {dimensions = array<i32: 2>} : vector<1x1x128xi32>
    %c15_i32 = arith.constant 15 : i32
    %24 = vector.broadcast %c15_i32 : i32 to vector<1x1x128xi32>
    %c0_i32 = arith.constant 0 : i32
    %25 = vector.broadcast %c0_i32 : i32 to vector<1x1x128xi32>
    %26 = arith.cmpi sge, %23, %25 : vector<1x1x128xi32>
    %c8_i32 = arith.constant 8 : i32
    %27 = vector.broadcast %c8_i32 : i32 to vector<1x1x128xi32>
    %28 = arith.cmpi slt, %23, %27 : vector<1x1x128xi32>
    %29 = arith.andi %26, %28 : vector<1x1x128xi1>
    %c14_i32 = arith.constant 14 : i32
    %30 = vector.broadcast %c14_i32 : i32 to vector<1x1x128xi32>
    %31 = arith.select %29, %30, %24 : vector<1x1x128xi1>, vector<1x1x128xi32>
    %c16_i32 = arith.constant 16 : i32
    %32 = vector.broadcast %c16_i32 : i32 to vector<1x1x128xi32>
    %33 = arith.cmpi sge, %23, %32 : vector<1x1x128xi32>
    %c24_i32 = arith.constant 24 : i32
    %34 = vector.broadcast %c24_i32 : i32 to vector<1x1x128xi32>
    %35 = arith.cmpi slt, %23, %34 : vector<1x1x128xi32>
    %36 = arith.andi %33, %35 : vector<1x1x128xi1>
    %c13_i32 = arith.constant 13 : i32
    %37 = vector.broadcast %c13_i32 : i32 to vector<1x1x128xi32>
    %38 = arith.select %36, %37, %31 : vector<1x1x128xi1>, vector<1x1x128xi32>
    %c40_i32 = arith.constant 40 : i32
    %39 = vector.broadcast %c40_i32 : i32 to vector<1x1x128xi32>
    %40 = arith.cmpi sge, %23, %39 : vector<1x1x128xi32>
    %c48_i32 = arith.constant 48 : i32
    %41 = vector.broadcast %c48_i32 : i32 to vector<1x1x128xi32>
    %42 = arith.cmpi slt, %23, %41 : vector<1x1x128xi32>
    %43 = arith.andi %40, %42 : vector<1x1x128xi1>
    %c12_i32 = arith.constant 12 : i32
    %44 = vector.broadcast %c12_i32 : i32 to vector<1x1x128xi32>
    %45 = arith.select %43, %44, %38 : vector<1x1x128xi1>, vector<1x1x128xi32>
    %46 = tpu.iota {dimensions = array<i32: 1>} : vector<32x16x128xi32>
    %47 = vector.broadcast %45 : vector<1x1x128xi32> to vector<32x16x128xi32>
    %48 = arith.cmpi sle, %46, %47 : vector<32x16x128xi32>
    %cst_7 = arith.constant 0xFF800000 : f32
    %49 = vector.broadcast %cst_7 : f32 to vector<32x16x128xf32>
    %50 = arith.select %48, %22, %49 : vector<32x16x128xi1>, vector<32x16x128xf32>
    %cst_8 = arith.constant dense<0xFF800000> : vector<32x128xf32>
    %51 = vector.multi_reduction <maximumf>, %50, %cst_8 [1] : vector<32x16x128xf32> to vector<32x128xf32>
    %c0_9 = arith.constant 0 : index
    %c0_10 = arith.constant 0 : index
    %52 = vector.load %arg4[%c0_9, %c0_10] : memref<1x128xf32, #tpu.memory_space<vmem>>, vector<1x128xf32>
    %53 = vector.broadcast %52 : vector<1x128xf32> to vector<32x128xf32>
    %54 = arith.addf %51, %53 : vector<32x128xf32>
    %cst_11 = arith.constant 0.000000e+00 : f32
    %55 = vector.broadcast %cst_11 : f32 to vector<32x128xf32>
    %56 = arith.maximumf %54, %55 : vector<32x128xf32>
    %57 = arith.truncf %56 : vector<32x128xf32> to vector<32x128xbf16>
    %c0_12 = arith.constant 0 : index
    %c0_13 = arith.constant 0 : index
    %58 = vector.load %arg5[%c0_12, %c0_13] : memref<128x128xbf16, #tpu.memory_space<vmem>>, vector<128x128xbf16>
    %cst_14 = arith.constant dense<0.000000e+00> : vector<32x128xf32>
    %59 = tpu.matmul %57, %58, %cst_14 {dimension_numbers = #tpu.dot_dimension_numbers<[1], [0], [0], [1], [0, 0, 1, 1], [], []>} : vector<32x128xbf16>, vector<128x128xbf16>, vector<32x128xf32> -> vector<32x128xf32>
    %c0_15 = arith.constant 0 : index
    %c0_16 = arith.constant 0 : index
    %60 = vector.load %arg6[%c0_15, %c0_16] : memref<1x128xf32, #tpu.memory_space<vmem>>, vector<1x128xf32>
    %61 = vector.broadcast %60 : vector<1x128xf32> to vector<32x128xf32>
    %62 = arith.addf %59, %61 : vector<32x128xf32>
    %cst_17 = arith.constant 0.000000e+00 : f32
    %63 = vector.broadcast %cst_17 : f32 to vector<32x128xf32>
    %64 = arith.maximumf %62, %63 : vector<32x128xf32>
    %c0_18 = arith.constant 0 : index
    %c0_19 = arith.constant 0 : index
    %65 = vector.load %arg7[%c0_18, %c0_19] : memref<1x128xf32, #tpu.memory_space<vmem>>, vector<1x128xf32>
    %cst_20 = arith.constant dense<0.000000e+00> : vector<1x32xf32>
    %66 = tpu.matmul %65, %64, %cst_20 {dimension_numbers = #tpu.dot_dimension_numbers<[1], [1], [0], [0], [0, 0, 1, 0], [], []>} : vector<1x128xf32>, vector<32x128xf32>, vector<1x32xf32> -> vector<1x32xf32>
    %c0_21 = arith.constant 0 : index
    %67 = memref.load %arg8[%c0_21] : memref<1xf32, #tpu.memory_space<smem>>
    %68 = vector.broadcast %67 : f32 to vector<1x32xf32>
    %69 = arith.addf %66, %68 : vector<1x32xf32>
    %70 = vector.shape_cast %69 : vector<1x32xf32> to vector<1x1x32xf32>
    %c0_22 = arith.constant 0 : index
    %c0_23 = arith.constant 0 : index
    %c0_24 = arith.constant 0 : index
    %71 = vector.load %arg9[%c0_22, %c0_23, %c0_24] : memref<1x1x32xf32, #tpu.memory_space<vmem>>, vector<1x1x32xf32>
    tpu.vector_store %arg9[%c0_22, %c0_23, %c0_24], %70 {strides = array<i32>} : memref<1x1x32xf32, #tpu.memory_space<vmem>>, vector<1x1x32xf32>,
    return
  }
  func.func @transform_0(%arg0: i32) -> (i32, i32, i32) {
    %c0_i32 = arith.constant 0 : i32
    %c0_i32_0 = arith.constant 0 : i32
    %c0_i32_1 = arith.constant 0 : i32
    return %arg0, %c0_i32, %c0_i32_0 : i32, i32, i32
  }
  func.func @transform_1(%arg0: i32) -> (i32, i32) {
    %c0_i32 = arith.constant 0 : i32
    %c0_i32_0 = arith.constant 0 : i32
    %c0_i32_1 = arith.constant 0 : i32
    return %c0_i32, %c0_i32_0 : i32, i32
  }
  func.func @transform_2(%arg0: i32) -> (i32, i32) {
    %c0_i32 = arith.constant 0 : i32
    %c0_i32_0 = arith.constant 0 : i32
    %c0_i32_1 = arith.constant 0 : i32
    return %c0_i32, %c0_i32_0 : i32, i32
  }
  func.func @transform_3(%arg0: i32) -> (i32, i32) {
    %c0_i32 = arith.constant 0 : i32
    %c0_i32_0 = arith.constant 0 : i32
    %c0_i32_1 = arith.constant 0 : i32
    return %c0_i32, %c0_i32_0 : i32, i32
  }
  func.func @transform_4(%arg0: i32) -> (i32, i32) {
    %c0_i32 = arith.constant 0 : i32
    %c0_i32_0 = arith.constant 0 : i32
    %c0_i32_1 = arith.constant 0 : i32
    return %c0_i32, %c0_i32_0 : i32, i32
  }
  func.func @transform_5(%arg0: i32) -> (i32, i32) {
    %c0_i32 = arith.constant 0 : i32
    %c0_i32_0 = arith.constant 0 : i32
    %c0_i32_1 = arith.constant 0 : i32
    return %c0_i32, %c0_i32_0 : i32, i32
  }
  func.func @transform_6(%arg0: i32) -> (i32, i32) {
    %c0_i32 = arith.constant 0 : i32
    %c0_i32_0 = arith.constant 0 : i32
    %c0_i32_1 = arith.constant 0 : i32
    return %c0_i32, %c0_i32_0 : i32, i32
  }
  func.func @transform_7(%arg0: i32) -> i32 {
    %c0_i32 = arith.constant 0 : i32
    %c0_i32_0 = arith.constant 0 : i32
    return %c0_i32 : i32
  }
  func.func @transform_8(%arg0: i32) -> (i32, i32, i32) {
    %c0_i32 = arith.constant 0 : i32
    %c0_i32_0 = arith.constant 0 : i32
    %c0_i32_1 = arith.constant 0 : i32
    return %arg0, %c0_i32, %c0_i32_0 : i32, i32, i32
  }
}

</mosaic_0001>

<llo_original>
// kernel: tpu_custom_call.1
$region0: #{tpu_custom_call.1}
  #allocation0 [shape = 'u32[]', space=smem, size = 0x4, offset = 0x4, fixed_abs, tag = 'smem constant byte address 0x4 - core index']
  #allocation1 [shape = 'u32[72,128]{1,0:T(1,128)}', space=vmem, size = 0x9000, scoped, tag = 'internal scratch']
  #allocation2 [shape = 'f32[1]{0:T(128)S(6)}', space=smem, size = 0x200, scoped, tag = 'scoped memory for tpu_custom_call.1']
  %s0 = inlined_call_operand.hbm [shape: bf16[32,16,768], index: 0, kind: input, shape index: {}]
  %s1 = inlined_call_operand.hbm [shape: bf16[768,128], index: 1, kind: input, shape index: {}]
  %s2 = inlined_call_operand.hbm [shape: bf16[128,384], index: 2, kind: input, shape index: {}]
  %s3 = inlined_call_operand.vmem [shape: f32[1,128], index: 3, kind: input, shape index: {}]
  %s4 = inlined_call_operand.hbm [shape: bf16[128,128], index: 4, kind: input, shape index: {}]
  %s5 = inlined_call_operand.vmem [shape: f32[1,128], index: 5, kind: input, shape index: {}]
  %s6 = inlined_call_operand.vmem [shape: f32[1,128], index: 6, kind: input, shape index: {}]
  %s7 = inlined_call_operand.<no memory space> [shape: f32[1], index: 7, kind: input, shape index: {}]
  %s8 = inlined_call_operand.hbm [shape: f32[1,1,32], index: 8, kind: output, shape index: {}]
  %s9 = sld [smem:[#allocation0]]
  $region58: #{tpu_custom_call.1} parent=0
    _
  %s11 = ssub.s32 1, %s9
  %s12 = scalar_select 0, %s11, %s9
  %13 = sst [smem:[#allocation2]] %s7
  $region1: #{tpu_custom_call.1} parent=0
    #allocation3 [shape = 'u8[786432]{0}', space=vmem, size = 0xc0000, scoped, tag = 'input window, operand 0, single buffered']
    #allocation4 [shape = 's32[1]{0}', space=sflag, size = 0x4, scoped, tag = 'scoped memory for tpu_custom_call.1']
    #allocation5 [shape = 's32[1]{0}', space=sflag, size = 0x4, scoped, tag = 'scoped memory for tpu_custom_call.1']
    #allocation6 [shape = 'u8[196608]{0}', space=vmem, size = 0x30000, scoped, tag = 'input window, operand 1, single buffered']
    #allocation7 [shape = 's32[1]{0}', space=sflag, size = 0x4, scoped, tag = 'scoped memory for tpu_custom_call.1']
    #allocation8 [shape = 'u8[98304]{0}', space=vmem, size = 0x18000, scoped, tag = 'input window, operand 2, single buffered']
    #allocation9 [shape = 'u8[32768]{0}', space=vmem, size = 0x8000, scoped, tag = 'input window, operand 4, single buffered']
    #allocation10 [shape = 's32[1]{0}', space=sflag, size = 0x4, scoped, tag = 'scoped memory for tpu_custom_call.1']
    #allocation11 [shape = 'u8[512]{0}', space=vmem, size = 0x400, scoped, tag = 'output window, operand 0, single buffered']
    %14 = vsyncpa [#allocation4], 0
    %15 = vsyncpa [#allocation7], 0
    %16 = vsyncpa [#allocation10], 0
    %17 = vsyncpa [#allocation5], 0
    // Predicated region
    $region2: #{tpu_custom_call.1} parent=1 // pred_check
      _
    $region3: #{tpu_custom_call.1} parent=1 // pred_check_branch
      %19 = sbr.rel (0) target = $region5
    $region4: #{tpu_custom_call.1} parent=1 // pred_region
      %21 = vsyncadd [#allocation4], 0
      %s22 = sshll.u32 %s0, 4
      %s23 = int_to_ptr.hbm [resolvable:$true] %s22
      %s24 = sshll.u32 [#allocation3], 4
      %s25 = int_to_ptr.vmem [resolvable:$true] %s24
      %30 = dma.hbm_to_vmem [thread:$0]  %s23, 24576, %s25, [#allocation4], 384, 384, 24
    $region5: #{tpu_custom_call.1} parent=1 // pred_fallthru
      _
    // Predicated region
    $region6: #{tpu_custom_call.1} parent=1 // pred_check
      _
    $region7: #{tpu_custom_call.1} parent=1 // pred_check_branch
      %32 = sbr.rel (0) target = $region9
    $region8: #{tpu_custom_call.1} parent=1 // pred_region
      %34 = vsyncadd [#allocation7], 0
      %s35 = sshll.u32 %s1, 4
      %s36 = int_to_ptr.hbm [resolvable:$true] %s35
      %s37 = sshll.u32 [#allocation6], 4
      %s38 = int_to_ptr.vmem [resolvable:$true] %s37
      %43 = dma.hbm_to_vmem [thread:$0]  %s36, 6144, %s38, [#allocation7], 64, 64, 4
    $region9: #{tpu_custom_call.1} parent=1 // pred_fallthru
      _
    // Predicated region
    $region10: #{tpu_custom_call.1} parent=1 // pred_check
      _
    $region11: #{tpu_custom_call.1} parent=1 // pred_check_branch
      %45 = sbr.rel (0) target = $region13
    $region12: #{tpu_custom_call.1} parent=1 // pred_region
      %47 = vsyncadd [#allocation7], 0
      %s48 = sshll.u32 %s2, 4
      %s49 = int_to_ptr.hbm [resolvable:$true] %s48
      %s50 = sshll.u32 [#allocation8], 4
      %s51 = int_to_ptr.vmem [resolvable:$true] %s50
      %56 = dma.hbm_to_vmem [thread:$0]  %s49, 3072, %s51, [#allocation7], 192, 192, 12
    $region13: #{tpu_custom_call.1} parent=1 // pred_fallthru
      _
    // Predicated region
    $region14: #{tpu_custom_call.1} parent=1 // pred_check
      _
    $region15: #{tpu_custom_call.1} parent=1 // pred_check_branch
      %58 = sbr.rel (0) target = $region17
    $region16: #{tpu_custom_call.1} parent=1 // pred_region
      _
    $region17: #{tpu_custom_call.1} parent=1 // pred_fallthru
      _
    // Predicated region
    $region18: #{tpu_custom_call.1} parent=1 // pred_check
      _
    $region19: #{tpu_custom_call.1} parent=1 // pred_check_branch
      %60 = sbr.rel (0) target = $region21
    $region20: #{tpu_custom_call.1} parent=1 // pred_region
      %62 = vsyncadd [#allocation10], 0
      %s63 = sshll.u32 %s4, 4
      %s64 = int_to_ptr.hbm [resolvable:$true] %s63
      %s65 = sshll.u32 [#allocation9], 4
      %s66 = int_to_ptr.vmem [resolvable:$true] %s65
      %71 = dma.hbm_to_vmem [thread:$0]  %s64, 1024, %s66, [#allocation10], 64, 64, 4
    $region21: #{tpu_custom_call.1} parent=1 // pred_fallthru
      _
    // Predicated region
    $region22: #{tpu_custom_call.1} parent=1 // pred_check
      _
    $region23: #{tpu_custom_call.1} parent=1 // pred_check_branch
      %73 = sbr.rel (0) target = $region25
    $region24: #{tpu_custom_call.1} parent=1 // pred_region
      _
    $region25: #{tpu_custom_call.1} parent=1 // pred_fallthru
      _
    // Predicated region
    $region26: #{tpu_custom_call.1} parent=1 // pred_check
      _
    $region27: #{tpu_custom_call.1} parent=1 // pred_check_branch
      %75 = sbr.rel (0) target = $region29
    $region28: #{tpu_custom_call.1} parent=1 // pred_region
      _
    $region29: #{tpu_custom_call.1} parent=1 // pred_fallthru
      _
    // Predicated region
    $region30: #{tpu_custom_call.1} parent=1 // pred_check
      _
    $region31: #{tpu_custom_call.1} parent=1 // pred_check_branch
      %77 = sbr.rel (0) target = $region33
    $region32: #{tpu_custom_call.1} parent=1 // pred_region
      _
    $region33: #{tpu_custom_call.1} parent=1 // pred_fallthru
      _
    // Predicated region
    $region34: #{tpu_custom_call.1} parent=1 // pred_check
      _
    $region35: #{tpu_custom_call.1} parent=1 // pred_check_branch
      %79 = sbr.rel (0) target = $region37
    $region36: #{tpu_custom_call.1} parent=1 // pred_region
      %81 = dma.done [#allocation4], 24576
    $region37: #{tpu_custom_call.1} parent=1 // pred_fallthru
      _
    // Predicated region
    $region38: #{tpu_custom_call.1} parent=1 // pred_check
      _
    $region39: #{tpu_custom_call.1} parent=1 // pred_check_branch
      %83 = sbr.rel (0) target = $region41
    $region40: #{tpu_custom_call.1} parent=1 // pred_region
      %85 = dma.done [#allocation7], 6144
    $region41: #{tpu_custom_call.1} parent=1 // pred_fallthru
      _
    // Predicated region
    $region42: #{tpu_custom_call.1} parent=1 // pred_check
      _
    $region43: #{tpu_custom_call.1} parent=1 // pred_check_branch
      %87 = sbr.rel (0) target = $region45
    $region44: #{tpu_custom_call.1} parent=1 // pred_region
      %89 = dma.done [#allocation7], 3072
    $region45: #{tpu_custom_call.1} parent=1 // pred_fallthru
      _
    // Predicated region
    $region46: #{tpu_custom_call.1} parent=1 // pred_check
      _
    $region47: #{tpu_custom_call.1} parent=1 // pred_check_branch
      %91 = sbr.rel (0) target = $region49
    $region48: #{tpu_custom_call.1} parent=1 // pred_region
      %93 = dma.done [#allocation10], 1024
    $region49: #{tpu_custom_call.1} parent=1 // pred_fallthru
      _
    %v94 = vld [vmem:[#allocation3] sm:$0xff]
    %v95 = vld [vmem:[#allocation3 + $0x8] sm:$0xff]
    %v96 = vld [vmem:[#allocation3 + $0x10] sm:$0xff]
    %v97 = vld [vmem:[#allocation3 + $0x18] sm:$0xff]
    %v98 = vld [vmem:[#allocation3 + $0x20] sm:$0xff]
    %v99 = vld [vmem:[#allocation3 + $0x28] sm:$0xff]
    %v100 = vld [vmem:[#allocation3 + $0x30] sm:$0xff]
    %v101 = vld [vmem:[#allocation3 + $0x38] sm:$0xff]
    %v102 = vld [vmem:[#allocation3 + $0x40] sm:$0xff]
    %v103 = vld [vmem:[#allocation3 + $0x48] sm:$0xff]
    %v104 = vld [vmem:[#allocation3 + $0x50] sm:$0xff]
    %v105 = vld [vmem:[#allocation3 + $0x58] sm:$0xff]
    %v106 = vld [vmem:[#allocation3 + $0x60] sm:$0xff]
    %v107 = vld [vmem:[#allocation3 + $0x68] sm:$0xff]
    %v108 = vld [vmem:[#allocation3 + $0x70] sm:$0xff]
    %v109 = vld [vmem:[#allocation3 + $0x78] sm:$0xff]
    %v110 = vld [vmem:[#allocation3 + $0x80] sm:$0xff]
    %v111 = vld [vmem:[#allocation3 + $0x88] sm:$0xff]
    %v112 = vld [vmem:[#allocation3 + $0x90] sm:$0xff]
    %v113 = vld [vmem:[#allocation3 + $0x98] sm:$0xff]
    %v114 = vld [vmem:[#allocation3 + $0xa0] sm:$0xff]
    %v115 = vld [vmem:[#allocation3 + $0xa8] sm:$0xff]
    %v116 = vld [vmem:[#allocation3 + $0xb0] sm:$0xff]
    %v117 = vld [vmem:[#allocation3 + $0xb8] sm:$0xff]
    %v118 = vld [vmem:[#allocation3 + $0xc0] sm:$0xff]
    %v119 = vld [vmem:[#allocation3 + $0xc8] sm:$0xff]
    %v120 = vld [vmem:[#allocation3 + $0xd0] sm:$0xff]
    %v121 = vld [vmem:[#allocation3 + $0xd8] sm:$0xff]
    %v122 = vld [vmem:[#allocation3 + $0xe0] sm:$0xff]
    %v123 = vld [vmem:[#allocation3 + $0xe8] sm:$0xff]
    %v124 = vld [vmem:[#allocation3 + $0xf0] sm:$0xff]
    %v125 = vld [vmem:[#allocation3 + $0xf8] sm:$0xff]
    %v126 = vld [vmem:[#allocation3 + $0x100] sm:$0xff]
    %v127 = vld [vmem:[#allocation3 + $0x108] sm:$0xff]
    %v128 = vld [vmem:[#allocation3 + $0x110] sm:$0xff]
    %v129 = vld [vmem:[#allocation3 + $0x118] sm:$0xff]
    %v130 = vld [vmem:[#allocation3 + $0x120] sm:$0xff]
    %v131 = vld [vmem:[#allocation3 + $0x128] sm:$0xff]
    %v132 = vld [vmem:[#allocation3 + $0x130] sm:$0xff]
    %v133 = vld [vmem:[#allocation3 + $0x138] sm:$0xff]
    %v134 = vld [vmem:[#allocation3 + $0x140] sm:$0xff]
    %v135 = vld [vmem:[#allocation3 + $0x148] sm:$0xff]
    %v136 = vld [vmem:[#allocation3 + $0x150] sm:$0xff]
    %v137 = vld [vmem:[#allocation3 + $0x158] sm:$0xff]
    %v138 = vld [vmem:[#allocation3 + $0x160] sm:$0xff]
    %v139 = vld [vmem:[#allocation3 + $0x168] sm:$0xff]
    %v140 = vld [vmem:[#allocation3 + $0x170] sm:$0xff]
    %v141 = vld [vmem:[#allocation3 + $0x178] sm:$0xff]
    %v142 = vld [vmem:[#allocation3 + $0x180] sm:$0xff]
    %v143 = vld [vmem:[#allocation3 + $0x188] sm:$0xff]
    %v144 = vld [vmem:[#allocation3 + $0x190] sm:$0xff]
    %v145 = vld [vmem:[#allocation3 + $0x198] sm:$0xff]
    %v146 = vld [vmem:[#allocation3 + $0x1a0] sm:$0xff]
    %v147 = vld [vmem:[#allocation3 + $0x1a8] sm:$0xff]
    %v148 = vld [vmem:[#allocation3 + $0x1b0] sm:$0xff]
    %v149 = vld [vmem:[#allocation3 + $0x1b8] sm:$0xff]
    %v150 = vld [vmem:[#allocation3 + $0x1c0] sm:$0xff]
    %v151 = vld [vmem:[#allocation3 + $0x1c8] sm:$0xff]
    %v152 = vld [vmem:[#allocation3 + $0x1d0] sm:$0xff]
    %v153 = vld [vmem:[#allocation3 + $0x1d8] sm:$0xff]
    %v154 = vld [vmem:[#allocation3 + $0x1e0] sm:$0xff]
    %v155 = vld [vmem:[#allocation3 + $0x1e8] sm:$0xff]
    %v156 = vld [vmem:[#allocation3 + $0x1f0] sm:$0xff]
    %v157 = vld [vmem:[#allocation3 + $0x1f8] sm:$0xff]
    %v158 = vld [vmem:[#allocation3 + $0x200] sm:$0xff]
    %v159 = vld [vmem:[#allocation3 + $0x208] sm:$0xff]
    %v160 = vld [vmem:[#allocation3 + $0x210] sm:$0xff]
    %v161 = vld [vmem:[#allocation3 + $0x218] sm:$0xff]
    %v162 = vld [vmem:[#allocation3 + $0x220] sm:$0xff]
    %v163 = vld [vmem:[#allocation3 + $0x228] sm:$0xff]
    %v164 = vld [vmem:[#allocation3 + $0x230] sm:$0xff]
    %v165 = vld [vmem:[#allocation3 + $0x238] sm:$0xff]
    %v166 = vld [vmem:[#allocation3 + $0x240] sm:$0xff]
    %v167 = vld [vmem:[#allocation3 + $0x248] sm:$0xff]
    %v168 = vld [vmem:[#allocation3 + $0x250] sm:$0xff]
    %v169 = vld [vmem:[#allocation3 + $0x258] sm:$0xff]
    %v170 = vld [vmem:[#allocation3 + $0x260] sm:$0xff]
    %v171 = vld [vmem:[#allocation3 + $0x268] sm:$0xff]
    %v172 = vld [vmem:[#allocation3 + $0x270] sm:$0xff]
    %v173 = vld [vmem:[#allocation3 + $0x278] sm:$0xff]
    %v174 = vld [vmem:[#allocation3 + $0x280] sm:$0xff]
    %v175 = vld [vmem:[#allocation3 + $0x288] sm:$0xff]
    %v176 = vld [vmem:[#allocation3 + $0x290] sm:$0xff]
    %v177 = vld [vmem:[#allocation3 + $0x298] sm:$0xff]
    %v178 = vld [vmem:[#allocation3 + $0x2a0] sm:$0xff]
    %v179 = vld [vmem:[#allocation3 + $0x2a8] sm:$0xff]
    %v180 = vld [vmem:[#allocation3 + $0x2b0] sm:$0xff]
    %v181 = vld [vmem:[#allocation3 + $0x2b8] sm:$0xff]
    %v182 = vld [vmem:[#allocation3 + $0x2c0] sm:$0xff]
    %v183 = vld [vmem:[#allocation3 + $0x2c8] sm:$0xff]
    %v184 = vld [vmem:[#allocation3 + $0x2d0] sm:$0xff]
    %v185 = vld [vmem:[#allocation3 + $0x2d8] sm:$0xff]
    %v186 = vld [vmem:[#allocation3 + $0x2e0] sm:$0xff]
    %v187 = vld [vmem:[#allocation3 + $0x2e8] sm:$0xff]
    %v188 = vld [vmem:[#allocation3 + $0x2f0] sm:$0xff]
    %v189 = vld [vmem:[#allocation3 + $0x2f8] sm:$0xff]
    %v190 = vld [vmem:[#allocation3 + $0x300] sm:$0xff]
    %v191 = vld [vmem:[#allocation3 + $0x308] sm:$0xff]
    %v192 = vld [vmem:[#allocation3 + $0x310] sm:$0xff]
    %v193 = vld [vmem:[#allocation3 + $0x318] sm:$0xff]
    %v194 = vld [vmem:[#allocation3 + $0x320] sm:$0xff]
    %v195 = vld [vmem:[#allocation3 + $0x328] sm:$0xff]
    %v196 = vld [vmem:[#allocation3 + $0x330] sm:$0xff]
    %v197 = vld [vmem:[#allocation3 + $0x338] sm:$0xff]
    %v198 = vld [vmem:[#allocation3 + $0x340] sm:$0xff]
    %v199 = vld [vmem:[#allocation3 + $0x348] sm:$0xff]
    %v200 = vld [vmem:[#allocation3 + $0x350] sm:$0xff]
    %v201 = vld [vmem:[#allocation3 + $0x358] sm:$0xff]
    %v202 = vld [vmem:[#allocation3 + $0x360] sm:$0xff]
    %v203 = vld [vmem:[#allocation3 + $0x368] sm:$0xff]
    %v204 = vld [vmem:[#allocation3 + $0x370] sm:$0xff]
    %v205 = vld [vmem:[#allocation3 + $0x378] sm:$0xff]
    %v206 = vld [vmem:[#allocation3 + $0x380] sm:$0xff]
    %v207 = vld [vmem:[#allocation3 + $0x388] sm:$0xff]
    %v208 = vld [vmem:[#allocation3 + $0x390] sm:$0xff]
    %v209 = vld [vmem:[#allocation3 + $0x398] sm:$0xff]
    %v210 = vld [vmem:[#allocation3 + $0x3a0] sm:$0xff]
    %v211 = vld [vmem:[#allocation3 + $0x3a8] sm:$0xff]
    %v212 = vld [vmem:[#allocation3 + $0x3b0] sm:$0xff]
    %v213 = vld [vmem:[#allocation3 + $0x3b8] sm:$0xff]
    %v214 = vld [vmem:[#allocation3 + $0x3c0] sm:$0xff]
    %v215 = vld [vmem:[#allocation3 + $0x3c8] sm:$0xff]
    %v216 = vld [vmem:[#allocation3 + $0x3d0] sm:$0xff]
    %v217 = vld [vmem:[#allocation3 + $0x3d8] sm:$0xff]
    %v218 = vld [vmem:[#allocation3 + $0x3e0] sm:$0xff]
    %v219 = vld [vmem:[#allocation3 + $0x3e8] sm:$0xff]
    %v220 = vld [vmem:[#allocation3 + $0x3f0] sm:$0xff]
    %v221 = vld [vmem:[#allocation3 + $0x3f8] sm:$0xff]
    %v222 = vld [vmem:[#allocation3 + $0x400] sm:$0xff]
    %v223 = vld [vmem:[#allocation3 + $0x408] sm:$0xff]
    %v224 = vld [vmem:[#allocation3 + $0x410] sm:$0xff]
    %v225 = vld [vmem:[#allocation3 + $0x418] sm:$0xff]
    %v226 = vld [vmem:[#allocation3 + $0x420] sm:$0xff]
    %v227 = vld [vmem:[#allocation3 + $0x428] sm:$0xff]
    %v228 = vld [vmem:[#allocation3 + $0x430] sm:$0xff]
    %v229 = vld [vmem:[#allocation3 + $0x438] sm:$0xff]
    %v230 = vld [vmem:[#allocation3 + $0x440] sm:$0xff]
    %v231 = vld [vmem:[#allocation3 + $0x448] sm:$0xff]
    %v232 = vld [vmem:[#allocation3 + $0x450] sm:$0xff]
    %v233 = vld [vmem:[#allocation3 + $0x458] sm:$0xff]
    %v234 = vld [vmem:[#allocation3 + $0x460] sm:$0xff]
    %v235 = vld [vmem:[#allocation3 + $0x468] sm:$0xff]
    %v236 = vld [vmem:[#allocation3 + $0x470] sm:$0xff]
    %v237 = vld [vmem:[#allocation3 + $0x478] sm:$0xff]
    %v238 = vld [vmem:[#allocation3 + $0x480] sm:$0xff]
    %v239 = vld [vmem:[#allocation3 + $0x488] sm:$0xff]
    %v240 = vld [vmem:[#allocation3 + $0x490] sm:$0xff]
    %v241 = vld [vmem:[#allocation3 + $0x498] sm:$0xff]
    %v242 = vld [vmem:[#allocation3 + $0x4a0] sm:$0xff]
    %v243 = vld [vmem:[#allocation3 + $0x4a8] sm:$0xff]
    %v244 = vld [vmem:[#allocation3 + $0x4b0] sm:$0xff]
    %v245 = vld [vmem:[#allocation3 + $0x4b8] sm:$0xff]
    %v246 = vld [vmem:[#allocation3 + $0x4c0] sm:$0xff]
    %v247 = vld [vmem:[#allocation3 + $0x4c8] sm:$0xff]
    %v248 = vld [vmem:[#allocation3 + $0x4d0] sm:$0xff]
    %v249 = vld [vmem:[#allocation3 + $0x4d8] sm:$0xff]
    %v250 = vld [vmem:[#allocation3 + $0x4e0] sm:$0xff]
    %v251 = vld [vmem:[#allocation3 + $0x4e8] sm:$0xff]
    %v252 = vld [vmem:[#allocation3 + $0x4f0] sm:$0xff]
    %v253 = vld [vmem:[#allocation3 + $0x4f8] sm:$0xff]
    %v254 = vld [vmem:[#allocation3 + $0x500] sm:$0xff]
    %v255 = vld [vmem:[#allocation3 + $0x508] sm:$0xff]
    %v256 = vld [vmem:[#allocation3 + $0x510] sm:$0xff]
    %v257 = vld [vmem:[#allocation3 + $0x518] sm:$0xff]
    %v258 = vld [vmem:[#allocation3 + $0x520] sm:$0xff]
    %v259 = vld [vmem:[#allocation3 + $0x528] sm:$0xff]
    %v260 = vld [vmem:[#allocation3 + $0x530] sm:$0xff]
    %v261 = vld [vmem:[#allocation3 + $0x538] sm:$0xff]
    %v262 = vld [vmem:[#allocation3 + $0x540] sm:$0xff]
    %v263 = vld [vmem:[#allocation3 + $0x548] sm:$0xff]
    %v264 = vld [vmem:[#allocation3 + $0x550] sm:$0xff]
    %v265 = vld [vmem:[#allocation3 + $0x558] sm:$0xff]
    %v266 = vld [vmem:[#allocation3 + $0x560] sm:$0xff]
    %v267 = vld [vmem:[#allocation3 + $0x568] sm:$0xff]
    %v268 = vld [vmem:[#allocation3 + $0x570] sm:$0xff]
    %v269 = vld [vmem:[#allocation3 + $0x578] sm:$0xff]
    %v270 = vld [vmem:[#allocation3 + $0x580] sm:$0xff]
    %v271 = vld [vmem:[#allocation3 + $0x588] sm:$0xff]
    %v272 = vld [vmem:[#allocation3 + $0x590] sm:$0xff]
    %v273 = vld [vmem:[#allocation3 + $0x598] sm:$0xff]
    %v274 = vld [vmem:[#allocation3 + $0x5a0] sm:$0xff]
    %v275 = vld [vmem:[#allocation3 + $0x5a8] sm:$0xff]
    %v276 = vld [vmem:[#allocation3 + $0x5b0] sm:$0xff]
    %v277 = vld [vmem:[#allocation3 + $0x5b8] sm:$0xff]
    %v278 = vld [vmem:[#allocation3 + $0x5c0] sm:$0xff]
    %v279 = vld [vmem:[#allocation3 + $0x5c8] sm:$0xff]
    %v280 = vld [vmem:[#allocation3 + $0x5d0] sm:$0xff]
    %v281 = vld [vmem:[#allocation3 + $0x5d8] sm:$0xff]
    %v282 = vld [vmem:[#allocation3 + $0x5e0] sm:$0xff]
    %v283 = vld [vmem:[#allocation3 + $0x5e8] sm:$0xff]
    %v284 = vld [vmem:[#allocation3 + $0x5f0] sm:$0xff]
    %v285 = vld [vmem:[#allocation3 + $0x5f8] sm:$0xff]
    %v286 = vld [vmem:[#allocation6] sm:$0xf]
    %v287 = vld [vmem:[#allocation6 + $0x4] sm:$0xf]
    %v288 = vld [vmem:[#allocation6 + $0x8] sm:$0xf]
    %v289 = vld [vmem:[#allocation6 + $0xc] sm:$0xf]
    %v290 = vld [vmem:[#allocation6 + $0x10] sm:$0xf]
    %v291 = vld [vmem:[#allocation6 + $0x14] sm:$0xf]
    %v292 = vld [vmem:[#allocation6 + $0x18] sm:$0xf]
    %v293 = vld [vmem:[#allocation6 + $0x1c] sm:$0xf]
    %v294 = vld [vmem:[#allocation6 + $0x20] sm:$0xf]
    %v295 = vld [vmem:[#allocation6 + $0x24] sm:$0xf]
    %v296 = vld [vmem:[#allocation6 + $0x28] sm:$0xf]
    %v297 = vld [vmem:[#allocation6 + $0x2c] sm:$0xf]
    %v298 = vld [vmem:[#allocation6 + $0x30] sm:$0xf]
    %v299 = vld [vmem:[#allocation6 + $0x34] sm:$0xf]
    %v300 = vld [vmem:[#allocation6 + $0x38] sm:$0xf]
    %v301 = vld [vmem:[#allocation6 + $0x3c] sm:$0xf]
    %v302 = vld [vmem:[#allocation6 + $0x40] sm:$0xf]
    %v303 = vld [vmem:[#allocation6 + $0x44] sm:$0xf]
    %v304 = vld [vmem:[#allocation6 + $0x48] sm:$0xf]
    %v305 = vld [vmem:[#allocation6 + $0x4c] sm:$0xf]
    %v306 = vld [vmem:[#allocation6 + $0x50] sm:$0xf]
    %v307 = vld [vmem:[#allocation6 + $0x54] sm:$0xf]
    %v308 = vld [vmem:[#allocation6 + $0x58] sm:$0xf]
    %v309 = vld [vmem:[#allocation6 + $0x5c] sm:$0xf]
    %v310 = vld [vmem:[#allocation6 + $0x60] sm:$0xf]
    %v311 = vld [vmem:[#allocation6 + $0x64] sm:$0xf]
    %v312 = vld [vmem:[#allocation6 + $0x68] sm:$0xf]
    %v313 = vld [vmem:[#allocation6 + $0x6c] sm:$0xf]
    %v314 = vld [vmem:[#allocation6 + $0x70] sm:$0xf]
    %v315 = vld [vmem:[#allocation6 + $0x74] sm:$0xf]
    %v316 = vld [vmem:[#allocation6 + $0x78] sm:$0xf]
    %v317 = vld [vmem:[#allocation6 + $0x7c] sm:$0xf]
    %v318 = vld [vmem:[#allocation6 + $0x80] sm:$0xf]
    %v319 = vld [vmem:[#allocation6 + $0x84] sm:$0xf]
    %v320 = vld [vmem:[#allocation6 + $0x88] sm:$0xf]
    %v321 = vld [vmem:[#allocation6 + $0x8c] sm:$0xf]
    %v322 = vld [vmem:[#allocation6 + $0x90] sm:$0xf]
    %v323 = vld [vmem:[#allocation6 + $0x94] sm:$0xf]
    %v324 = vld [vmem:[#allocation6 + $0x98] sm:$0xf]
    %v325 = vld [vmem:[#allocation6 + $0x9c] sm:$0xf]
    %v326 = vld [vmem:[#allocation6 + $0xa0] sm:$0xf]
    %v327 = vld [vmem:[#allocation6 + $0xa4] sm:$0xf]
    %v328 = vld [vmem:[#allocation6 + $0xa8] sm:$0xf]
    %v329 = vld [vmem:[#allocation6 + $0xac] sm:$0xf]
    %v330 = vld [vmem:[#allocation6 + $0xb0] sm:$0xf]
    %v331 = vld [vmem:[#allocation6 + $0xb4] sm:$0xf]
    %v332 = vld [vmem:[#allocation6 + $0xb8] sm:$0xf]
    %v333 = vld [vmem:[#allocation6 + $0xbc] sm:$0xf]
    %v334 = vld [vmem:[#allocation6 + $0xc0] sm:$0xf]
    %v335 = vld [vmem:[#allocation6 + $0xc4] sm:$0xf]
    %v336 = vld [vmem:[#allocation6 + $0xc8] sm:$0xf]
    %v337 = vld [vmem:[#allocation6 + $0xcc] sm:$0xf]
    %v338 = vld [vmem:[#allocation6 + $0xd0] sm:$0xf]
    %v339 = vld [vmem:[#allocation6 + $0xd4] sm:$0xf]
    %v340 = vld [vmem:[#allocation6 + $0xd8] sm:$0xf]
    %v341 = vld [vmem:[#allocation6 + $0xdc] sm:$0xf]
    %v342 = vld [vmem:[#allocation6 + $0xe0] sm:$0xf]
    %v343 = vld [vmem:[#allocation6 + $0xe4] sm:$0xf]
    %v344 = vld [vmem:[#allocation6 + $0xe8] sm:$0xf]
    %v345 = vld [vmem:[#allocation6 + $0xec] sm:$0xf]
    %v346 = vld [vmem:[#allocation6 + $0xf0] sm:$0xf]
    %v347 = vld [vmem:[#allocation6 + $0xf4] sm:$0xf]
    %v348 = vld [vmem:[#allocation6 + $0xf8] sm:$0xf]
    %v349 = vld [vmem:[#allocation6 + $0xfc] sm:$0xf]
    %v350 = vld [vmem:[#allocation6 + $0x100] sm:$0xf]
    %v351 = vld [vmem:[#allocation6 + $0x104] sm:$0xf]
    %v352 = vld [vmem:[#allocation6 + $0x108] sm:$0xf]
    %v353 = vld [vmem:[#allocation6 + $0x10c] sm:$0xf]
    %v354 = vld [vmem:[#allocation6 + $0x110] sm:$0xf]
    %v355 = vld [vmem:[#allocation6 + $0x114] sm:$0xf]
    %v356 = vld [vmem:[#allocation6 + $0x118] sm:$0xf]
    %v357 = vld [vmem:[#allocation6 + $0x11c] sm:$0xf]
    %v358 = vld [vmem:[#allocation6 + $0x120] sm:$0xf]
    %v359 = vld [vmem:[#allocation6 + $0x124] sm:$0xf]
    %v360 = vld [vmem:[#allocation6 + $0x128] sm:$0xf]
    %v361 = vld [vmem:[#allocation6 + $0x12c] sm:$0xf]
    %v362 = vld [vmem:[#allocation6 + $0x130] sm:$0xf]
    %v363 = vld [vmem:[#allocation6 + $0x134] sm:$0xf]
    %v364 = vld [vmem:[#allocation6 + $0x138] sm:$0xf]
    %v365 = vld [vmem:[#allocation6 + $0x13c] sm:$0xf]
    %v366 = vld [vmem:[#allocation6 + $0x140] sm:$0xf]
    %v367 = vld [vmem:[#allocation6 + $0x144] sm:$0xf]
    %v368 = vld [vmem:[#allocation6 + $0x148] sm:$0xf]
    %v369 = vld [vmem:[#allocation6 + $0x14c] sm:$0xf]
    %v370 = vld [vmem:[#allocation6 + $0x150] sm:$0xf]
    %v371 = vld [vmem:[#allocation6 + $0x154] sm:$0xf]
    %v372 = vld [vmem:[#allocation6 + $0x158] sm:$0xf]
    %v373 = vld [vmem:[#allocation6 + $0x15c] sm:$0xf]
    %v374 = vld [vmem:[#allocation6 + $0x160] sm:$0xf]
    %v375 = vld [vmem:[#allocation6 + $0x164] sm:$0xf]
    %v376 = vld [vmem:[#allocation6 + $0x168] sm:$0xf]
    %v377 = vld [vmem:[#allocation6 + $0x16c] sm:$0xf]
    %v378 = vld [vmem:[#allocation6 + $0x170] sm:$0xf]
    %v379 = vld [vmem:[#allocation6 + $0x174] sm:$0xf]
    %v380 = vld [vmem:[#allocation6 + $0x178] sm:$0xf]
    %v381 = vld [vmem:[#allocation6 + $0x17c] sm:$0xf]
    %v574 = vunpack.c.l.b16 %v94
    %v575 = vunpack.c.h.b16 %v94
    %v576 = vunpack.c.l.b16 %v95
    %v577 = vunpack.c.h.b16 %v95
    %v578 = vunpack.c.l.b16 %v96
    %v579 = vunpack.c.h.b16 %v96
    %v580 = vunpack.c.l.b16 %v97
    %v581 = vunpack.c.h.b16 %v97
    %v582 = vunpack.c.l.b16 %v98
    %v583 = vunpack.c.h.b16 %v98
    %v584 = vunpack.c.l.b16 %v99
    %v585 = vunpack.c.h.b16 %v99
    %v586 = vunpack.c.l.b16 %v100
    %v587 = vunpack.c.h.b16 %v100
    %v588 = vunpack.c.l.b16 %v101
    %v589 = vunpack.c.h.b16 %v101
    %v590 = vunpack.c.l.b16 %v102
    %v591 = vunpack.c.h.b16 %v102
    %v592 = vunpack.c.l.b16 %v103
    %v593 = vunpack.c.h.b16 %v103
    %v594 = vunpack.c.l.b16 %v104
    %v595 = vunpack.c.h.b16 %v104
    %v596 = vunpack.c.l.b16 %v105
    %v597 = vunpack.c.h.b16 %v105
    %v598 = vunpack.c.l.b16 %v106
    %v599 = vunpack.c.h.b16 %v106
    %v600 = vunpack.c.l.b16 %v107
    %v601 = vunpack.c.h.b16 %v107
    %v602 = vunpack.c.l.b16 %v108
    %v603 = vunpack.c.h.b16 %v108
    %v604 = vunpack.c.l.b16 %v109
    %v605 = vunpack.c.h.b16 %v109
    %v606 = vunpack.c.l.b16 %v110
    %v607 = vunpack.c.h.b16 %v110
    %v608 = vunpack.c.l.b16 %v111
    %v609 = vunpack.c.h.b16 %v111
    %v610 = vunpack.c.l.b16 %v112
    %v611 = vunpack.c.h.b16 %v112
    %v612 = vunpack.c.l.b16 %v113
    %v613 = vunpack.c.h.b16 %v113
    %v614 = vunpack.c.l.b16 %v114
    %v615 = vunpack.c.h.b16 %v114
    %v616 = vunpack.c.l.b16 %v115
    %v617 = vunpack.c.h.b16 %v115
    %v618 = vunpack.c.l.b16 %v116
    %v619 = vunpack.c.h.b16 %v116
    %v620 = vunpack.c.l.b16 %v117
    %v621 = vunpack.c.h.b16 %v117
    %v622 = vunpack.c.l.b16 %v118
    %v623 = vunpack.c.h.b16 %v118
    %v624 = vunpack.c.l.b16 %v119
    %v625 = vunpack.c.h.b16 %v119
    %v626 = vunpack.c.l.b16 %v120
    %v627 = vunpack.c.h.b16 %v120
    %v628 = vunpack.c.l.b16 %v121
    %v629 = vunpack.c.h.b16 %v121
    %v630 = vunpack.c.l.b16 %v122
    %v631 = vunpack.c.h.b16 %v122
    %v632 = vunpack.c.l.b16 %v123
    %v633 = vunpack.c.h.b16 %v123
    %v634 = vunpack.c.l.b16 %v124
    %v635 = vunpack.c.h.b16 %v124
    %v636 = vunpack.c.l.b16 %v125
    %v637 = vunpack.c.h.b16 %v125
    %v638 = vunpack.c.l.b16 %v126
    %v639 = vunpack.c.h.b16 %v126
    %v640 = vunpack.c.l.b16 %v127
    %v641 = vunpack.c.h.b16 %v127
    %v642 = vunpack.c.l.b16 %v128
    %v643 = vunpack.c.h.b16 %v128
    %v644 = vunpack.c.l.b16 %v129
    %v645 = vunpack.c.h.b16 %v129
    %v646 = vunpack.c.l.b16 %v130
    %v647 = vunpack.c.h.b16 %v130
    %v648 = vunpack.c.l.b16 %v131
    %v649 = vunpack.c.h.b16 %v131
    %v650 = vunpack.c.l.b16 %v132
    %v651 = vunpack.c.h.b16 %v132
    %v652 = vunpack.c.l.b16 %v133
    %v653 = vunpack.c.h.b16 %v133
    %v654 = vunpack.c.l.b16 %v134
    %v655 = vunpack.c.h.b16 %v134
    %v656 = vunpack.c.l.b16 %v135
    %v657 = vunpack.c.h.b16 %v135
    %v658 = vunpack.c.l.b16 %v136
    %v659 = vunpack.c.h.b16 %v136
    %v660 = vunpack.c.l.b16 %v137
    %v661 = vunpack.c.h.b16 %v137
    %v662 = vunpack.c.l.b16 %v138
    %v663 = vunpack.c.h.b16 %v138
    %v664 = vunpack.c.l.b16 %v139
    %v665 = vunpack.c.h.b16 %v139
    %v666 = vunpack.c.l.b16 %v140
    %v667 = vunpack.c.h.b16 %v140
    %v668 = vunpack.c.l.b16 %v141
    %v669 = vunpack.c.h.b16 %v141
    %v670 = vunpack.c.l.b16 %v142
    %v671 = vunpack.c.h.b16 %v142
    %v672 = vunpack.c.l.b16 %v143
    %v673 = vunpack.c.h.b16 %v143
    %v674 = vunpack.c.l.b16 %v144
    %v675 = vunpack.c.h.b16 %v144
    %v676 = vunpack.c.l.b16 %v145
    %v677 = vunpack.c.h.b16 %v145
    %v678 = vunpack.c.l.b16 %v146
    %v679 = vunpack.c.h.b16 %v146
    %v680 = vunpack.c.l.b16 %v147
    %v681 = vunpack.c.h.b16 %v147
    %v682 = vunpack.c.l.b16 %v148
    %v683 = vunpack.c.h.b16 %v148
    %v684 = vunpack.c.l.b16 %v149
    %v685 = vunpack.c.h.b16 %v149
    %v686 = vunpack.c.l.b16 %v150
    %v687 = vunpack.c.h.b16 %v150
    %v688 = vunpack.c.l.b16 %v151
    %v689 = vunpack.c.h.b16 %v151
    %v690 = vunpack.c.l.b16 %v152
    %v691 = vunpack.c.h.b16 %v152
    %v692 = vunpack.c.l.b16 %v153
    %v693 = vunpack.c.h.b16 %v153
    %v694 = vunpack.c.l.b16 %v154
    %v695 = vunpack.c.h.b16 %v154
    %v696 = vunpack.c.l.b16 %v155
    %v697 = vunpack.c.h.b16 %v155
    %v698 = vunpack.c.l.b16 %v156
    %v699 = vunpack.c.h.b16 %v156
    %v700 = vunpack.c.l.b16 %v157
    %v701 = vunpack.c.h.b16 %v157
    %v702 = vunpack.c.l.b16 %v158
    %v703 = vunpack.c.h.b16 %v158
    %v704 = vunpack.c.l.b16 %v159
    %v705 = vunpack.c.h.b16 %v159
    %v706 = vunpack.c.l.b16 %v160
    %v707 = vunpack.c.h.b16 %v160
    %v708 = vunpack.c.l.b16 %v161
    %v709 = vunpack.c.h.b16 %v161
    %v710 = vunpack.c.l.b16 %v162
    %v711 = vunpack.c.h.b16 %v162
    %v712 = vunpack.c.l.b16 %v163
    %v713 = vunpack.c.h.b16 %v163
    %v714 = vunpack.c.l.b16 %v164
    %v715 = vunpack.c.h.b16 %v164
    %v716 = vunpack.c.l.b16 %v165
    %v717 = vunpack.c.h.b16 %v165
    %v718 = vunpack.c.l.b16 %v166
    %v719 = vunpack.c.h.b16 %v166
    %v720 = vunpack.c.l.b16 %v167
    %v721 = vunpack.c.h.b16 %v167
    %v722 = vunpack.c.l.b16 %v168
    %v723 = vunpack.c.h.b16 %v168
    %v724 = vunpack.c.l.b16 %v169
    %v725 = vunpack.c.h.b16 %v169
    %v726 = vunpack.c.l.b16 %v170
    %v727 = vunpack.c.h.b16 %v170
    %v728 = vunpack.c.l.b16 %v171
    %v729 = vunpack.c.h.b16 %v171
    %v730 = vunpack.c.l.b16 %v172
    %v731 = vunpack.c.h.b16 %v172
    %v732 = vunpack.c.l.b16 %v173
    %v733 = vunpack.c.h.b16 %v173
    %v734 = vunpack.c.l.b16 %v174
    %v735 = vunpack.c.h.b16 %v174
    %v736 = vunpack.c.l.b16 %v175
    %v737 = vunpack.c.h.b16 %v175
    %v738 = vunpack.c.l.b16 %v176
    %v739 = vunpack.c.h.b16 %v176
    %v740 = vunpack.c.l.b16 %v177
    %v741 = vunpack.c.h.b16 %v177
    %v742 = vunpack.c.l.b16 %v178
    %v743 = vunpack.c.h.b16 %v178
    %v744 = vunpack.c.l.b16 %v179
    %v745 = vunpack.c.h.b16 %v179
    %v746 = vunpack.c.l.b16 %v180
    %v747 = vunpack.c.h.b16 %v180
    %v748 = vunpack.c.l.b16 %v181
    %v749 = vunpack.c.h.b16 %v181
    %v750 = vunpack.c.l.b16 %v182
    %v751 = vunpack.c.h.b16 %v182
    %v752 = vunpack.c.l.b16 %v183
    %v753 = vunpack.c.h.b16 %v183
    %v754 = vunpack.c.l.b16 %v184
    %v755 = vunpack.c.h.b16 %v184
    %v756 = vunpack.c.l.b16 %v185
    %v757 = vunpack.c.h.b16 %v185
    %v758 = vunpack.c.l.b16 %v186
    %v759 = vunpack.c.h.b16 %v186
    %v760 = vunpack.c.l.b16 %v187
    %v761 = vunpack.c.h.b16 %v187
    %v762 = vunpack.c.l.b16 %v188
    %v763 = vunpack.c.h.b16 %v188
    %v764 = vunpack.c.l.b16 %v189
    %v765 = vunpack.c.h.b16 %v189
    %v766 = vunpack.c.l.b16 %v190
    %v767 = vunpack.c.h.b16 %v190
    %v768 = vunpack.c.l.b16 %v191
    %v769 = vunpack.c.h.b16 %v191
    %v770 = vunpack.c.l.b16 %v192
    %v771 = vunpack.c.h.b16 %v192
    %v772 = vunpack.c.l.b16 %v193
    %v773 = vunpack.c.h.b16 %v193
    %v774 = vunpack.c.l.b16 %v194
    %v775 = vunpack.c.h.b16 %v194
    %v776 = vunpack.c.l.b16 %v195
    %v777 = vunpack.c.h.b16 %v195
    %v778 = vunpack.c.l.b16 %v196
    %v779 = vunpack.c.h.b16 %v196
    %v780 = vunpack.c.l.b16 %v197
    %v781 = vunpack.c.h.b16 %v197
    %v782 = vunpack.c.l.b16 %v198
    %v783 = vunpack.c.h.b16 %v198
    %v784 = vunpack.c.l.b16 %v199
    %v785 = vunpack.c.h.b16 %v199
    %v786 = vunpack.c.l.b16 %v200
    %v787 = vunpack.c.h.b16 %v200
    %v788 = vunpack.c.l.b16 %v201
    %v789 = vunpack.c.h.b16 %v201
    %v790 = vunpack.c.l.b16 %v202
    %v791 = vunpack.c.h.b16 %v202
    %v792 = vunpack.c.l.b16 %v203
    %v793 = vunpack.c.h.b16 %v203
    %v794 = vunpack.c.l.b16 %v204
    %v795 = vunpack.c.h.b16 %v204
    %v796 = vunpack.c.l.b16 %v205
    %v797 = vunpack.c.h.b16 %v205
    %v798 = vunpack.c.l.b16 %v206
    %v799 = vunpack.c.h.b16 %v206
    %v800 = vunpack.c.l.b16 %v207
    %v801 = vunpack.c.h.b16 %v207
    %v802 = vunpack.c.l.b16 %v208
    %v803 = vunpack.c.h.b16 %v208
    %v804 = vunpack.c.l.b16 %v209
    %v805 = vunpack.c.h.b16 %v209
    %v806 = vunpack.c.l.b16 %v210
    %v807 = vunpack.c.h.b16 %v210
    %v808 = vunpack.c.l.b16 %v211
    %v809 = vunpack.c.h.b16 %v211
    %v810 = vunpack.c.l.b16 %v212
    %v811 = vunpack.c.h.b16 %v212
    %v812 = vunpack.c.l.b16 %v213
    %v813 = vunpack.c.h.b16 %v213
    %v814 = vunpack.c.l.b16 %v214
    %v815 = vunpack.c.h.b16 %v214
    %v816 = vunpack.c.l.b16 %v215
    %v817 = vunpack.c.h.b16 %v215
    %v818 = vunpack.c.l.b16 %v216
    %v819 = vunpack.c.h.b16 %v216
    %v820 = vunpack.c.l.b16 %v217
    %v821 = vunpack.c.h.b16 %v217
    %v822 = vunpack.c.l.b16 %v218
    %v823 = vunpack.c.h.b16 %v218
    %v824 = vunpack.c.l.b16 %v219
    %v825 = vunpack.c.h.b16 %v219
    %v826 = vunpack.c.l.b16 %v220
    %v827 = vunpack.c.h.b16 %v220
    %v828 = vunpack.c.l.b16 %v221
    %v829 = vunpack.c.h.b16 %v221
    %v830 = vunpack.c.l.b16 %v222
    %v831 = vunpack.c.h.b16 %v222
    %v832 = vunpack.c.l.b16 %v223
    %v833 = vunpack.c.h.b16 %v223
    %v834 = vunpack.c.l.b16 %v224
    %v835 = vunpack.c.h.b16 %v224
    %v836 = vunpack.c.l.b16 %v225
    %v837 = vunpack.c.h.b16 %v225
    %v838 = vunpack.c.l.b16 %v226
    %v839 = vunpack.c.h.b16 %v226
    %v840 = vunpack.c.l.b16 %v227
    %v841 = vunpack.c.h.b16 %v227
    %v842 = vunpack.c.l.b16 %v228
    %v843 = vunpack.c.h.b16 %v228
    %v844 = vunpack.c.l.b16 %v229
    %v845 = vunpack.c.h.b16 %v229
    %v846 = vunpack.c.l.b16 %v230
    %v847 = vunpack.c.h.b16 %v230
    %v848 = vunpack.c.l.b16 %v231
    %v849 = vunpack.c.h.b16 %v231
    %v850 = vunpack.c.l.b16 %v232
    %v851 = vunpack.c.h.b16 %v232
    %v852 = vunpack.c.l.b16 %v233
    %v853 = vunpack.c.h.b16 %v233
    %v854 = vunpack.c.l.b16 %v234
    %v855 = vunpack.c.h.b16 %v234
    %v856 = vunpack.c.l.b16 %v235
    %v857 = vunpack.c.h.b16 %v235
    %v858 = vunpack.c.l.b16 %v236
    %v859 = vunpack.c.h.b16 %v236
    %v860 = vunpack.c.l.b16 %v237
    %v861 = vunpack.c.h.b16 %v237
    %v862 = vunpack.c.l.b16 %v238
    %v863 = vunpack.c.h.b16 %v238
    %v864 = vunpack.c.l.b16 %v239
    %v865 = vunpack.c.h.b16 %v239
    %v866 = vunpack.c.l.b16 %v240
    %v867 = vunpack.c.h.b16 %v240
    %v868 = vunpack.c.l.b16 %v241
    %v869 = vunpack.c.h.b16 %v241
    %v870 = vunpack.c.l.b16 %v242
    %v871 = vunpack.c.h.b16 %v242
    %v872 = vunpack.c.l.b16 %v243
    %v873 = vunpack.c.h.b16 %v243
    %v874 = vunpack.c.l.b16 %v244
    %v875 = vunpack.c.h.b16 %v244
    %v876 = vunpack.c.l.b16 %v245
    %v877 = vunpack.c.h.b16 %v245
    %v878 = vunpack.c.l.b16 %v246
    %v879 = vunpack.c.h.b16 %v246
    %v880 = vunpack.c.l.b16 %v247
    %v881 = vunpack.c.h.b16 %v247
    %v882 = vunpack.c.l.b16 %v248
    %v883 = vunpack.c.h.b16 %v248
    %v884 = vunpack.c.l.b16 %v249
    %v885 = vunpack.c.h.b16 %v249
    %v886 = vunpack.c.l.b16 %v250
    %v887 = vunpack.c.h.b16 %v250
    %v888 = vunpack.c.l.b16 %v251
    %v889 = vunpack.c.h.b16 %v251
    %v890 = vunpack.c.l.b16 %v252
    %v891 = vunpack.c.h.b16 %v252
    %v892 = vunpack.c.l.b16 %v253
    %v893 = vunpack.c.h.b16 %v253
    %v894 = vunpack.c.l.b16 %v254
    %v895 = vunpack.c.h.b16 %v254
    %v896 = vunpack.c.l.b16 %v255
    %v897 = vunpack.c.h.b16 %v255
    %v898 = vunpack.c.l.b16 %v256
    %v899 = vunpack.c.h.b16 %v256
    %v900 = vunpack.c.l.b16 %v257
    %v901 = vunpack.c.h.b16 %v257
    %v902 = vunpack.c.l.b16 %v258
    %v903 = vunpack.c.h.b16 %v258
    %v904 = vunpack.c.l.b16 %v259
    %v905 = vunpack.c.h.b16 %v259
    %v906 = vunpack.c.l.b16 %v260
    %v907 = vunpack.c.h.b16 %v260
    %v908 = vunpack.c.l.b16 %v261
    %v909 = vunpack.c.h.b16 %v261
    %v910 = vunpack.c.l.b16 %v262
    %v911 = vunpack.c.h.b16 %v262
    %v912 = vunpack.c.l.b16 %v263
    %v913 = vunpack.c.h.b16 %v263
    %v914 = vunpack.c.l.b16 %v264
    %v915 = vunpack.c.h.b16 %v264
    %v916 = vunpack.c.l.b16 %v265
    %v917 = vunpack.c.h.b16 %v265
    %v918 = vunpack.c.l.b16 %v266
    %v919 = vunpack.c.h.b16 %v266
    %v920 = vunpack.c.l.b16 %v267
    %v921 = vunpack.c.h.b16 %v267
    %v922 = vunpack.c.l.b16 %v268
    %v923 = vunpack.c.h.b16 %v268
    %v924 = vunpack.c.l.b16 %v269
    %v925 = vunpack.c.h.b16 %v269
    %v926 = vunpack.c.l.b16 %v270
    %v927 = vunpack.c.h.b16 %v270
    %v928 = vunpack.c.l.b16 %v271
    %v929 = vunpack.c.h.b16 %v271
    %v930 = vunpack.c.l.b16 %v272
    %v931 = vunpack.c.h.b16 %v272
    %v932 = vunpack.c.l.b16 %v273
    %v933 = vunpack.c.h.b16 %v273
    %v934 = vunpack.c.l.b16 %v274
    %v935 = vunpack.c.h.b16 %v274
    %v936 = vunpack.c.l.b16 %v275
    %v937 = vunpack.c.h.b16 %v275
    %v938 = vunpack.c.l.b16 %v276
    %v939 = vunpack.c.h.b16 %v276
    %v940 = vunpack.c.l.b16 %v277
    %v941 = vunpack.c.h.b16 %v277
    %v942 = vunpack.c.l.b16 %v278
    %v943 = vunpack.c.h.b16 %v278
    %v944 = vunpack.c.l.b16 %v279
    %v945 = vunpack.c.h.b16 %v279
    %v946 = vunpack.c.l.b16 %v280
    %v947 = vunpack.c.h.b16 %v280
    %v948 = vunpack.c.l.b16 %v281
    %v949 = vunpack.c.h.b16 %v281
    %v950 = vunpack.c.l.b16 %v282
    %v951 = vunpack.c.h.b16 %v282
    %v952 = vunpack.c.l.b16 %v283
    %v953 = vunpack.c.h.b16 %v283
    %v954 = vunpack.c.l.b16 %v284
    %v955 = vunpack.c.h.b16 %v284
    %v956 = vunpack.c.l.b16 %v285
    %v957 = vunpack.c.h.b16 %v285
    %v958 = vpack.c.b16 %v580, %v574
    %v959 = vpack.c.b16 %v581, %v575
    %v960 = vpack.c.b16 %v582, %v576
    %v961 = vpack.c.b16 %v583, %v577
    %v962 = vpack.c.b16 %v584, %v578
    %v963 = vpack.c.b16 %v585, %v579
    %v964 = vpack.c.b16 %v592, %v586
    %v965 = vpack.c.b16 %v593, %v587
    %v966 = vpack.c.b16 %v594, %v588
    %v967 = vpack.c.b16 %v595, %v589
    %v968 = vpack.c.b16 %v596, %v590
    %v969 = vpack.c.b16 %v597, %v591
    %v970 = vpack.c.b16 %v604, %v598
    %v971 = vpack.c.b16 %v605, %v599
    %v972 = vpack.c.b16 %v606, %v600
    %v973 = vpack.c.b16 %v607, %v601
    %v974 = vpack.c.b16 %v608, %v602
    %v975 = vpack.c.b16 %v609, %v603
    %v976 = vpack.c.b16 %v616, %v610
    %v977 = vpack.c.b16 %v617, %v611
    %v978 = vpack.c.b16 %v618, %v612
    %v979 = vpack.c.b16 %v619, %v613
    %v980 = vpack.c.b16 %v620, %v614
    %v981 = vpack.c.b16 %v621, %v615
    %v982 = vpack.c.b16 %v628, %v622
    %v983 = vpack.c.b16 %v629, %v623
    %v984 = vpack.c.b16 %v630, %v624
    %v985 = vpack.c.b16 %v631, %v625
    %v986 = vpack.c.b16 %v632, %v626
    %v987 = vpack.c.b16 %v633, %v627
    %v988 = vpack.c.b16 %v640, %v634
    %v989 = vpack.c.b16 %v641, %v635
    %v990 = vpack.c.b16 %v642, %v636
    %v991 = vpack.c.b16 %v643, %v637
    %v992 = vpack.c.b16 %v644, %v638
    %v993 = vpack.c.b16 %v645, %v639
    %v994 = vpack.c.b16 %v652, %v646
    %v995 = vpack.c.b16 %v653, %v647
    %v996 = vpack.c.b16 %v654, %v648
    %v997 = vpack.c.b16 %v655, %v649
    %v998 = vpack.c.b16 %v656, %v650
    %v999 = vpack.c.b16 %v657, %v651
    %v1000 = vpack.c.b16 %v664, %v658
    %v1001 = vpack.c.b16 %v665, %v659
    %v1002 = vpack.c.b16 %v666, %v660
    %v1003 = vpack.c.b16 %v667, %v661
    %v1004 = vpack.c.b16 %v668, %v662
    %v1005 = vpack.c.b16 %v669, %v663
    %v1006 = vpack.c.b16 %v676, %v670
    %v1007 = vpack.c.b16 %v677, %v671
    %v1008 = vpack.c.b16 %v678, %v672
    %v1009 = vpack.c.b16 %v679, %v673
    %v1010 = vpack.c.b16 %v680, %v674
    %v1011 = vpack.c.b16 %v681, %v675
    %v1012 = vpack.c.b16 %v688, %v682
    %v1013 = vpack.c.b16 %v689, %v683
    %v1014 = vpack.c.b16 %v690, %v684
    %v1015 = vpack.c.b16 %v691, %v685
    %v1016 = vpack.c.b16 %v692, %v686
    %v1017 = vpack.c.b16 %v693, %v687
    %v1018 = vpack.c.b16 %v700, %v694
    %v1019 = vpack.c.b16 %v701, %v695
    %v1020 = vpack.c.b16 %v702, %v696
    %v1021 = vpack.c.b16 %v703, %v697
    %v1022 = vpack.c.b16 %v704, %v698
    %v1023 = vpack.c.b16 %v705, %v699
    %v1024 = vpack.c.b16 %v712, %v706
    %v1025 = vpack.c.b16 %v713, %v707
    %v1026 = vpack.c.b16 %v714, %v708
    %v1027 = vpack.c.b16 %v715, %v709
    %v1028 = vpack.c.b16 %v716, %v710
    %v1029 = vpack.c.b16 %v717, %v711
    %v1030 = vpack.c.b16 %v724, %v718
    %v1031 = vpack.c.b16 %v725, %v719
    %v1032 = vpack.c.b16 %v726, %v720
    %v1033 = vpack.c.b16 %v727, %v721
    %v1034 = vpack.c.b16 %v728, %v722
    %v1035 = vpack.c.b16 %v729, %v723
    %v1036 = vpack.c.b16 %v736, %v730
    %v1037 = vpack.c.b16 %v737, %v731
    %v1038 = vpack.c.b16 %v738, %v732
    %v1039 = vpack.c.b16 %v739, %v733
    %v1040 = vpack.c.b16 %v740, %v734
    %v1041 = vpack.c.b16 %v741, %v735
    %v1042 = vpack.c.b16 %v748, %v742
    %v1043 = vpack.c.b16 %v749, %v743
    %v1044 = vpack.c.b16 %v750, %v744
    %v1045 = vpack.c.b16 %v751, %v745
    %v1046 = vpack.c.b16 %v752, %v746
    %v1047 = vpack.c.b16 %v753, %v747
    %v1048 = vpack.c.b16 %v760, %v754
    %v1049 = vpack.c.b16 %v761, %v755
    %v1050 = vpack.c.b16 %v762, %v756
    %v1051 = vpack.c.b16 %v763, %v757
    %v1052 = vpack.c.b16 %v764, %v758
    %v1053 = vpack.c.b16 %v765, %v759
    %v1054 = vpack.c.b16 %v772, %v766
    %v1055 = vpack.c.b16 %v773, %v767
    %v1056 = vpack.c.b16 %v774, %v768
    %v1057 = vpack.c.b16 %v775, %v769
    %v1058 = vpack.c.b16 %v776, %v770
    %v1059 = vpack.c.b16 %v777, %v771
    %v1060 = vpack.c.b16 %v784, %v778
    %v1061 = vpack.c.b16 %v785, %v779
    %v1062 = vpack.c.b16 %v786, %v780
    %v1063 = vpack.c.b16 %v787, %v781
    %v1064 = vpack.c.b16 %v788, %v782
    %v1065 = vpack.c.b16 %v789, %v783
    %v1066 = vpack.c.b16 %v796, %v790
    %v1067 = vpack.c.b16 %v797, %v791
    %v1068 = vpack.c.b16 %v798, %v792
    %v1069 = vpack.c.b16 %v799, %v793
    %v1070 = vpack.c.b16 %v800, %v794
    %v1071 = vpack.c.b16 %v801, %v795
    %v1072 = vpack.c.b16 %v808, %v802
    %v1073 = vpack.c.b16 %v809, %v803
    %v1074 = vpack.c.b16 %v810, %v804
    %v1075 = vpack.c.b16 %v811, %v805
    %v1076 = vpack.c.b16 %v812, %v806
    %v1077 = vpack.c.b16 %v813, %v807
    %v1078 = vpack.c.b16 %v820, %v814
    %v1079 = vpack.c.b16 %v821, %v815
    %v1080 = vpack.c.b16 %v822, %v816
    %v1081 = vpack.c.b16 %v823, %v817
    %v1082 = vpack.c.b16 %v824, %v818
    %v1083 = vpack.c.b16 %v825, %v819
    %v1084 = vpack.c.b16 %v832, %v826
    %v1085 = vpack.c.b16 %v833, %v827
    %v1086 = vpack.c.b16 %v834, %v828
    %v1087 = vpack.c.b16 %v835, %v829
    %v1088 = vpack.c.b16 %v836, %v830
    %v1089 = vpack.c.b16 %v837, %v831
    %v1090 = vpack.c.b16 %v844, %v838
    %v1091 = vpack.c.b16 %v845, %v839
    %v1092 = vpack.c.b16 %v846, %v840
    %v1093 = vpack.c.b16 %v847, %v841
    %v1094 = vpack.c.b16 %v848, %v842
    %v1095 = vpack.c.b16 %v849, %v843
    %v1096 = vpack.c.b16 %v856, %v850
    %v1097 = vpack.c.b16 %v857, %v851
    %v1098 = vpack.c.b16 %v858, %v852
    %v1099 = vpack.c.b16 %v859, %v853
    %v1100 = vpack.c.b16 %v860, %v854
    %v1101 = vpack.c.b16 %v861, %v855
    %v1102 = vpack.c.b16 %v868, %v862
    %v1103 = vpack.c.b16 %v869, %v863
    %v1104 = vpack.c.b16 %v870, %v864
    %v1105 = vpack.c.b16 %v871, %v865
    %v1106 = vpack.c.b16 %v872, %v866
    %v1107 = vpack.c.b16 %v873, %v867
    %v1108 = vpack.c.b16 %v880, %v874
    %v1109 = vpack.c.b16 %v881, %v875
    %v1110 = vpack.c.b16 %v882, %v876
    %v1111 = vpack.c.b16 %v883, %v877
    %v1112 = vpack.c.b16 %v884, %v878
    %v1113 = vpack.c.b16 %v885, %v879
    %v1114 = vpack.c.b16 %v892, %v886
    %v1115 = vpack.c.b16 %v893, %v887
    %v1116 = vpack.c.b16 %v894, %v888
    %v1117 = vpack.c.b16 %v895, %v889
    %v1118 = vpack.c.b16 %v896, %v890
    %v1119 = vpack.c.b16 %v897, %v891
    %v1120 = vpack.c.b16 %v904, %v898
    %v1121 = vpack.c.b16 %v905, %v899
    %v1122 = vpack.c.b16 %v906, %v900
    %v1123 = vpack.c.b16 %v907, %v901
    %v1124 = vpack.c.b16 %v908, %v902
    %v1125 = vpack.c.b16 %v909, %v903
    %v1126 = vpack.c.b16 %v916, %v910
    %v1127 = vpack.c.b16 %v917, %v911
    %v1128 = vpack.c.b16 %v918, %v912
    %v1129 = vpack.c.b16 %v919, %v913
    %v1130 = vpack.c.b16 %v920, %v914
    %v1131 = vpack.c.b16 %v921, %v915
    %v1132 = vpack.c.b16 %v928, %v922
    %v1133 = vpack.c.b16 %v929, %v923
    %v1134 = vpack.c.b16 %v930, %v924
    %v1135 = vpack.c.b16 %v931, %v925
    %v1136 = vpack.c.b16 %v932, %v926
    %v1137 = vpack.c.b16 %v933, %v927
    %v1138 = vpack.c.b16 %v940, %v934
    %v1139 = vpack.c.b16 %v941, %v935
    %v1140 = vpack.c.b16 %v942, %v936
    %v1141 = vpack.c.b16 %v943, %v937
    %v1142 = vpack.c.b16 %v944, %v938
    %v1143 = vpack.c.b16 %v945, %v939
    %v1144 = vpack.c.b16 %v952, %v946
    %v1145 = vpack.c.b16 %v953, %v947
    %v1146 = vpack.c.b16 %v954, %v948
    %v1147 = vpack.c.b16 %v955, %v949
    %v1148 = vpack.c.b16 %v956, %v950
    %v1149 = vpack.c.b16 %v957, %v951
    %v1438 = vunpack.c.l.b16 %v286
    %v1439 = vunpack.c.l.b16 %v287
    %v1440 = vunpack.c.l.b16 %v288
    %v1441 = vunpack.c.l.b16 %v289
    %v1442 = vunpack.c.l.b16 %v290
    %v1443 = vunpack.c.l.b16 %v291
    %v1444 = vunpack.c.l.b16 %v292
    %v1445 = vunpack.c.l.b16 %v293
    %v1446 = vunpack.c.l.b16 %v294
    %v1447 = vunpack.c.l.b16 %v295
    %v1448 = vunpack.c.l.b16 %v296
    %v1449 = vunpack.c.l.b16 %v297
    %v1450 = vunpack.c.l.b16 %v298
    %v1451 = vunpack.c.l.b16 %v299
    %v1452 = vunpack.c.l.b16 %v300
    %v1453 = vunpack.c.l.b16 %v301
    %v1454 = vunpack.c.l.b16 %v302
    %v1455 = vunpack.c.l.b16 %v303
    %v1456 = vunpack.c.l.b16 %v304
    %v1457 = vunpack.c.l.b16 %v305
    %v1458 = vunpack.c.l.b16 %v306
    %v1459 = vunpack.c.l.b16 %v307
    %v1460 = vunpack.c.l.b16 %v308
    %v1461 = vunpack.c.l.b16 %v309
    %v1462 = vunpack.c.l.b16 %v310
    %v1463 = vunpack.c.l.b16 %v311
    %v1464 = vunpack.c.l.b16 %v312
    %v1465 = vunpack.c.l.b16 %v313
    %v1466 = vunpack.c.l.b16 %v314
    %v1467 = vunpack.c.l.b16 %v315
    %v1468 = vunpack.c.l.b16 %v316
    %v1469 = vunpack.c.l.b16 %v317
    %v1470 = vunpack.c.l.b16 %v318
    %v1471 = vunpack.c.l.b16 %v319
    %v1472 = vunpack.c.l.b16 %v320
    %v1473 = vunpack.c.l.b16 %v321
    %v1474 = vunpack.c.l.b16 %v322
    %v1475 = vunpack.c.l.b16 %v323
    %v1476 = vunpack.c.l.b16 %v324
    %v1477 = vunpack.c.l.b16 %v325
    %v1478 = vunpack.c.l.b16 %v326
    %v1479 = vunpack.c.l.b16 %v327
    %v1480 = vunpack.c.l.b16 %v328
    %v1481 = vunpack.c.l.b16 %v329
    %v1482 = vunpack.c.l.b16 %v330
    %v1483 = vunpack.c.l.b16 %v331
    %v1484 = vunpack.c.l.b16 %v332
    %v1485 = vunpack.c.l.b16 %v333
    %v1486 = vunpack.c.l.b16 %v334
    %v1487 = vunpack.c.l.b16 %v335
    %v1488 = vunpack.c.l.b16 %v336
    %v1489 = vunpack.c.l.b16 %v337
    %v1490 = vunpack.c.l.b16 %v338
    %v1491 = vunpack.c.l.b16 %v339
    %v1492 = vunpack.c.l.b16 %v340
    %v1493 = vunpack.c.l.b16 %v341
    %v1494 = vunpack.c.l.b16 %v342
    %v1495 = vunpack.c.l.b16 %v343
    %v1496 = vunpack.c.l.b16 %v344
    %v1497 = vunpack.c.l.b16 %v345
    %v1498 = vunpack.c.l.b16 %v346
    %v1499 = vunpack.c.l.b16 %v347
    %v1500 = vunpack.c.l.b16 %v348
    %v1501 = vunpack.c.l.b16 %v349
    %v1502 = vunpack.c.l.b16 %v350
    %v1503 = vunpack.c.l.b16 %v351
    %v1504 = vunpack.c.l.b16 %v352
    %v1505 = vunpack.c.l.b16 %v353
    %v1506 = vunpack.c.l.b16 %v354
    %v1507 = vunpack.c.l.b16 %v355
    %v1508 = vunpack.c.l.b16 %v356
    %v1509 = vunpack.c.l.b16 %v357
    %v1510 = vunpack.c.l.b16 %v358
    %v1511 = vunpack.c.l.b16 %v359
    %v1512 = vunpack.c.l.b16 %v360
    %v1513 = vunpack.c.l.b16 %v361
    %v1514 = vunpack.c.l.b16 %v362
    %v1515 = vunpack.c.l.b16 %v363
    %v1516 = vunpack.c.l.b16 %v364
    %v1517 = vunpack.c.l.b16 %v365
    %v1518 = vunpack.c.l.b16 %v366
    %v1519 = vunpack.c.l.b16 %v367
    %v1520 = vunpack.c.l.b16 %v368
    %v1521 = vunpack.c.l.b16 %v369
    %v1522 = vunpack.c.l.b16 %v370
    %v1523 = vunpack.c.l.b16 %v371
    %v1524 = vunpack.c.l.b16 %v372
    %v1525 = vunpack.c.l.b16 %v373
    %v1526 = vunpack.c.l.b16 %v374
    %v1527 = vunpack.c.l.b16 %v375
    %v1528 = vunpack.c.l.b16 %v376
    %v1529 = vunpack.c.l.b16 %v377
    %v1530 = vunpack.c.l.b16 %v378
    %v1531 = vunpack.c.l.b16 %v379
    %v1532 = vunpack.c.l.b16 %v380
    %v1533 = vunpack.c.l.b16 %v381
    %v1534 = vpack.c.b16 %v1439, %v1438
    %v1535 = vpack.c.b16 %v1441, %v1440
    %v1536 = vpack.c.b16 %v1443, %v1442
    %v1537 = vpack.c.b16 %v1445, %v1444
    %v1538 = vpack.c.b16 %v1447, %v1446
    %v1539 = vpack.c.b16 %v1449, %v1448
    %v1540 = vpack.c.b16 %v1451, %v1450
    %v1541 = vpack.c.b16 %v1453, %v1452
    %v1542 = vpack.c.b16 %v1455, %v1454
    %v1543 = vpack.c.b16 %v1457, %v1456
    %v1544 = vpack.c.b16 %v1459, %v1458
    %v1545 = vpack.c.b16 %v1461, %v1460
    %v1546 = vpack.c.b16 %v1463, %v1462
    %v1547 = vpack.c.b16 %v1465, %v1464
    %v1548 = vpack.c.b16 %v1467, %v1466
    %v1549 = vpack.c.b16 %v1469, %v1468
    %v1550 = vpack.c.b16 %v1471, %v1470
    %v1551 = vpack.c.b16 %v1473, %v1472
    %v1552 = vpack.c.b16 %v1475, %v1474
    %v1553 = vpack.c.b16 %v1477, %v1476
    %v1554 = vpack.c.b16 %v1479, %v1478
    %v1555 = vpack.c.b16 %v1481, %v1480
    %v1556 = vpack.c.b16 %v1483, %v1482
    %v1557 = vpack.c.b16 %v1485, %v1484
    %v1558 = vpack.c.b16 %v1487, %v1486
    %v1559 = vpack.c.b16 %v1489, %v1488
    %v1560 = vpack.c.b16 %v1491, %v1490
    %v1561 = vpack.c.b16 %v1493, %v1492
    %v1562 = vpack.c.b16 %v1495, %v1494
    %v1563 = vpack.c.b16 %v1497, %v1496
    %v1564 = vpack.c.b16 %v1499, %v1498
    %v1565 = vpack.c.b16 %v1501, %v1500
    %v1566 = vpack.c.b16 %v1503, %v1502
    %v1567 = vpack.c.b16 %v1505, %v1504
    %v1568 = vpack.c.b16 %v1507, %v1506
    %v1569 = vpack.c.b16 %v1509, %v1508
    %v1570 = vpack.c.b16 %v1511, %v1510
    %v1571 = vpack.c.b16 %v1513, %v1512
    %v1572 = vpack.c.b16 %v1515, %v1514
    %v1573 = vpack.c.b16 %v1517, %v1516
    %v1574 = vpack.c.b16 %v1519, %v1518
    %v1575 = vpack.c.b16 %v1521, %v1520
    %v1576 = vpack.c.b16 %v1523, %v1522
    %v1577 = vpack.c.b16 %v1525, %v1524
    %v1578 = vpack.c.b16 %v1527, %v1526
    %v1579 = vpack.c.b16 %v1529, %v1528
    %v1580 = vpack.c.b16 %v1531, %v1530
    %v1581 = vpack.c.b16 %v1533, %v1532
    %1630 = vmatpush.bf16.msra.mxu0 %v1541
    %1631 = vmatpush.bf16.msra.mxu0 %v1540
    %1632 = vmatpush.bf16.msra.mxu0 %v1539
    %1633 = vmatpush.bf16.msra.mxu0 %v1538
    %1634 = vmatpush.bf16.msra.mxu0 %v1537
    %1635 = vmatpush.bf16.msra.mxu0 %v1536
    %1636 = vmatpush.bf16.msra.mxu0 %v1535
    %1637 = vmatpush.bf16.msra.mxu0 %v1534
    %1638 = vmatmul.bf16.gmra.mxu0 %v958
    %v1639 = vpop.f32.mrf.mxu0
    %v1640 = vadd.f32 0.0, %v1639
    %v1641 = vpop.f32.mrf.mxu0
    %v1642 = vadd.f32 0.0, %v1641
    %1643 = vmatmul.bf16.gmra.mxu0 %v964
    %v1644 = vpop.f32.mrf.mxu0
    %v1645 = vadd.f32 0.0, %v1644
    %v1646 = vpop.f32.mrf.mxu0
    %v1647 = vadd.f32 0.0, %v1646
    %1648 = vmatmul.bf16.gmra.mxu0 %v970
    %v1649 = vpop.f32.mrf.mxu0
    %v1650 = vadd.f32 0.0, %v1649
    %v1651 = vpop.f32.mrf.mxu0
    %v1652 = vadd.f32 0.0, %v1651
    %1653 = vmatmul.bf16.gmra.mxu0 %v976
    %v1654 = vpop.f32.mrf.mxu0
    %v1655 = vadd.f32 0.0, %v1654
    %v1656 = vpop.f32.mrf.mxu0
    %v1657 = vadd.f32 0.0, %v1656
    %1658 = vmatmul.bf16.gmra.mxu0 %v982
    %v1659 = vpop.f32.mrf.mxu0
    %v1660 = vadd.f32 0.0, %v1659
    %v1661 = vpop.f32.mrf.mxu0
    %v1662 = vadd.f32 0.0, %v1661
    %1663 = vmatmul.bf16.gmra.mxu0 %v988
    %v1664 = vpop.f32.mrf.mxu0
    %v1665 = vadd.f32 0.0, %v1664
    %v1666 = vpop.f32.mrf.mxu0
    %v1667 = vadd.f32 0.0, %v1666
    %1668 = vmatmul.bf16.gmra.mxu0 %v994
    %v1669 = vpop.f32.mrf.mxu0
    %v1670 = vadd.f32 0.0, %v1669
    %v1671 = vpop.f32.mrf.mxu0
    %v1672 = vadd.f32 0.0, %v1671
    %1673 = vmatmul.bf16.gmra.mxu0 %v1000
    %v1674 = vpop.f32.mrf.mxu0
    %v1675 = vadd.f32 0.0, %v1674
    %v1676 = vpop.f32.mrf.mxu0
    %v1677 = vadd.f32 0.0, %v1676
    %1678 = vmatmul.bf16.gmra.mxu0 %v1006
    %v1679 = vpop.f32.mrf.mxu0
    %v1680 = vadd.f32 0.0, %v1679
    %v1681 = vpop.f32.mrf.mxu0
    %v1682 = vadd.f32 0.0, %v1681
    %1683 = vmatmul.bf16.gmra.mxu0 %v1012
    %v1684 = vpop.f32.mrf.mxu0
    %v1685 = vadd.f32 0.0, %v1684
    %v1686 = vpop.f32.mrf.mxu0
    %v1687 = vadd.f32 0.0, %v1686
    %1688 = vmatmul.bf16.gmra.mxu0 %v1018
    %v1689 = vpop.f32.mrf.mxu0
    %v1690 = vadd.f32 0.0, %v1689
    %v1691 = vpop.f32.mrf.mxu0
    %v1692 = vadd.f32 0.0, %v1691
    %1693 = vmatmul.bf16.gmra.mxu0 %v1024
    %v1694 = vpop.f32.mrf.mxu0
    %v1695 = vadd.f32 0.0, %v1694
    %v1696 = vpop.f32.mrf.mxu0
    %v1697 = vadd.f32 0.0, %v1696
    %1698 = vmatmul.bf16.gmra.mxu0 %v1030
    %v1699 = vpop.f32.mrf.mxu0
    %v1700 = vadd.f32 0.0, %v1699
    %v1701 = vpop.f32.mrf.mxu0
    %v1702 = vadd.f32 0.0, %v1701
    %1703 = vmatmul.bf16.gmra.mxu0 %v1036
    %v1704 = vpop.f32.mrf.mxu0
    %v1705 = vadd.f32 0.0, %v1704
    %v1706 = vpop.f32.mrf.mxu0
    %v1707 = vadd.f32 0.0, %v1706
    %1708 = vmatmul.bf16.gmra.mxu0 %v1042
    %v1709 = vpop.f32.mrf.mxu0
    %v1710 = vadd.f32 0.0, %v1709
    %v1711 = vpop.f32.mrf.mxu0
    %v1712 = vadd.f32 0.0, %v1711
    %1713 = vmatmul.bf16.gmra.mxu0 %v1048
    %v1714 = vpop.f32.mrf.mxu0
    %v1715 = vadd.f32 0.0, %v1714
    %v1716 = vpop.f32.mrf.mxu0
    %v1717 = vadd.f32 0.0, %v1716
    %1718 = vmatmul.bf16.gmra.mxu0 %v1054
    %v1719 = vpop.f32.mrf.mxu0
    %v1720 = vadd.f32 0.0, %v1719
    %v1721 = vpop.f32.mrf.mxu0
    %v1722 = vadd.f32 0.0, %v1721
    %1723 = vmatmul.bf16.gmra.mxu0 %v1060
    %v1724 = vpop.f32.mrf.mxu0
    %v1725 = vadd.f32 0.0, %v1724
    %v1726 = vpop.f32.mrf.mxu0
    %v1727 = vadd.f32 0.0, %v1726
    %1728 = vmatmul.bf16.gmra.mxu0 %v1066
    %v1729 = vpop.f32.mrf.mxu0
    %v1730 = vadd.f32 0.0, %v1729
    %v1731 = vpop.f32.mrf.mxu0
    %v1732 = vadd.f32 0.0, %v1731
    %1733 = vmatmul.bf16.gmra.mxu0 %v1072
    %v1734 = vpop.f32.mrf.mxu0
    %v1735 = vadd.f32 0.0, %v1734
    %v1736 = vpop.f32.mrf.mxu0
    %v1737 = vadd.f32 0.0, %v1736
    %1738 = vmatmul.bf16.gmra.mxu0 %v1078
    %v1739 = vpop.f32.mrf.mxu0
    %v1740 = vadd.f32 0.0, %v1739
    %v1741 = vpop.f32.mrf.mxu0
    %v1742 = vadd.f32 0.0, %v1741
    %1743 = vmatmul.bf16.gmra.mxu0 %v1084
    %v1744 = vpop.f32.mrf.mxu0
    %v1745 = vadd.f32 0.0, %v1744
    %v1746 = vpop.f32.mrf.mxu0
    %v1747 = vadd.f32 0.0, %v1746
    %1748 = vmatmul.bf16.gmra.mxu0 %v1090
    %v1749 = vpop.f32.mrf.mxu0
    %v1750 = vadd.f32 0.0, %v1749
    %v1751 = vpop.f32.mrf.mxu0
    %v1752 = vadd.f32 0.0, %v1751
    %1753 = vmatmul.bf16.gmra.mxu0 %v1096
    %v1754 = vpop.f32.mrf.mxu0
    %v1755 = vadd.f32 0.0, %v1754
    %v1756 = vpop.f32.mrf.mxu0
    %v1757 = vadd.f32 0.0, %v1756
    %1758 = vmatmul.bf16.gmra.mxu0 %v1102
    %v1759 = vpop.f32.mrf.mxu0
    %v1760 = vadd.f32 0.0, %v1759
    %v1761 = vpop.f32.mrf.mxu0
    %v1762 = vadd.f32 0.0, %v1761
    %1763 = vmatmul.bf16.gmra.mxu0 %v1108
    %v1764 = vpop.f32.mrf.mxu0
    %v1765 = vadd.f32 0.0, %v1764
    %v1766 = vpop.f32.mrf.mxu0
    %v1767 = vadd.f32 0.0, %v1766
    %1768 = vmatmul.bf16.gmra.mxu0 %v1114
    %v1769 = vpop.f32.mrf.mxu0
    %v1770 = vadd.f32 0.0, %v1769
    %v1771 = vpop.f32.mrf.mxu0
    %v1772 = vadd.f32 0.0, %v1771
    %1773 = vmatmul.bf16.gmra.mxu0 %v1120
    %v1774 = vpop.f32.mrf.mxu0
    %v1775 = vadd.f32 0.0, %v1774
    %v1776 = vpop.f32.mrf.mxu0
    %v1777 = vadd.f32 0.0, %v1776
    %1778 = vmatmul.bf16.gmra.mxu0 %v1126
    %v1779 = vpop.f32.mrf.mxu0
    %v1780 = vadd.f32 0.0, %v1779
    %v1781 = vpop.f32.mrf.mxu0
    %v1782 = vadd.f32 0.0, %v1781
    %1783 = vmatmul.bf16.gmra.mxu0 %v1132
    %v1784 = vpop.f32.mrf.mxu0
    %v1785 = vadd.f32 0.0, %v1784
    %v1786 = vpop.f32.mrf.mxu0
    %v1787 = vadd.f32 0.0, %v1786
    %1788 = vmatmul.bf16.gmra.mxu0 %v1138
    %v1789 = vpop.f32.mrf.mxu0
    %v1790 = vadd.f32 0.0, %v1789
    %v1791 = vpop.f32.mrf.mxu0
    %v1792 = vadd.f32 0.0, %v1791
    %1793 = vmatmul.bf16.gmra.mxu0 %v1144
    %v1794 = vpop.f32.mrf.mxu0
    %v1795 = vadd.f32 0.0, %v1794
    %v1796 = vpop.f32.mrf.mxu0
    %v1797 = vadd.f32 0.0, %v1796
    %1798 = vdwg.mxu0
    %1799 = vmatpush.bf16.msra.mxu0 %v1549
    %1800 = vmatpush.bf16.msra.mxu0 %v1548
    %1801 = vmatpush.bf16.msra.mxu0 %v1547
    %1802 = vmatpush.bf16.msra.mxu0 %v1546
    %1803 = vmatpush.bf16.msra.mxu0 %v1545
    %1804 = vmatpush.bf16.msra.mxu0 %v1544
    %1805 = vmatpush.bf16.msra.mxu0 %v1543
    %1806 = vmatpush.bf16.msra.mxu0 %v1542
    %1807 = vmatmul.bf16.gmra.mxu0 %v959
    %v1808 = vpop.f32.mrf.mxu0
    %v1809 = vadd.f32 %v1640, %v1808
    %v1810 = vpop.f32.mrf.mxu0
    %v1811 = vadd.f32 %v1642, %v1810
    %1812 = vmatmul.bf16.gmra.mxu0 %v965
    %v1813 = vpop.f32.mrf.mxu0
    %v1814 = vadd.f32 %v1645, %v1813
    %v1815 = vpop.f32.mrf.mxu0
    %v1816 = vadd.f32 %v1647, %v1815
    %1817 = vmatmul.bf16.gmra.mxu0 %v971
    %v1818 = vpop.f32.mrf.mxu0
    %v1819 = vadd.f32 %v1650, %v1818
    %v1820 = vpop.f32.mrf.mxu0
    %v1821 = vadd.f32 %v1652, %v1820
    %1822 = vmatmul.bf16.gmra.mxu0 %v977
    %v1823 = vpop.f32.mrf.mxu0
    %v1824 = vadd.f32 %v1655, %v1823
    %v1825 = vpop.f32.mrf.mxu0
    %v1826 = vadd.f32 %v1657, %v1825
    %1827 = vmatmul.bf16.gmra.mxu0 %v983
    %v1828 = vpop.f32.mrf.mxu0
    %v1829 = vadd.f32 %v1660, %v1828
    %v1830 = vpop.f32.mrf.mxu0
    %v1831 = vadd.f32 %v1662, %v1830
    %1832 = vmatmul.bf16.gmra.mxu0 %v989
    %v1833 = vpop.f32.mrf.mxu0
    %v1834 = vadd.f32 %v1665, %v1833
    %v1835 = vpop.f32.mrf.mxu0
    %v1836 = vadd.f32 %v1667, %v1835
    %1837 = vmatmul.bf16.gmra.mxu0 %v995
    %v1838 = vpop.f32.mrf.mxu0
    %v1839 = vadd.f32 %v1670, %v1838
    %v1840 = vpop.f32.mrf.mxu0
    %v1841 = vadd.f32 %v1672, %v1840
    %1842 = vmatmul.bf16.gmra.mxu0 %v1001
    %v1843 = vpop.f32.mrf.mxu0
    %v1844 = vadd.f32 %v1675, %v1843
    %v1845 = vpop.f32.mrf.mxu0
    %v1846 = vadd.f32 %v1677, %v1845
    %1847 = vmatmul.bf16.gmra.mxu0 %v1007
    %v1848 = vpop.f32.mrf.mxu0
    %v1849 = vadd.f32 %v1680, %v1848
    %v1850 = vpop.f32.mrf.mxu0
    %v1851 = vadd.f32 %v1682, %v1850
    %1852 = vmatmul.bf16.gmra.mxu0 %v1013
    %v1853 = vpop.f32.mrf.mxu0
    %v1854 = vadd.f32 %v1685, %v1853
    %v1855 = vpop.f32.mrf.mxu0
    %v1856 = vadd.f32 %v1687, %v1855
    %1857 = vmatmul.bf16.gmra.mxu0 %v1019
    %v1858 = vpop.f32.mrf.mxu0
    %v1859 = vadd.f32 %v1690, %v1858
    %v1860 = vpop.f32.mrf.mxu0
    %v1861 = vadd.f32 %v1692, %v1860
    %1862 = vmatmul.bf16.gmra.mxu0 %v1025
    %v1863 = vpop.f32.mrf.mxu0
    %v1864 = vadd.f32 %v1695, %v1863
    %v1865 = vpop.f32.mrf.mxu0
    %v1866 = vadd.f32 %v1697, %v1865
    %1867 = vmatmul.bf16.gmra.mxu0 %v1031
    %v1868 = vpop.f32.mrf.mxu0
    %v1869 = vadd.f32 %v1700, %v1868
    %v1870 = vpop.f32.mrf.mxu0
    %v1871 = vadd.f32 %v1702, %v1870
    %1872 = vmatmul.bf16.gmra.mxu0 %v1037
    %v1873 = vpop.f32.mrf.mxu0
    %v1874 = vadd.f32 %v1705, %v1873
    %v1875 = vpop.f32.mrf.mxu0
    %v1876 = vadd.f32 %v1707, %v1875
    %1877 = vmatmul.bf16.gmra.mxu0 %v1043
    %v1878 = vpop.f32.mrf.mxu0
    %v1879 = vadd.f32 %v1710, %v1878
    %v1880 = vpop.f32.mrf.mxu0
    %v1881 = vadd.f32 %v1712, %v1880
    %1882 = vmatmul.bf16.gmra.mxu0 %v1049
    %v1883 = vpop.f32.mrf.mxu0
    %v1884 = vadd.f32 %v1715, %v1883
    %v1885 = vpop.f32.mrf.mxu0
    %v1886 = vadd.f32 %v1717, %v1885
    %1887 = vmatmul.bf16.gmra.mxu0 %v1055
    %v1888 = vpop.f32.mrf.mxu0
    %v1889 = vadd.f32 %v1720, %v1888
    %v1890 = vpop.f32.mrf.mxu0
    %v1891 = vadd.f32 %v1722, %v1890
    %1892 = vmatmul.bf16.gmra.mxu0 %v1061
    %v1893 = vpop.f32.mrf.mxu0
    %v1894 = vadd.f32 %v1725, %v1893
    %v1895 = vpop.f32.mrf.mxu0
    %v1896 = vadd.f32 %v1727, %v1895
    %1897 = vmatmul.bf16.gmra.mxu0 %v1067
    %v1898 = vpop.f32.mrf.mxu0
    %v1899 = vadd.f32 %v1730, %v1898
    %v1900 = vpop.f32.mrf.mxu0
    %v1901 = vadd.f32 %v1732, %v1900
    %1902 = vmatmul.bf16.gmra.mxu0 %v1073
    %v1903 = vpop.f32.mrf.mxu0
    %v1904 = vadd.f32 %v1735, %v1903
    %v1905 = vpop.f32.mrf.mxu0
    %v1906 = vadd.f32 %v1737, %v1905
    %1907 = vmatmul.bf16.gmra.mxu0 %v1079
    %v1908 = vpop.f32.mrf.mxu0
    %v1909 = vadd.f32 %v1740, %v1908
    %v1910 = vpop.f32.mrf.mxu0
    %v1911 = vadd.f32 %v1742, %v1910
    %1912 = vmatmul.bf16.gmra.mxu0 %v1085
    %v1913 = vpop.f32.mrf.mxu0
    %v1914 = vadd.f32 %v1745, %v1913
    %v1915 = vpop.f32.mrf.mxu0
    %v1916 = vadd.f32 %v1747, %v1915
    %1917 = vmatmul.bf16.gmra.mxu0 %v1091
    %v1918 = vpop.f32.mrf.mxu0
    %v1919 = vadd.f32 %v1750, %v1918
    %v1920 = vpop.f32.mrf.mxu0
    %v1921 = vadd.f32 %v1752, %v1920
    %1922 = vmatmul.bf16.gmra.mxu0 %v1097
    %v1923 = vpop.f32.mrf.mxu0
    %v1924 = vadd.f32 %v1755, %v1923
    %v1925 = vpop.f32.mrf.mxu0
    %v1926 = vadd.f32 %v1757, %v1925
    %1927 = vmatmul.bf16.gmra.mxu0 %v1103
    %v1928 = vpop.f32.mrf.mxu0
    %v1929 = vadd.f32 %v1760, %v1928
    %v1930 = vpop.f32.mrf.mxu0
    %v1931 = vadd.f32 %v1762, %v1930
    %1932 = vmatmul.bf16.gmra.mxu0 %v1109
    %v1933 = vpop.f32.mrf.mxu0
    %v1934 = vadd.f32 %v1765, %v1933
    %v1935 = vpop.f32.mrf.mxu0
    %v1936 = vadd.f32 %v1767, %v1935
    %1937 = vmatmul.bf16.gmra.mxu0 %v1115
    %v1938 = vpop.f32.mrf.mxu0
    %v1939 = vadd.f32 %v1770, %v1938
    %v1940 = vpop.f32.mrf.mxu0
    %v1941 = vadd.f32 %v1772, %v1940
    %1942 = vmatmul.bf16.gmra.mxu0 %v1121
    %v1943 = vpop.f32.mrf.mxu0
    %v1944 = vadd.f32 %v1775, %v1943
    %v1945 = vpop.f32.mrf.mxu0
    %v1946 = vadd.f32 %v1777, %v1945
    %1947 = vmatmul.bf16.gmra.mxu0 %v1127
    %v1948 = vpop.f32.mrf.mxu0
    %v1949 = vadd.f32 %v1780, %v1948
    %v1950 = vpop.f32.mrf.mxu0
    %v1951 = vadd.f32 %v1782, %v1950
    %1952 = vmatmul.bf16.gmra.mxu0 %v1133
    %v1953 = vpop.f32.mrf.mxu0
    %v1954 = vadd.f32 %v1785, %v1953
    %v1955 = vpop.f32.mrf.mxu0
    %v1956 = vadd.f32 %v1787, %v1955
    %1957 = vmatmul.bf16.gmra.mxu0 %v1139
    %v1958 = vpop.f32.mrf.mxu0
    %v1959 = vadd.f32 %v1790, %v1958
    %v1960 = vpop.f32.mrf.mxu0
    %v1961 = vadd.f32 %v1792, %v1960
    %1962 = vmatmul.bf16.gmra.mxu0 %v1145
    %v1963 = vpop.f32.mrf.mxu0
    %v1964 = vadd.f32 %v1795, %v1963
    %v1965 = vpop.f32.mrf.mxu0
    %v1966 = vadd.f32 %v1797, %v1965
    %1967 = vdwg.mxu0
    %1968 = vmatpush.bf16.msra.mxu0 %v1557
    %1969 = vmatpush.bf16.msra.mxu0 %v1556
    %1970 = vmatpush.bf16.msra.mxu0 %v1555
    %1971 = vmatpush.bf16.msra.mxu0 %v1554
    %1972 = vmatpush.bf16.msra.mxu0 %v1553
    %1973 = vmatpush.bf16.msra.mxu0 %v1552
    %1974 = vmatpush.bf16.msra.mxu0 %v1551
    %1975 = vmatpush.bf16.msra.mxu0 %v1550
    %1976 = vmatmul.bf16.gmra.mxu0 %v960
    %v1977 = vpop.f32.mrf.mxu0
    %v1978 = vadd.f32 %v1809, %v1977
    %v1979 = vpop.f32.mrf.mxu0
    %v1980 = vadd.f32 %v1811, %v1979
    %1981 = vmatmul.bf16.gmra.mxu0 %v966
    %v1982 = vpop.f32.mrf.mxu0
    %v1983 = vadd.f32 %v1814, %v1982
    %v1984 = vpop.f32.mrf.mxu0
    %v1985 = vadd.f32 %v1816, %v1984
    %1986 = vmatmul.bf16.gmra.mxu0 %v972
    %v1987 = vpop.f32.mrf.mxu0
    %v1988 = vadd.f32 %v1819, %v1987
    %v1989 = vpop.f32.mrf.mxu0
    %v1990 = vadd.f32 %v1821, %v1989
    %1991 = vmatmul.bf16.gmra.mxu0 %v978
    %v1992 = vpop.f32.mrf.mxu0
    %v1993 = vadd.f32 %v1824, %v1992
    %v1994 = vpop.f32.mrf.mxu0
    %v1995 = vadd.f32 %v1826, %v1994
    %1996 = vmatmul.bf16.gmra.mxu0 %v984
    %v1997 = vpop.f32.mrf.mxu0
    %v1998 = vadd.f32 %v1829, %v1997
    %v1999 = vpop.f32.mrf.mxu0
    %v2000 = vadd.f32 %v1831, %v1999
    %2001 = vmatmul.bf16.gmra.mxu0 %v990
    %v2002 = vpop.f32.mrf.mxu0
    %v2003 = vadd.f32 %v1834, %v2002
    %v2004 = vpop.f32.mrf.mxu0
    %v2005 = vadd.f32 %v1836, %v2004
    %2006 = vmatmul.bf16.gmra.mxu0 %v996
    %v2007 = vpop.f32.mrf.mxu0
    %v2008 = vadd.f32 %v1839, %v2007
    %v2009 = vpop.f32.mrf.mxu0
    %v2010 = vadd.f32 %v1841, %v2009
    %2011 = vmatmul.bf16.gmra.mxu0 %v1002
    %v2012 = vpop.f32.mrf.mxu0
    %v2013 = vadd.f32 %v1844, %v2012
    %v2014 = vpop.f32.mrf.mxu0
    %v2015 = vadd.f32 %v1846, %v2014
    %2016 = vmatmul.bf16.gmra.mxu0 %v1008
    %v2017 = vpop.f32.mrf.mxu0
    %v2018 = vadd.f32 %v1849, %v2017
    %v2019 = vpop.f32.mrf.mxu0
    %v2020 = vadd.f32 %v1851, %v2019
    %2021 = vmatmul.bf16.gmra.mxu0 %v1014
    %v2022 = vpop.f32.mrf.mxu0
    %v2023 = vadd.f32 %v1854, %v2022
    %v2024 = vpop.f32.mrf.mxu0
    %v2025 = vadd.f32 %v1856, %v2024
    %2026 = vmatmul.bf16.gmra.mxu0 %v1020
    %v2027 = vpop.f32.mrf.mxu0
    %v2028 = vadd.f32 %v1859, %v2027
    %v2029 = vpop.f32.mrf.mxu0
    %v2030 = vadd.f32 %v1861, %v2029
    %2031 = vmatmul.bf16.gmra.mxu0 %v1026
    %v2032 = vpop.f32.mrf.mxu0
    %v2033 = vadd.f32 %v1864, %v2032
    %v2034 = vpop.f32.mrf.mxu0
    %v2035 = vadd.f32 %v1866, %v2034
    %2036 = vmatmul.bf16.gmra.mxu0 %v1032
    %v2037 = vpop.f32.mrf.mxu0
    %v2038 = vadd.f32 %v1869, %v2037
    %v2039 = vpop.f32.mrf.mxu0
    %v2040 = vadd.f32 %v1871, %v2039
    %2041 = vmatmul.bf16.gmra.mxu0 %v1038
    %v2042 = vpop.f32.mrf.mxu0
    %v2043 = vadd.f32 %v1874, %v2042
    %v2044 = vpop.f32.mrf.mxu0
    %v2045 = vadd.f32 %v1876, %v2044
    %2046 = vmatmul.bf16.gmra.mxu0 %v1044
    %v2047 = vpop.f32.mrf.mxu0
    %v2048 = vadd.f32 %v1879, %v2047
    %v2049 = vpop.f32.mrf.mxu0
    %v2050 = vadd.f32 %v1881, %v2049
    %2051 = vmatmul.bf16.gmra.mxu0 %v1050
    %v2052 = vpop.f32.mrf.mxu0
    %v2053 = vadd.f32 %v1884, %v2052
    %v2054 = vpop.f32.mrf.mxu0
    %v2055 = vadd.f32 %v1886, %v2054
    %2056 = vmatmul.bf16.gmra.mxu0 %v1056
    %v2057 = vpop.f32.mrf.mxu0
    %v2058 = vadd.f32 %v1889, %v2057
    %v2059 = vpop.f32.mrf.mxu0
    %v2060 = vadd.f32 %v1891, %v2059
    %2061 = vmatmul.bf16.gmra.mxu0 %v1062
    %v2062 = vpop.f32.mrf.mxu0
    %v2063 = vadd.f32 %v1894, %v2062
    %v2064 = vpop.f32.mrf.mxu0
    %v2065 = vadd.f32 %v1896, %v2064
    %2066 = vmatmul.bf16.gmra.mxu0 %v1068
    %v2067 = vpop.f32.mrf.mxu0
    %v2068 = vadd.f32 %v1899, %v2067
    %v2069 = vpop.f32.mrf.mxu0
    %v2070 = vadd.f32 %v1901, %v2069
    %2071 = vmatmul.bf16.gmra.mxu0 %v1074
    %v2072 = vpop.f32.mrf.mxu0
    %v2073 = vadd.f32 %v1904, %v2072
    %v2074 = vpop.f32.mrf.mxu0
    %v2075 = vadd.f32 %v1906, %v2074
    %2076 = vmatmul.bf16.gmra.mxu0 %v1080
    %v2077 = vpop.f32.mrf.mxu0
    %v2078 = vadd.f32 %v1909, %v2077
    %v2079 = vpop.f32.mrf.mxu0
    %v2080 = vadd.f32 %v1911, %v2079
    %2081 = vmatmul.bf16.gmra.mxu0 %v1086
    %v2082 = vpop.f32.mrf.mxu0
    %v2083 = vadd.f32 %v1914, %v2082
    %v2084 = vpop.f32.mrf.mxu0
    %v2085 = vadd.f32 %v1916, %v2084
    %2086 = vmatmul.bf16.gmra.mxu0 %v1092
    %v2087 = vpop.f32.mrf.mxu0
    %v2088 = vadd.f32 %v1919, %v2087
    %v2089 = vpop.f32.mrf.mxu0
    %v2090 = vadd.f32 %v1921, %v2089
    %2091 = vmatmul.bf16.gmra.mxu0 %v1098
    %v2092 = vpop.f32.mrf.mxu0
    %v2093 = vadd.f32 %v1924, %v2092
    %v2094 = vpop.f32.mrf.mxu0
    %v2095 = vadd.f32 %v1926, %v2094
    %2096 = vmatmul.bf16.gmra.mxu0 %v1104
    %v2097 = vpop.f32.mrf.mxu0
    %v2098 = vadd.f32 %v1929, %v2097
    %v2099 = vpop.f32.mrf.mxu0
    %v2100 = vadd.f32 %v1931, %v2099
    %2101 = vmatmul.bf16.gmra.mxu0 %v1110
    %v2102 = vpop.f32.mrf.mxu0
    %v2103 = vadd.f32 %v1934, %v2102
    %v2104 = vpop.f32.mrf.mxu0
    %v2105 = vadd.f32 %v1936, %v2104
    %2106 = vmatmul.bf16.gmra.mxu0 %v1116
    %v2107 = vpop.f32.mrf.mxu0
    %v2108 = vadd.f32 %v1939, %v2107
    %v2109 = vpop.f32.mrf.mxu0
    %v2110 = vadd.f32 %v1941, %v2109
    %2111 = vmatmul.bf16.gmra.mxu0 %v1122
    %v2112 = vpop.f32.mrf.mxu0
    %v2113 = vadd.f32 %v1944, %v2112
    %v2114 = vpop.f32.mrf.mxu0
    %v2115 = vadd.f32 %v1946, %v2114
    %2116 = vmatmul.bf16.gmra.mxu0 %v1128
    %v2117 = vpop.f32.mrf.mxu0
    %v2118 = vadd.f32 %v1949, %v2117
    %v2119 = vpop.f32.mrf.mxu0
    %v2120 = vadd.f32 %v1951, %v2119
    %2121 = vmatmul.bf16.gmra.mxu0 %v1134
    %v2122 = vpop.f32.mrf.mxu0
    %v2123 = vadd.f32 %v1954, %v2122
    %v2124 = vpop.f32.mrf.mxu0
    %v2125 = vadd.f32 %v1956, %v2124
    %2126 = vmatmul.bf16.gmra.mxu0 %v1140
    %v2127 = vpop.f32.mrf.mxu0
    %v2128 = vadd.f32 %v1959, %v2127
    %v2129 = vpop.f32.mrf.mxu0
    %v2130 = vadd.f32 %v1961, %v2129
    %2131 = vmatmul.bf16.gmra.mxu0 %v1146
    %v2132 = vpop.f32.mrf.mxu0
    %v2133 = vadd.f32 %v1964, %v2132
    %v2134 = vpop.f32.mrf.mxu0
    %v2135 = vadd.f32 %v1966, %v2134
    %2136 = vdwg.mxu0
    %2137 = vmatpush.bf16.msra.mxu0 %v1565
    %2138 = vmatpush.bf16.msra.mxu0 %v1564
    %2139 = vmatpush.bf16.msra.mxu0 %v1563
    %2140 = vmatpush.bf16.msra.mxu0 %v1562
    %2141 = vmatpush.bf16.msra.mxu0 %v1561
    %2142 = vmatpush.bf16.msra.mxu0 %v1560
    %2143 = vmatpush.bf16.msra.mxu0 %v1559
    %2144 = vmatpush.bf16.msra.mxu0 %v1558
    %2145 = vmatmul.bf16.gmra.mxu0 %v961
    %v2146 = vpop.f32.mrf.mxu0
    %v2147 = vadd.f32 %v1978, %v2146
    %v2148 = vpop.f32.mrf.mxu0
    %v2149 = vadd.f32 %v1980, %v2148
    %2150 = vmatmul.bf16.gmra.mxu0 %v967
    %v2151 = vpop.f32.mrf.mxu0
    %v2152 = vadd.f32 %v1983, %v2151
    %v2153 = vpop.f32.mrf.mxu0
    %v2154 = vadd.f32 %v1985, %v2153
    %2155 = vmatmul.bf16.gmra.mxu0 %v973
    %v2156 = vpop.f32.mrf.mxu0
    %v2157 = vadd.f32 %v1988, %v2156
    %v2158 = vpop.f32.mrf.mxu0
    %v2159 = vadd.f32 %v1990, %v2158
    %2160 = vmatmul.bf16.gmra.mxu0 %v979
    %v2161 = vpop.f32.mrf.mxu0
    %v2162 = vadd.f32 %v1993, %v2161
    %v2163 = vpop.f32.mrf.mxu0
    %v2164 = vadd.f32 %v1995, %v2163
    %2165 = vmatmul.bf16.gmra.mxu0 %v985
    %v2166 = vpop.f32.mrf.mxu0
    %v2167 = vadd.f32 %v1998, %v2166
    %v2168 = vpop.f32.mrf.mxu0
    %v2169 = vadd.f32 %v2000, %v2168
    %2170 = vmatmul.bf16.gmra.mxu0 %v991
    %v2171 = vpop.f32.mrf.mxu0
    %v2172 = vadd.f32 %v2003, %v2171
    %v2173 = vpop.f32.mrf.mxu0
    %v2174 = vadd.f32 %v2005, %v2173
    %2175 = vmatmul.bf16.gmra.mxu0 %v997
    %v2176 = vpop.f32.mrf.mxu0
    %v2177 = vadd.f32 %v2008, %v2176
    %v2178 = vpop.f32.mrf.mxu0
    %v2179 = vadd.f32 %v2010, %v2178
    %2180 = vmatmul.bf16.gmra.mxu0 %v1003
    %v2181 = vpop.f32.mrf.mxu0
    %v2182 = vadd.f32 %v2013, %v2181
    %v2183 = vpop.f32.mrf.mxu0
    %v2184 = vadd.f32 %v2015, %v2183
    %2185 = vmatmul.bf16.gmra.mxu0 %v1009
    %v2186 = vpop.f32.mrf.mxu0
    %v2187 = vadd.f32 %v2018, %v2186
    %v2188 = vpop.f32.mrf.mxu0
    %v2189 = vadd.f32 %v2020, %v2188
    %2190 = vmatmul.bf16.gmra.mxu0 %v1015
    %v2191 = vpop.f32.mrf.mxu0
    %v2192 = vadd.f32 %v2023, %v2191
    %v2193 = vpop.f32.mrf.mxu0
    %v2194 = vadd.f32 %v2025, %v2193
    %2195 = vmatmul.bf16.gmra.mxu0 %v1021
    %v2196 = vpop.f32.mrf.mxu0
    %v2197 = vadd.f32 %v2028, %v2196
    %v2198 = vpop.f32.mrf.mxu0
    %v2199 = vadd.f32 %v2030, %v2198
    %2200 = vmatmul.bf16.gmra.mxu0 %v1027
    %v2201 = vpop.f32.mrf.mxu0
    %v2202 = vadd.f32 %v2033, %v2201
    %v2203 = vpop.f32.mrf.mxu0
    %v2204 = vadd.f32 %v2035, %v2203
    %2205 = vmatmul.bf16.gmra.mxu0 %v1033
    %v2206 = vpop.f32.mrf.mxu0
    %v2207 = vadd.f32 %v2038, %v2206
    %v2208 = vpop.f32.mrf.mxu0
    %v2209 = vadd.f32 %v2040, %v2208
    %2210 = vmatmul.bf16.gmra.mxu0 %v1039
    %v2211 = vpop.f32.mrf.mxu0
    %v2212 = vadd.f32 %v2043, %v2211
    %v2213 = vpop.f32.mrf.mxu0
    %v2214 = vadd.f32 %v2045, %v2213
    %2215 = vmatmul.bf16.gmra.mxu0 %v1045
    %v2216 = vpop.f32.mrf.mxu0
    %v2217 = vadd.f32 %v2048, %v2216
    %v2218 = vpop.f32.mrf.mxu0
    %v2219 = vadd.f32 %v2050, %v2218
    %2220 = vmatmul.bf16.gmra.mxu0 %v1051
    %v2221 = vpop.f32.mrf.mxu0
    %v2222 = vadd.f32 %v2053, %v2221
    %v2223 = vpop.f32.mrf.mxu0
    %v2224 = vadd.f32 %v2055, %v2223
    %2225 = vmatmul.bf16.gmra.mxu0 %v1057
    %v2226 = vpop.f32.mrf.mxu0
    %v2227 = vadd.f32 %v2058, %v2226
    %v2228 = vpop.f32.mrf.mxu0
    %v2229 = vadd.f32 %v2060, %v2228
    %2230 = vmatmul.bf16.gmra.mxu0 %v1063
    %v2231 = vpop.f32.mrf.mxu0
    %v2232 = vadd.f32 %v2063, %v2231
    %v2233 = vpop.f32.mrf.mxu0
    %v2234 = vadd.f32 %v2065, %v2233
    %2235 = vmatmul.bf16.gmra.mxu0 %v1069
    %v2236 = vpop.f32.mrf.mxu0
    %v2237 = vadd.f32 %v2068, %v2236
    %v2238 = vpop.f32.mrf.mxu0
    %v2239 = vadd.f32 %v2070, %v2238
    %2240 = vmatmul.bf16.gmra.mxu0 %v1075
    %v2241 = vpop.f32.mrf.mxu0
    %v2242 = vadd.f32 %v2073, %v2241
    %v2243 = vpop.f32.mrf.mxu0
    %v2244 = vadd.f32 %v2075, %v2243
    %2245 = vmatmul.bf16.gmra.mxu0 %v1081
    %v2246 = vpop.f32.mrf.mxu0
    %v2247 = vadd.f32 %v2078, %v2246
    %v2248 = vpop.f32.mrf.mxu0
    %v2249 = vadd.f32 %v2080, %v2248
    %2250 = vmatmul.bf16.gmra.mxu0 %v1087
    %v2251 = vpop.f32.mrf.mxu0
    %v2252 = vadd.f32 %v2083, %v2251
    %v2253 = vpop.f32.mrf.mxu0
    %v2254 = vadd.f32 %v2085, %v2253
    %2255 = vmatmul.bf16.gmra.mxu0 %v1093
    %v2256 = vpop.f32.mrf.mxu0
    %v2257 = vadd.f32 %v2088, %v2256
    %v2258 = vpop.f32.mrf.mxu0
    %v2259 = vadd.f32 %v2090, %v2258
    %2260 = vmatmul.bf16.gmra.mxu0 %v1099
    %v2261 = vpop.f32.mrf.mxu0
    %v2262 = vadd.f32 %v2093, %v2261
    %v2263 = vpop.f32.mrf.mxu0
    %v2264 = vadd.f32 %v2095, %v2263
    %2265 = vmatmul.bf16.gmra.mxu0 %v1105
    %v2266 = vpop.f32.mrf.mxu0
    %v2267 = vadd.f32 %v2098, %v2266
    %v2268 = vpop.f32.mrf.mxu0
    %v2269 = vadd.f32 %v2100, %v2268
    %2270 = vmatmul.bf16.gmra.mxu0 %v1111
    %v2271 = vpop.f32.mrf.mxu0
    %v2272 = vadd.f32 %v2103, %v2271
    %v2273 = vpop.f32.mrf.mxu0
    %v2274 = vadd.f32 %v2105, %v2273
    %2275 = vmatmul.bf16.gmra.mxu0 %v1117
    %v2276 = vpop.f32.mrf.mxu0
    %v2277 = vadd.f32 %v2108, %v2276
    %v2278 = vpop.f32.mrf.mxu0
    %v2279 = vadd.f32 %v2110, %v2278
    %2280 = vmatmul.bf16.gmra.mxu0 %v1123
    %v2281 = vpop.f32.mrf.mxu0
    %v2282 = vadd.f32 %v2113, %v2281
    %v2283 = vpop.f32.mrf.mxu0
    %v2284 = vadd.f32 %v2115, %v2283
    %2285 = vmatmul.bf16.gmra.mxu0 %v1129
    %v2286 = vpop.f32.mrf.mxu0
    %v2287 = vadd.f32 %v2118, %v2286
    %v2288 = vpop.f32.mrf.mxu0
    %v2289 = vadd.f32 %v2120, %v2288
    %2290 = vmatmul.bf16.gmra.mxu0 %v1135
    %v2291 = vpop.f32.mrf.mxu0
    %v2292 = vadd.f32 %v2123, %v2291
    %v2293 = vpop.f32.mrf.mxu0
    %v2294 = vadd.f32 %v2125, %v2293
    %2295 = vmatmul.bf16.gmra.mxu0 %v1141
    %v2296 = vpop.f32.mrf.mxu0
    %v2297 = vadd.f32 %v2128, %v2296
    %v2298 = vpop.f32.mrf.mxu0
    %v2299 = vadd.f32 %v2130, %v2298
    %2300 = vmatmul.bf16.gmra.mxu0 %v1147
    %v2301 = vpop.f32.mrf.mxu0
    %v2302 = vadd.f32 %v2133, %v2301
    %v2303 = vpop.f32.mrf.mxu0
    %v2304 = vadd.f32 %v2135, %v2303
    %2305 = vdwg.mxu0
    %2306 = vmatpush.bf16.msra.mxu0 %v1573
    %2307 = vmatpush.bf16.msra.mxu0 %v1572
    %2308 = vmatpush.bf16.msra.mxu0 %v1571
    %2309 = vmatpush.bf16.msra.mxu0 %v1570
    %2310 = vmatpush.bf16.msra.mxu0 %v1569
    %2311 = vmatpush.bf16.msra.mxu0 %v1568
    %2312 = vmatpush.bf16.msra.mxu0 %v1567
    %2313 = vmatpush.bf16.msra.mxu0 %v1566
    %2314 = vmatmul.bf16.gmra.mxu0 %v962
    %v2315 = vpop.f32.mrf.mxu0
    %v2316 = vadd.f32 %v2147, %v2315
    %v2317 = vpop.f32.mrf.mxu0
    %v2318 = vadd.f32 %v2149, %v2317
    %2319 = vmatmul.bf16.gmra.mxu0 %v968
    %v2320 = vpop.f32.mrf.mxu0
    %v2321 = vadd.f32 %v2152, %v2320
    %v2322 = vpop.f32.mrf.mxu0
    %v2323 = vadd.f32 %v2154, %v2322
    %2324 = vmatmul.bf16.gmra.mxu0 %v974
    %v2325 = vpop.f32.mrf.mxu0
    %v2326 = vadd.f32 %v2157, %v2325
    %v2327 = vpop.f32.mrf.mxu0
    %v2328 = vadd.f32 %v2159, %v2327
    %2329 = vmatmul.bf16.gmra.mxu0 %v980
    %v2330 = vpop.f32.mrf.mxu0
    %v2331 = vadd.f32 %v2162, %v2330
    %v2332 = vpop.f32.mrf.mxu0
    %v2333 = vadd.f32 %v2164, %v2332
    %2334 = vmatmul.bf16.gmra.mxu0 %v986
    %v2335 = vpop.f32.mrf.mxu0
    %v2336 = vadd.f32 %v2167, %v2335
    %v2337 = vpop.f32.mrf.mxu0
    %v2338 = vadd.f32 %v2169, %v2337
    %2339 = vmatmul.bf16.gmra.mxu0 %v992
    %v2340 = vpop.f32.mrf.mxu0
    %v2341 = vadd.f32 %v2172, %v2340
    %v2342 = vpop.f32.mrf.mxu0
    %v2343 = vadd.f32 %v2174, %v2342
    %2344 = vmatmul.bf16.gmra.mxu0 %v998
    %v2345 = vpop.f32.mrf.mxu0
    %v2346 = vadd.f32 %v2177, %v2345
    %v2347 = vpop.f32.mrf.mxu0
    %v2348 = vadd.f32 %v2179, %v2347
    %2349 = vmatmul.bf16.gmra.mxu0 %v1004
    %v2350 = vpop.f32.mrf.mxu0
    %v2351 = vadd.f32 %v2182, %v2350
    %v2352 = vpop.f32.mrf.mxu0
    %v2353 = vadd.f32 %v2184, %v2352
    %2354 = vmatmul.bf16.gmra.mxu0 %v1010
    %v2355 = vpop.f32.mrf.mxu0
    %v2356 = vadd.f32 %v2187, %v2355
    %v2357 = vpop.f32.mrf.mxu0
    %v2358 = vadd.f32 %v2189, %v2357
    %2359 = vmatmul.bf16.gmra.mxu0 %v1016
    %v2360 = vpop.f32.mrf.mxu0
    %v2361 = vadd.f32 %v2192, %v2360
    %v2362 = vpop.f32.mrf.mxu0
    %v2363 = vadd.f32 %v2194, %v2362
    %2364 = vmatmul.bf16.gmra.mxu0 %v1022
    %v2365 = vpop.f32.mrf.mxu0
    %v2366 = vadd.f32 %v2197, %v2365
    %v2367 = vpop.f32.mrf.mxu0
    %v2368 = vadd.f32 %v2199, %v2367
    %2369 = vmatmul.bf16.gmra.mxu0 %v1028
    %v2370 = vpop.f32.mrf.mxu0
    %v2371 = vadd.f32 %v2202, %v2370
    %v2372 = vpop.f32.mrf.mxu0
    %v2373 = vadd.f32 %v2204, %v2372
    %2374 = vmatmul.bf16.gmra.mxu0 %v1034
    %v2375 = vpop.f32.mrf.mxu0
    %v2376 = vadd.f32 %v2207, %v2375
    %v2377 = vpop.f32.mrf.mxu0
    %v2378 = vadd.f32 %v2209, %v2377
    %2379 = vmatmul.bf16.gmra.mxu0 %v1040
    %v2380 = vpop.f32.mrf.mxu0
    %v2381 = vadd.f32 %v2212, %v2380
    %v2382 = vpop.f32.mrf.mxu0
    %v2383 = vadd.f32 %v2214, %v2382
    %2384 = vmatmul.bf16.gmra.mxu0 %v1046
    %v2385 = vpop.f32.mrf.mxu0
    %v2386 = vadd.f32 %v2217, %v2385
    %v2387 = vpop.f32.mrf.mxu0
    %v2388 = vadd.f32 %v2219, %v2387
    %2389 = vmatmul.bf16.gmra.mxu0 %v1052
    %v2390 = vpop.f32.mrf.mxu0
    %v2391 = vadd.f32 %v2222, %v2390
    %v2392 = vpop.f32.mrf.mxu0
    %v2393 = vadd.f32 %v2224, %v2392
    %2394 = vmatmul.bf16.gmra.mxu0 %v1058
    %v2395 = vpop.f32.mrf.mxu0
    %v2396 = vadd.f32 %v2227, %v2395
    %v2397 = vpop.f32.mrf.mxu0
    %v2398 = vadd.f32 %v2229, %v2397
    %2399 = vmatmul.bf16.gmra.mxu0 %v1064
    %v2400 = vpop.f32.mrf.mxu0
    %v2401 = vadd.f32 %v2232, %v2400
    %v2402 = vpop.f32.mrf.mxu0
    %v2403 = vadd.f32 %v2234, %v2402
    %2404 = vmatmul.bf16.gmra.mxu0 %v1070
    %v2405 = vpop.f32.mrf.mxu0
    %v2406 = vadd.f32 %v2237, %v2405
    %v2407 = vpop.f32.mrf.mxu0
    %v2408 = vadd.f32 %v2239, %v2407
    %2409 = vmatmul.bf16.gmra.mxu0 %v1076
    %v2410 = vpop.f32.mrf.mxu0
    %v2411 = vadd.f32 %v2242, %v2410
    %v2412 = vpop.f32.mrf.mxu0
    %v2413 = vadd.f32 %v2244, %v2412
    %2414 = vmatmul.bf16.gmra.mxu0 %v1082
    %v2415 = vpop.f32.mrf.mxu0
    %v2416 = vadd.f32 %v2247, %v2415
    %v2417 = vpop.f32.mrf.mxu0
    %v2418 = vadd.f32 %v2249, %v2417
    %2419 = vmatmul.bf16.gmra.mxu0 %v1088
    %v2420 = vpop.f32.mrf.mxu0
    %v2421 = vadd.f32 %v2252, %v2420
    %v2422 = vpop.f32.mrf.mxu0
    %v2423 = vadd.f32 %v2254, %v2422
    %2424 = vmatmul.bf16.gmra.mxu0 %v1094
    %v2425 = vpop.f32.mrf.mxu0
    %v2426 = vadd.f32 %v2257, %v2425
    %v2427 = vpop.f32.mrf.mxu0
    %v2428 = vadd.f32 %v2259, %v2427
    %2429 = vmatmul.bf16.gmra.mxu0 %v1100
    %v2430 = vpop.f32.mrf.mxu0
    %v2431 = vadd.f32 %v2262, %v2430
    %v2432 = vpop.f32.mrf.mxu0
    %v2433 = vadd.f32 %v2264, %v2432
    %2434 = vmatmul.bf16.gmra.mxu0 %v1106
    %v2435 = vpop.f32.mrf.mxu0
    %v2436 = vadd.f32 %v2267, %v2435
    %v2437 = vpop.f32.mrf.mxu0
    %v2438 = vadd.f32 %v2269, %v2437
    %2439 = vmatmul.bf16.gmra.mxu0 %v1112
    %v2440 = vpop.f32.mrf.mxu0
    %v2441 = vadd.f32 %v2272, %v2440
    %v2442 = vpop.f32.mrf.mxu0
    %v2443 = vadd.f32 %v2274, %v2442
    %2444 = vmatmul.bf16.gmra.mxu0 %v1118
    %v2445 = vpop.f32.mrf.mxu0
    %v2446 = vadd.f32 %v2277, %v2445
    %v2447 = vpop.f32.mrf.mxu0
    %v2448 = vadd.f32 %v2279, %v2447
    %2449 = vmatmul.bf16.gmra.mxu0 %v1124
    %v2450 = vpop.f32.mrf.mxu0
    %v2451 = vadd.f32 %v2282, %v2450
    %v2452 = vpop.f32.mrf.mxu0
    %v2453 = vadd.f32 %v2284, %v2452
    %2454 = vmatmul.bf16.gmra.mxu0 %v1130
    %v2455 = vpop.f32.mrf.mxu0
    %v2456 = vadd.f32 %v2287, %v2455
    %v2457 = vpop.f32.mrf.mxu0
    %v2458 = vadd.f32 %v2289, %v2457
    %2459 = vmatmul.bf16.gmra.mxu0 %v1136
    %v2460 = vpop.f32.mrf.mxu0
    %v2461 = vadd.f32 %v2292, %v2460
    %v2462 = vpop.f32.mrf.mxu0
    %v2463 = vadd.f32 %v2294, %v2462
    %2464 = vmatmul.bf16.gmra.mxu0 %v1142
    %v2465 = vpop.f32.mrf.mxu0
    %v2466 = vadd.f32 %v2297, %v2465
    %v2467 = vpop.f32.mrf.mxu0
    %v2468 = vadd.f32 %v2299, %v2467
    %2469 = vmatmul.bf16.gmra.mxu0 %v1148
    %v2470 = vpop.f32.mrf.mxu0
    %v2471 = vadd.f32 %v2302, %v2470
    %v2472 = vpop.f32.mrf.mxu0
    %v2473 = vadd.f32 %v2304, %v2472
    %2474 = vdwg.mxu0
    %2475 = vmatpush.bf16.msra.mxu0 %v1581
    %2476 = vmatpush.bf16.msra.mxu0 %v1580
    %2477 = vmatpush.bf16.msra.mxu0 %v1579
    %2478 = vmatpush.bf16.msra.mxu0 %v1578
    %2479 = vmatpush.bf16.msra.mxu0 %v1577
    %2480 = vmatpush.bf16.msra.mxu0 %v1576
    %2481 = vmatpush.bf16.msra.mxu0 %v1575
    %2482 = vmatpush.bf16.msra.mxu0 %v1574
    %2483 = vmatmul.bf16.gmra.mxu0 %v963
    %v2484 = vpop.f32.mrf.mxu0
    %v2485 = vadd.f32 %v2316, %v2484
    %v2486 = vpop.f32.mrf.mxu0
    %v2487 = vadd.f32 %v2318, %v2486
    %2488 = vmatmul.bf16.gmra.mxu0 %v969
    %v2489 = vpop.f32.mrf.mxu0
    %v2490 = vadd.f32 %v2321, %v2489
    %v2491 = vpop.f32.mrf.mxu0
    %v2492 = vadd.f32 %v2323, %v2491
    %2493 = vmatmul.bf16.gmra.mxu0 %v975
    %v2494 = vpop.f32.mrf.mxu0
    %v2495 = vadd.f32 %v2326, %v2494
    %v2496 = vpop.f32.mrf.mxu0
    %v2497 = vadd.f32 %v2328, %v2496
    %2498 = vmatmul.bf16.gmra.mxu0 %v981
    %v2499 = vpop.f32.mrf.mxu0
    %v2500 = vadd.f32 %v2331, %v2499
    %v2501 = vpop.f32.mrf.mxu0
    %v2502 = vadd.f32 %v2333, %v2501
    %2503 = vmatmul.bf16.gmra.mxu0 %v987
    %v2504 = vpop.f32.mrf.mxu0
    %v2505 = vadd.f32 %v2336, %v2504
    %v2506 = vpop.f32.mrf.mxu0
    %v2507 = vadd.f32 %v2338, %v2506
    %2508 = vmatmul.bf16.gmra.mxu0 %v993
    %v2509 = vpop.f32.mrf.mxu0
    %v2510 = vadd.f32 %v2341, %v2509
    %v2511 = vpop.f32.mrf.mxu0
    %v2512 = vadd.f32 %v2343, %v2511
    %2513 = vmatmul.bf16.gmra.mxu0 %v999
    %v2514 = vpop.f32.mrf.mxu0
    %v2515 = vadd.f32 %v2346, %v2514
    %v2516 = vpop.f32.mrf.mxu0
    %v2517 = vadd.f32 %v2348, %v2516
    %2518 = vmatmul.bf16.gmra.mxu0 %v1005
    %v2519 = vpop.f32.mrf.mxu0
    %v2520 = vadd.f32 %v2351, %v2519
    %v2521 = vpop.f32.mrf.mxu0
    %v2522 = vadd.f32 %v2353, %v2521
    %2523 = vmatmul.bf16.gmra.mxu0 %v1011
    %v2524 = vpop.f32.mrf.mxu0
    %v2525 = vadd.f32 %v2356, %v2524
    %v2526 = vpop.f32.mrf.mxu0
    %v2527 = vadd.f32 %v2358, %v2526
    %2528 = vmatmul.bf16.gmra.mxu0 %v1017
    %v2529 = vpop.f32.mrf.mxu0
    %v2530 = vadd.f32 %v2361, %v2529
    %v2531 = vpop.f32.mrf.mxu0
    %v2532 = vadd.f32 %v2363, %v2531
    %2533 = vmatmul.bf16.gmra.mxu0 %v1023
    %v2534 = vpop.f32.mrf.mxu0
    %v2535 = vadd.f32 %v2366, %v2534
    %v2536 = vpop.f32.mrf.mxu0
    %v2537 = vadd.f32 %v2368, %v2536
    %2538 = vmatmul.bf16.gmra.mxu0 %v1029
    %v2539 = vpop.f32.mrf.mxu0
    %v2540 = vadd.f32 %v2371, %v2539
    %v2541 = vpop.f32.mrf.mxu0
    %v2542 = vadd.f32 %v2373, %v2541
    %2543 = vmatmul.bf16.gmra.mxu0 %v1035
    %v2544 = vpop.f32.mrf.mxu0
    %v2545 = vadd.f32 %v2376, %v2544
    %v2546 = vpop.f32.mrf.mxu0
    %v2547 = vadd.f32 %v2378, %v2546
    %2548 = vmatmul.bf16.gmra.mxu0 %v1041
    %v2549 = vpop.f32.mrf.mxu0
    %v2550 = vadd.f32 %v2381, %v2549
    %v2551 = vpop.f32.mrf.mxu0
    %v2552 = vadd.f32 %v2383, %v2551
    %2553 = vmatmul.bf16.gmra.mxu0 %v1047
    %v2554 = vpop.f32.mrf.mxu0
    %v2555 = vadd.f32 %v2386, %v2554
    %v2556 = vpop.f32.mrf.mxu0
    %v2557 = vadd.f32 %v2388, %v2556
    %2558 = vmatmul.bf16.gmra.mxu0 %v1053
    %v2559 = vpop.f32.mrf.mxu0
    %v2560 = vadd.f32 %v2391, %v2559
    %v2561 = vpop.f32.mrf.mxu0
    %v2562 = vadd.f32 %v2393, %v2561
    %2563 = vmatmul.bf16.gmra.mxu0 %v1059
    %v2564 = vpop.f32.mrf.mxu0
    %v2565 = vadd.f32 %v2396, %v2564
    %v2566 = vpop.f32.mrf.mxu0
    %v2567 = vadd.f32 %v2398, %v2566
    %2568 = vmatmul.bf16.gmra.mxu0 %v1065
    %v2569 = vpop.f32.mrf.mxu0
    %v2570 = vadd.f32 %v2401, %v2569
    %v2571 = vpop.f32.mrf.mxu0
    %v2572 = vadd.f32 %v2403, %v2571
    %2573 = vmatmul.bf16.gmra.mxu0 %v1071
    %v2574 = vpop.f32.mrf.mxu0
    %v2575 = vadd.f32 %v2406, %v2574
    %v2576 = vpop.f32.mrf.mxu0
    %v2577 = vadd.f32 %v2408, %v2576
    %2578 = vmatmul.bf16.gmra.mxu0 %v1077
    %v2579 = vpop.f32.mrf.mxu0
    %v2580 = vadd.f32 %v2411, %v2579
    %v2581 = vpop.f32.mrf.mxu0
    %v2582 = vadd.f32 %v2413, %v2581
    %2583 = vmatmul.bf16.gmra.mxu0 %v1083
    %v2584 = vpop.f32.mrf.mxu0
    %v2585 = vadd.f32 %v2416, %v2584
    %v2586 = vpop.f32.mrf.mxu0
    %v2587 = vadd.f32 %v2418, %v2586
    %2588 = vmatmul.bf16.gmra.mxu0 %v1089
    %v2589 = vpop.f32.mrf.mxu0
    %v2590 = vadd.f32 %v2421, %v2589
    %v2591 = vpop.f32.mrf.mxu0
    %v2592 = vadd.f32 %v2423, %v2591
    %2593 = vmatmul.bf16.gmra.mxu0 %v1095
    %v2594 = vpop.f32.mrf.mxu0
    %v2595 = vadd.f32 %v2426, %v2594
    %v2596 = vpop.f32.mrf.mxu0
    %v2597 = vadd.f32 %v2428, %v2596
    %2598 = vmatmul.bf16.gmra.mxu0 %v1101
    %v2599 = vpop.f32.mrf.mxu0
    %v2600 = vadd.f32 %v2431, %v2599
    %v2601 = vpop.f32.mrf.mxu0
    %v2602 = vadd.f32 %v2433, %v2601
    %2603 = vmatmul.bf16.gmra.mxu0 %v1107
    %v2604 = vpop.f32.mrf.mxu0
    %v2605 = vadd.f32 %v2436, %v2604
    %v2606 = vpop.f32.mrf.mxu0
    %v2607 = vadd.f32 %v2438, %v2606
    %2608 = vmatmul.bf16.gmra.mxu0 %v1113
    %v2609 = vpop.f32.mrf.mxu0
    %v2610 = vadd.f32 %v2441, %v2609
    %v2611 = vpop.f32.mrf.mxu0
    %v2612 = vadd.f32 %v2443, %v2611
    %2613 = vmatmul.bf16.gmra.mxu0 %v1119
    %v2614 = vpop.f32.mrf.mxu0
    %v2615 = vadd.f32 %v2446, %v2614
    %v2616 = vpop.f32.mrf.mxu0
    %v2617 = vadd.f32 %v2448, %v2616
    %2618 = vmatmul.bf16.gmra.mxu0 %v1125
    %v2619 = vpop.f32.mrf.mxu0
    %v2620 = vadd.f32 %v2451, %v2619
    %v2621 = vpop.f32.mrf.mxu0
    %v2622 = vadd.f32 %v2453, %v2621
    %2623 = vmatmul.bf16.gmra.mxu0 %v1131
    %v2624 = vpop.f32.mrf.mxu0
    %v2625 = vadd.f32 %v2456, %v2624
    %v2626 = vpop.f32.mrf.mxu0
    %v2627 = vadd.f32 %v2458, %v2626
    %2628 = vmatmul.bf16.gmra.mxu0 %v1137
    %v2629 = vpop.f32.mrf.mxu0
    %v2630 = vadd.f32 %v2461, %v2629
    %v2631 = vpop.f32.mrf.mxu0
    %v2632 = vadd.f32 %v2463, %v2631
    %2633 = vmatmul.bf16.gmra.mxu0 %v1143
    %v2634 = vpop.f32.mrf.mxu0
    %v2635 = vadd.f32 %v2466, %v2634
    %v2636 = vpop.f32.mrf.mxu0
    %v2637 = vadd.f32 %v2468, %v2636
    %2638 = vmatmul.bf16.gmra.mxu0 %v1149
    %v2639 = vpop.f32.mrf.mxu0
    %v2640 = vadd.f32 %v2471, %v2639
    %v2641 = vpop.f32.mrf.mxu0
    %v2642 = vadd.f32 %v2473, %v2641
    %2643 = vdwg.mxu0
    %v2644 = vpack.c.bf16 %v2487, %v2485
    %v2645 = vpack.c.bf16 %v2492, %v2490
    %v2646 = vpack.c.bf16 %v2497, %v2495
    %v2647 = vpack.c.bf16 %v2502, %v2500
    %v2648 = vpack.c.bf16 %v2507, %v2505
    %v2649 = vpack.c.bf16 %v2512, %v2510
    %v2650 = vpack.c.bf16 %v2517, %v2515
    %v2651 = vpack.c.bf16 %v2522, %v2520
    %v2652 = vpack.c.bf16 %v2527, %v2525
    %v2653 = vpack.c.bf16 %v2532, %v2530
    %v2654 = vpack.c.bf16 %v2537, %v2535
    %v2655 = vpack.c.bf16 %v2542, %v2540
    %v2656 = vpack.c.bf16 %v2547, %v2545
    %v2657 = vpack.c.bf16 %v2552, %v2550
    %v2658 = vpack.c.bf16 %v2557, %v2555
    %v2659 = vpack.c.bf16 %v2562, %v2560
    %v2660 = vpack.c.bf16 %v2567, %v2565
    %v2661 = vpack.c.bf16 %v2572, %v2570
    %v2662 = vpack.c.bf16 %v2577, %v2575
    %v2663 = vpack.c.bf16 %v2582, %v2580
    %v2664 = vpack.c.bf16 %v2587, %v2585
    %v2665 = vpack.c.bf16 %v2592, %v2590
    %v2666 = vpack.c.bf16 %v2597, %v2595
    %v2667 = vpack.c.bf16 %v2602, %v2600
    %v2668 = vpack.c.bf16 %v2607, %v2605
    %v2669 = vpack.c.bf16 %v2612, %v2610
    %v2670 = vpack.c.bf16 %v2617, %v2615
    %v2671 = vpack.c.bf16 %v2622, %v2620
    %v2672 = vpack.c.bf16 %v2627, %v2625
    %v2673 = vpack.c.bf16 %v2632, %v2630
    %v2674 = vpack.c.bf16 %v2637, %v2635
    %v2675 = vpack.c.bf16 %v2642, %v2640
    %v2676 = vld [vmem:[#allocation8] sm:$0xff]
    %v2677 = vld [vmem:[#allocation8 + $0x8] sm:$0xf]
    %v2678 = vld [vmem:[#allocation8 + $0xc] sm:$0xff]
    %v2679 = vld [vmem:[#allocation8 + $0x14] sm:$0xf]
    %v2680 = vld [vmem:[#allocation8 + $0x18] sm:$0xff]
    %v2681 = vld [vmem:[#allocation8 + $0x20] sm:$0xf]
    %v2682 = vld [vmem:[#allocation8 + $0x24] sm:$0xff]
    %v2683 = vld [vmem:[#allocation8 + $0x2c] sm:$0xf]
    %v2684 = vld [vmem:[#allocation8 + $0x30] sm:$0xff]
    %v2685 = vld [vmem:[#allocation8 + $0x38] sm:$0xf]
    %v2686 = vld [vmem:[#allocation8 + $0x3c] sm:$0xff]
    %v2687 = vld [vmem:[#allocation8 + $0x44] sm:$0xf]
    %v2688 = vld [vmem:[#allocation8 + $0x48] sm:$0xff]
    %v2689 = vld [vmem:[#allocation8 + $0x50] sm:$0xf]
    %v2690 = vld [vmem:[#allocation8 + $0x54] sm:$0xff]
    %v2691 = vld [vmem:[#allocation8 + $0x5c] sm:$0xf]
    %v2692 = vld [vmem:[#allocation8 + $0x60] sm:$0xff]
    %v2693 = vld [vmem:[#allocation8 + $0x68] sm:$0xf]
    %v2694 = vld [vmem:[#allocation8 + $0x6c] sm:$0xff]
    %v2695 = vld [vmem:[#allocation8 + $0x74] sm:$0xf]
    %v2696 = vld [vmem:[#allocation8 + $0x78] sm:$0xff]
    %v2697 = vld [vmem:[#allocation8 + $0x80] sm:$0xf]
    %v2698 = vld [vmem:[#allocation8 + $0x84] sm:$0xff]
    %v2699 = vld [vmem:[#allocation8 + $0x8c] sm:$0xf]
    %v2700 = vld [vmem:[#allocation8 + $0x90] sm:$0xff]
    %v2701 = vld [vmem:[#allocation8 + $0x98] sm:$0xf]
    %v2702 = vld [vmem:[#allocation8 + $0x9c] sm:$0xff]
    %v2703 = vld [vmem:[#allocation8 + $0xa4] sm:$0xf]
    %v2704 = vld [vmem:[#allocation8 + $0xa8] sm:$0xff]
    %v2705 = vld [vmem:[#allocation8 + $0xb0] sm:$0xf]
    %v2706 = vld [vmem:[#allocation8 + $0xb4] sm:$0xff]
    %v2707 = vld [vmem:[#allocation8 + $0xbc] sm:$0xf]
    %v2740 = vunpack.c.l.b16 %v2676
    %v2741 = vunpack.c.h.b16 %v2676
    %v2742 = vunpack.c.l.b16 %v2677
    %v2743 = vunpack.c.l.b16 %v2678
    %v2744 = vunpack.c.h.b16 %v2678
    %v2745 = vunpack.c.l.b16 %v2679
    %v2746 = vunpack.c.l.b16 %v2680
    %v2747 = vunpack.c.h.b16 %v2680
    %v2748 = vunpack.c.l.b16 %v2681
    %v2749 = vunpack.c.l.b16 %v2682
    %v2750 = vunpack.c.h.b16 %v2682
    %v2751 = vunpack.c.l.b16 %v2683
    %v2752 = vunpack.c.l.b16 %v2684
    %v2753 = vunpack.c.h.b16 %v2684
    %v2754 = vunpack.c.l.b16 %v2685
    %v2755 = vunpack.c.l.b16 %v2686
    %v2756 = vunpack.c.h.b16 %v2686
    %v2757 = vunpack.c.l.b16 %v2687
    %v2758 = vunpack.c.l.b16 %v2688
    %v2759 = vunpack.c.h.b16 %v2688
    %v2760 = vunpack.c.l.b16 %v2689
    %v2761 = vunpack.c.l.b16 %v2690
    %v2762 = vunpack.c.h.b16 %v2690
    %v2763 = vunpack.c.l.b16 %v2691
    %v2764 = vunpack.c.l.b16 %v2692
    %v2765 = vunpack.c.h.b16 %v2692
    %v2766 = vunpack.c.l.b16 %v2693
    %v2767 = vunpack.c.l.b16 %v2694
    %v2768 = vunpack.c.h.b16 %v2694
    %v2769 = vunpack.c.l.b16 %v2695
    %v2770 = vunpack.c.l.b16 %v2696
    %v2771 = vunpack.c.h.b16 %v2696
    %v2772 = vunpack.c.l.b16 %v2697
    %v2773 = vunpack.c.l.b16 %v2698
    %v2774 = vunpack.c.h.b16 %v2698
    %v2775 = vunpack.c.l.b16 %v2699
    %v2776 = vunpack.c.l.b16 %v2700
    %v2777 = vunpack.c.h.b16 %v2700
    %v2778 = vunpack.c.l.b16 %v2701
    %v2779 = vunpack.c.l.b16 %v2702
    %v2780 = vunpack.c.h.b16 %v2702
    %v2781 = vunpack.c.l.b16 %v2703
    %v2782 = vunpack.c.l.b16 %v2704
    %v2783 = vunpack.c.h.b16 %v2704
    %v2784 = vunpack.c.l.b16 %v2705
    %v2785 = vunpack.c.l.b16 %v2706
    %v2786 = vunpack.c.h.b16 %v2706
    %v2787 = vunpack.c.l.b16 %v2707
    %v2788 = vpack.c.b16 %v2743, %v2740
    %v2789 = vpack.c.b16 %v2744, %v2741
    %v2790 = vpack.c.b16 %v2745, %v2742
    %v2791 = vpack.c.b16 %v2749, %v2746
    %v2792 = vpack.c.b16 %v2750, %v2747
    %v2793 = vpack.c.b16 %v2751, %v2748
    %v2794 = vpack.c.b16 %v2755, %v2752
    %v2795 = vpack.c.b16 %v2756, %v2753
    %v2796 = vpack.c.b16 %v2757, %v2754
    %v2797 = vpack.c.b16 %v2761, %v2758
    %v2798 = vpack.c.b16 %v2762, %v2759
    %v2799 = vpack.c.b16 %v2763, %v2760
    %v2800 = vpack.c.b16 %v2767, %v2764
    %v2801 = vpack.c.b16 %v2768, %v2765
    %v2802 = vpack.c.b16 %v2769, %v2766
    %v2803 = vpack.c.b16 %v2773, %v2770
    %v2804 = vpack.c.b16 %v2774, %v2771
    %v2805 = vpack.c.b16 %v2775, %v2772
    %v2806 = vpack.c.b16 %v2779, %v2776
    %v2807 = vpack.c.b16 %v2780, %v2777
    %v2808 = vpack.c.b16 %v2781, %v2778
    %v2809 = vpack.c.b16 %v2785, %v2782
    %v2810 = vpack.c.b16 %v2786, %v2783
    %v2811 = vpack.c.b16 %v2787, %v2784
    %2836 = vmatpush.bf16.msra.mxu0 %v2809
    %2837 = vmatpush.bf16.msra.mxu0 %v2806
    %2838 = vmatpush.bf16.msra.mxu0 %v2803
    %2839 = vmatpush.bf16.msra.mxu0 %v2800
    %2840 = vmatpush.bf16.msra.mxu0 %v2797
    %2841 = vmatpush.bf16.msra.mxu0 %v2794
    %2842 = vmatpush.bf16.msra.mxu0 %v2791
    %2843 = vmatpush.bf16.msra.mxu0 %v2788
    %2844 = vmatmul.bf16.gmra.mxu0 %v2644
    %v2845 = vpop.f32.mrf.mxu0
    %v2846 = vadd.f32 0.0, %v2845
    %v2847 = vpop.f32.mrf.mxu0
    %v2848 = vadd.f32 0.0, %v2847
    %2849 = vmatmul.bf16.gmra.mxu0 %v2645
    %v2850 = vpop.f32.mrf.mxu0
    %v2851 = vadd.f32 0.0, %v2850
    %v2852 = vpop.f32.mrf.mxu0
    %v2853 = vadd.f32 0.0, %v2852
    %2854 = vmatmul.bf16.gmra.mxu0 %v2646
    %v2855 = vpop.f32.mrf.mxu0
    %v2856 = vadd.f32 0.0, %v2855
    %v2857 = vpop.f32.mrf.mxu0
    %v2858 = vadd.f32 0.0, %v2857
    %2859 = vmatmul.bf16.gmra.mxu0 %v2647
    %v2860 = vpop.f32.mrf.mxu0
    %v2861 = vadd.f32 0.0, %v2860
    %v2862 = vpop.f32.mrf.mxu0
    %v2863 = vadd.f32 0.0, %v2862
    %2864 = vmatmul.bf16.gmra.mxu0 %v2648
    %v2865 = vpop.f32.mrf.mxu0
    %v2866 = vadd.f32 0.0, %v2865
    %v2867 = vpop.f32.mrf.mxu0
    %v2868 = vadd.f32 0.0, %v2867
    %2869 = vmatmul.bf16.gmra.mxu0 %v2649
    %v2870 = vpop.f32.mrf.mxu0
    %v2871 = vadd.f32 0.0, %v2870
    %v2872 = vpop.f32.mrf.mxu0
    %v2873 = vadd.f32 0.0, %v2872
    %2874 = vmatmul.bf16.gmra.mxu0 %v2650
    %v2875 = vpop.f32.mrf.mxu0
    %v2876 = vadd.f32 0.0, %v2875
    %v2877 = vpop.f32.mrf.mxu0
    %v2878 = vadd.f32 0.0, %v2877
    %2879 = vmatmul.bf16.gmra.mxu0 %v2651
    %v2880 = vpop.f32.mrf.mxu0
    %v2881 = vadd.f32 0.0, %v2880
    %v2882 = vpop.f32.mrf.mxu0
    %v2883 = vadd.f32 0.0, %v2882
    %2884 = vmatmul.bf16.gmra.mxu0 %v2652
    %v2885 = vpop.f32.mrf.mxu0
    %v2886 = vadd.f32 0.0, %v2885
    %v2887 = vpop.f32.mrf.mxu0
    %v2888 = vadd.f32 0.0, %v2887
    %2889 = vmatmul.bf16.gmra.mxu0 %v2653
    %v2890 = vpop.f32.mrf.mxu0
    %v2891 = vadd.f32 0.0, %v2890
    %v2892 = vpop.f32.mrf.mxu0
    %v2893 = vadd.f32 0.0, %v2892
    %2894 = vmatmul.bf16.gmra.mxu0 %v2654
    %v2895 = vpop.f32.mrf.mxu0
    %v2896 = vadd.f32 0.0, %v2895
    %v2897 = vpop.f32.mrf.mxu0
    %v2898 = vadd.f32 0.0, %v2897
    %2899 = vmatmul.bf16.gmra.mxu0 %v2655
    %v2900 = vpop.f32.mrf.mxu0
    %v2901 = vadd.f32 0.0, %v2900
    %v2902 = vpop.f32.mrf.mxu0
    %v2903 = vadd.f32 0.0, %v2902
    %2904 = vmatmul.bf16.gmra.mxu0 %v2656
    %v2905 = vpop.f32.mrf.mxu0
    %v2906 = vadd.f32 0.0, %v2905
    %v2907 = vpop.f32.mrf.mxu0
    %v2908 = vadd.f32 0.0, %v2907
    %2909 = vmatmul.bf16.gmra.mxu0 %v2657
    %v2910 = vpop.f32.mrf.mxu0
    %v2911 = vadd.f32 0.0, %v2910
    %v2912 = vpop.f32.mrf.mxu0
    %v2913 = vadd.f32 0.0, %v2912
    %2914 = vmatmul.bf16.gmra.mxu0 %v2658
    %v2915 = vpop.f32.mrf.mxu0
    %v2916 = vadd.f32 0.0, %v2915
    %v2917 = vpop.f32.mrf.mxu0
    %v2918 = vadd.f32 0.0, %v2917
    %2919 = vmatmul.bf16.gmra.mxu0 %v2659
    %v2920 = vpop.f32.mrf.mxu0
    %v2921 = vadd.f32 0.0, %v2920
    %v2922 = vpop.f32.mrf.mxu0
    %v2923 = vadd.f32 0.0, %v2922
    %2924 = vmatmul.bf16.gmra.mxu0 %v2660
    %v2925 = vpop.f32.mrf.mxu0
    %v2926 = vadd.f32 0.0, %v2925
    %v2927 = vpop.f32.mrf.mxu0
    %v2928 = vadd.f32 0.0, %v2927
    %2929 = vmatmul.bf16.gmra.mxu0 %v2661
    %v2930 = vpop.f32.mrf.mxu0
    %v2931 = vadd.f32 0.0, %v2930
    %v2932 = vpop.f32.mrf.mxu0
    %v2933 = vadd.f32 0.0, %v2932
    %2934 = vmatmul.bf16.gmra.mxu0 %v2662
    %v2935 = vpop.f32.mrf.mxu0
    %v2936 = vadd.f32 0.0, %v2935
    %v2937 = vpop.f32.mrf.mxu0
    %v2938 = vadd.f32 0.0, %v2937
    %2939 = vmatmul.bf16.gmra.mxu0 %v2663
    %v2940 = vpop.f32.mrf.mxu0
    %v2941 = vadd.f32 0.0, %v2940
    %v2942 = vpop.f32.mrf.mxu0
    %v2943 = vadd.f32 0.0, %v2942
    %2944 = vmatmul.bf16.gmra.mxu0 %v2664
    %v2945 = vpop.f32.mrf.mxu0
    %v2946 = vadd.f32 0.0, %v2945
    %v2947 = vpop.f32.mrf.mxu0
    %v2948 = vadd.f32 0.0, %v2947
    %2949 = vmatmul.bf16.gmra.mxu0 %v2665
    %v2950 = vpop.f32.mrf.mxu0
    %v2951 = vadd.f32 0.0, %v2950
    %v2952 = vpop.f32.mrf.mxu0
    %v2953 = vadd.f32 0.0, %v2952
    %2954 = vmatmul.bf16.gmra.mxu0 %v2666
    %v2955 = vpop.f32.mrf.mxu0
    %v2956 = vadd.f32 0.0, %v2955
    %v2957 = vpop.f32.mrf.mxu0
    %v2958 = vadd.f32 0.0, %v2957
    %2959 = vmatmul.bf16.gmra.mxu0 %v2667
    %v2960 = vpop.f32.mrf.mxu0
    %v2961 = vadd.f32 0.0, %v2960
    %v2962 = vpop.f32.mrf.mxu0
    %v2963 = vadd.f32 0.0, %v2962
    %2964 = vmatmul.bf16.gmra.mxu0 %v2668
    %v2965 = vpop.f32.mrf.mxu0
    %v2966 = vadd.f32 0.0, %v2965
    %v2967 = vpop.f32.mrf.mxu0
    %v2968 = vadd.f32 0.0, %v2967
    %2969 = vmatmul.bf16.gmra.mxu0 %v2669
    %v2970 = vpop.f32.mrf.mxu0
    %v2971 = vadd.f32 0.0, %v2970
    %v2972 = vpop.f32.mrf.mxu0
    %v2973 = vadd.f32 0.0, %v2972
    %2974 = vmatmul.bf16.gmra.mxu0 %v2670
    %v2975 = vpop.f32.mrf.mxu0
    %v2976 = vadd.f32 0.0, %v2975
    %v2977 = vpop.f32.mrf.mxu0
    %v2978 = vadd.f32 0.0, %v2977
    %2979 = vmatmul.bf16.gmra.mxu0 %v2671
    %v2980 = vpop.f32.mrf.mxu0
    %v2981 = vadd.f32 0.0, %v2980
    %v2982 = vpop.f32.mrf.mxu0
    %v2983 = vadd.f32 0.0, %v2982
    %2984 = vmatmul.bf16.gmra.mxu0 %v2672
    %v2985 = vpop.f32.mrf.mxu0
    %v2986 = vadd.f32 0.0, %v2985
    %v2987 = vpop.f32.mrf.mxu0
    %v2988 = vadd.f32 0.0, %v2987
    %2989 = vmatmul.bf16.gmra.mxu0 %v2673
    %v2990 = vpop.f32.mrf.mxu0
    %v2991 = vadd.f32 0.0, %v2990
    %v2992 = vpop.f32.mrf.mxu0
    %v2993 = vadd.f32 0.0, %v2992
    %2994 = vmatmul.bf16.gmra.mxu0 %v2674
    %v2995 = vpop.f32.mrf.mxu0
    %v2996 = vadd.f32 0.0, %v2995
    %v2997 = vpop.f32.mrf.mxu0
    %v2998 = vadd.f32 0.0, %v2997
    %2999 = vmatmul.bf16.gmra.mxu0 %v2675
    %v3000 = vpop.f32.mrf.mxu0
    %v3001 = vadd.f32 0.0, %v3000
    %v3002 = vpop.f32.mrf.mxu0
    %v3003 = vadd.f32 0.0, %v3002
    %3004 = vdwg.mxu0
    %3005 = vmatpush.bf16.msra.mxu0 %v2810
    %3006 = vmatpush.bf16.msra.mxu0 %v2807
    %3007 = vmatpush.bf16.msra.mxu0 %v2804
    %3008 = vmatpush.bf16.msra.mxu0 %v2801
    %3009 = vmatpush.bf16.msra.mxu0 %v2798
    %3010 = vmatpush.bf16.msra.mxu0 %v2795
    %3011 = vmatpush.bf16.msra.mxu0 %v2792
    %3012 = vmatpush.bf16.msra.mxu0 %v2789
    %3013 = vmatmul.bf16.gmra.mxu0 %v2644
    %v3014 = vpop.f32.mrf.mxu0
    %v3015 = vadd.f32 0.0, %v3014
    %v3016 = vpop.f32.mrf.mxu0
    %v3017 = vadd.f32 0.0, %v3016
    %3018 = vmatmul.bf16.gmra.mxu0 %v2645
    %v3019 = vpop.f32.mrf.mxu0
    %v3020 = vadd.f32 0.0, %v3019
    %v3021 = vpop.f32.mrf.mxu0
    %v3022 = vadd.f32 0.0, %v3021
    %3023 = vmatmul.bf16.gmra.mxu0 %v2646
    %v3024 = vpop.f32.mrf.mxu0
    %v3025 = vadd.f32 0.0, %v3024
    %v3026 = vpop.f32.mrf.mxu0
    %v3027 = vadd.f32 0.0, %v3026
    %3028 = vmatmul.bf16.gmra.mxu0 %v2647
    %v3029 = vpop.f32.mrf.mxu0
    %v3030 = vadd.f32 0.0, %v3029
    %v3031 = vpop.f32.mrf.mxu0
    %v3032 = vadd.f32 0.0, %v3031
    %3033 = vmatmul.bf16.gmra.mxu0 %v2648
    %v3034 = vpop.f32.mrf.mxu0
    %v3035 = vadd.f32 0.0, %v3034
    %v3036 = vpop.f32.mrf.mxu0
    %v3037 = vadd.f32 0.0, %v3036
    %3038 = vmatmul.bf16.gmra.mxu0 %v2649
    %v3039 = vpop.f32.mrf.mxu0
    %v3040 = vadd.f32 0.0, %v3039
    %v3041 = vpop.f32.mrf.mxu0
    %v3042 = vadd.f32 0.0, %v3041
    %3043 = vmatmul.bf16.gmra.mxu0 %v2650
    %v3044 = vpop.f32.mrf.mxu0
    %v3045 = vadd.f32 0.0, %v3044
    %v3046 = vpop.f32.mrf.mxu0
    %v3047 = vadd.f32 0.0, %v3046
    %3048 = vmatmul.bf16.gmra.mxu0 %v2651
    %v3049 = vpop.f32.mrf.mxu0
    %v3050 = vadd.f32 0.0, %v3049
    %v3051 = vpop.f32.mrf.mxu0
    %v3052 = vadd.f32 0.0, %v3051
    %3053 = vmatmul.bf16.gmra.mxu0 %v2652
    %v3054 = vpop.f32.mrf.mxu0
    %v3055 = vadd.f32 0.0, %v3054
    %v3056 = vpop.f32.mrf.mxu0
    %v3057 = vadd.f32 0.0, %v3056
    %3058 = vmatmul.bf16.gmra.mxu0 %v2653
    %v3059 = vpop.f32.mrf.mxu0
    %v3060 = vadd.f32 0.0, %v3059
    %v3061 = vpop.f32.mrf.mxu0
    %v3062 = vadd.f32 0.0, %v3061
    %3063 = vmatmul.bf16.gmra.mxu0 %v2654
    %v3064 = vpop.f32.mrf.mxu0
    %v3065 = vadd.f32 0.0, %v3064
    %v3066 = vpop.f32.mrf.mxu0
    %v3067 = vadd.f32 0.0, %v3066
    %3068 = vmatmul.bf16.gmra.mxu0 %v2655
    %v3069 = vpop.f32.mrf.mxu0
    %v3070 = vadd.f32 0.0, %v3069
    %v3071 = vpop.f32.mrf.mxu0
    %v3072 = vadd.f32 0.0, %v3071
    %3073 = vmatmul.bf16.gmra.mxu0 %v2656
    %v3074 = vpop.f32.mrf.mxu0
    %v3075 = vadd.f32 0.0, %v3074
    %v3076 = vpop.f32.mrf.mxu0
    %v3077 = vadd.f32 0.0, %v3076
    %3078 = vmatmul.bf16.gmra.mxu0 %v2657
    %v3079 = vpop.f32.mrf.mxu0
    %v3080 = vadd.f32 0.0, %v3079
    %v3081 = vpop.f32.mrf.mxu0
    %v3082 = vadd.f32 0.0, %v3081
    %3083 = vmatmul.bf16.gmra.mxu0 %v2658
    %v3084 = vpop.f32.mrf.mxu0
    %v3085 = vadd.f32 0.0, %v3084
    %v3086 = vpop.f32.mrf.mxu0
    %v3087 = vadd.f32 0.0, %v3086
    %3088 = vmatmul.bf16.gmra.mxu0 %v2659
    %v3089 = vpop.f32.mrf.mxu0
    %v3090 = vadd.f32 0.0, %v3089
    %v3091 = vpop.f32.mrf.mxu0
    %v3092 = vadd.f32 0.0, %v3091
    %3093 = vmatmul.bf16.gmra.mxu0 %v2660
    %v3094 = vpop.f32.mrf.mxu0
    %v3095 = vadd.f32 0.0, %v3094
    %v3096 = vpop.f32.mrf.mxu0
    %v3097 = vadd.f32 0.0, %v3096
    %3098 = vmatmul.bf16.gmra.mxu0 %v2661
    %v3099 = vpop.f32.mrf.mxu0
    %v3100 = vadd.f32 0.0, %v3099
    %v3101 = vpop.f32.mrf.mxu0
    %v3102 = vadd.f32 0.0, %v3101
    %3103 = vmatmul.bf16.gmra.mxu0 %v2662
    %v3104 = vpop.f32.mrf.mxu0
    %v3105 = vadd.f32 0.0, %v3104
    %v3106 = vpop.f32.mrf.mxu0
    %v3107 = vadd.f32 0.0, %v3106
    %3108 = vmatmul.bf16.gmra.mxu0 %v2663
    %v3109 = vpop.f32.mrf.mxu0
    %v3110 = vadd.f32 0.0, %v3109
    %v3111 = vpop.f32.mrf.mxu0
    %v3112 = vadd.f32 0.0, %v3111
    %3113 = vmatmul.bf16.gmra.mxu0 %v2664
    %v3114 = vpop.f32.mrf.mxu0
    %v3115 = vadd.f32 0.0, %v3114
    %v3116 = vpop.f32.mrf.mxu0
    %v3117 = vadd.f32 0.0, %v3116
    %3118 = vmatmul.bf16.gmra.mxu0 %v2665
    %v3119 = vpop.f32.mrf.mxu0
    %v3120 = vadd.f32 0.0, %v3119
    %v3121 = vpop.f32.mrf.mxu0
    %v3122 = vadd.f32 0.0, %v3121
    %3123 = vmatmul.bf16.gmra.mxu0 %v2666
    %v3124 = vpop.f32.mrf.mxu0
    %v3125 = vadd.f32 0.0, %v3124
    %v3126 = vpop.f32.mrf.mxu0
    %v3127 = vadd.f32 0.0, %v3126
    %3128 = vmatmul.bf16.gmra.mxu0 %v2667
    %v3129 = vpop.f32.mrf.mxu0
    %v3130 = vadd.f32 0.0, %v3129
    %v3131 = vpop.f32.mrf.mxu0
    %v3132 = vadd.f32 0.0, %v3131
    %3133 = vmatmul.bf16.gmra.mxu0 %v2668
    %v3134 = vpop.f32.mrf.mxu0
    %v3135 = vadd.f32 0.0, %v3134
    %v3136 = vpop.f32.mrf.mxu0
    %v3137 = vadd.f32 0.0, %v3136
    %3138 = vmatmul.bf16.gmra.mxu0 %v2669
    %v3139 = vpop.f32.mrf.mxu0
    %v3140 = vadd.f32 0.0, %v3139
    %v3141 = vpop.f32.mrf.mxu0
    %v3142 = vadd.f32 0.0, %v3141
    %3143 = vmatmul.bf16.gmra.mxu0 %v2670
    %v3144 = vpop.f32.mrf.mxu0
    %v3145 = vadd.f32 0.0, %v3144
    %v3146 = vpop.f32.mrf.mxu0
    %v3147 = vadd.f32 0.0, %v3146
    %3148 = vmatmul.bf16.gmra.mxu0 %v2671
    %v3149 = vpop.f32.mrf.mxu0
    %v3150 = vadd.f32 0.0, %v3149
    %v3151 = vpop.f32.mrf.mxu0
    %v3152 = vadd.f32 0.0, %v3151
    %3153 = vmatmul.bf16.gmra.mxu0 %v2672
    %v3154 = vpop.f32.mrf.mxu0
    %v3155 = vadd.f32 0.0, %v3154
    %v3156 = vpop.f32.mrf.mxu0
    %v3157 = vadd.f32 0.0, %v3156
    %3158 = vmatmul.bf16.gmra.mxu0 %v2673
    %v3159 = vpop.f32.mrf.mxu0
    %v3160 = vadd.f32 0.0, %v3159
    %v3161 = vpop.f32.mrf.mxu0
    %v3162 = vadd.f32 0.0, %v3161
    %3163 = vmatmul.bf16.gmra.mxu0 %v2674
    %v3164 = vpop.f32.mrf.mxu0
    %v3165 = vadd.f32 0.0, %v3164
    %v3166 = vpop.f32.mrf.mxu0
    %v3167 = vadd.f32 0.0, %v3166
    %3168 = vmatmul.bf16.gmra.mxu0 %v2675
    %v3169 = vpop.f32.mrf.mxu0
    %v3170 = vadd.f32 0.0, %v3169
    %v3171 = vpop.f32.mrf.mxu0
    %v3172 = vadd.f32 0.0, %v3171
    %3173 = vdwg.mxu0
    %3174 = vmatpush.bf16.msra.mxu0 %v2811
    %3175 = vmatpush.bf16.msra.mxu0 %v2808
    %3176 = vmatpush.bf16.msra.mxu0 %v2805
    %3177 = vmatpush.bf16.msra.mxu0 %v2802
    %3178 = vmatpush.bf16.msra.mxu0 %v2799
    %3179 = vmatpush.bf16.msra.mxu0 %v2796
    %3180 = vmatpush.bf16.msra.mxu0 %v2793
    %3181 = vmatpush.bf16.msra.mxu0 %v2790
    %3182 = vmatmul.bf16.gmra.mxu0 %v2644
    %v3183 = vpop.f32.mrf.mxu0
    %v3184 = vadd.f32 0.0, %v3183
    %v3185 = vpop.f32.mrf.mxu0
    %v3186 = vadd.f32 0.0, %v3185
    %3187 = vmatmul.bf16.gmra.mxu0 %v2645
    %v3188 = vpop.f32.mrf.mxu0
    %v3189 = vadd.f32 0.0, %v3188
    %v3190 = vpop.f32.mrf.mxu0
    %v3191 = vadd.f32 0.0, %v3190
    %3192 = vmatmul.bf16.gmra.mxu0 %v2646
    %v3193 = vpop.f32.mrf.mxu0
    %v3194 = vadd.f32 0.0, %v3193
    %v3195 = vpop.f32.mrf.mxu0
    %v3196 = vadd.f32 0.0, %v3195
    %3197 = vmatmul.bf16.gmra.mxu0 %v2647
    %v3198 = vpop.f32.mrf.mxu0
    %v3199 = vadd.f32 0.0, %v3198
    %v3200 = vpop.f32.mrf.mxu0
    %v3201 = vadd.f32 0.0, %v3200
    %3202 = vmatmul.bf16.gmra.mxu0 %v2648
    %v3203 = vpop.f32.mrf.mxu0
    %v3204 = vadd.f32 0.0, %v3203
    %v3205 = vpop.f32.mrf.mxu0
    %v3206 = vadd.f32 0.0, %v3205
    %3207 = vmatmul.bf16.gmra.mxu0 %v2649
    %v3208 = vpop.f32.mrf.mxu0
    %v3209 = vadd.f32 0.0, %v3208
    %v3210 = vpop.f32.mrf.mxu0
    %v3211 = vadd.f32 0.0, %v3210
    %3212 = vmatmul.bf16.gmra.mxu0 %v2650
    %v3213 = vpop.f32.mrf.mxu0
    %v3214 = vadd.f32 0.0, %v3213
    %v3215 = vpop.f32.mrf.mxu0
    %v3216 = vadd.f32 0.0, %v3215
    %3217 = vmatmul.bf16.gmra.mxu0 %v2651
    %v3218 = vpop.f32.mrf.mxu0
    %v3219 = vadd.f32 0.0, %v3218
    %v3220 = vpop.f32.mrf.mxu0
    %v3221 = vadd.f32 0.0, %v3220
    %3222 = vmatmul.bf16.gmra.mxu0 %v2652
    %v3223 = vpop.f32.mrf.mxu0
    %v3224 = vadd.f32 0.0, %v3223
    %v3225 = vpop.f32.mrf.mxu0
    %v3226 = vadd.f32 0.0, %v3225
    %3227 = vmatmul.bf16.gmra.mxu0 %v2653
    %v3228 = vpop.f32.mrf.mxu0
    %v3229 = vadd.f32 0.0, %v3228
    %v3230 = vpop.f32.mrf.mxu0
    %v3231 = vadd.f32 0.0, %v3230
    %3232 = vmatmul.bf16.gmra.mxu0 %v2654
    %v3233 = vpop.f32.mrf.mxu0
    %v3234 = vadd.f32 0.0, %v3233
    %v3235 = vpop.f32.mrf.mxu0
    %v3236 = vadd.f32 0.0, %v3235
    %3237 = vmatmul.bf16.gmra.mxu0 %v2655
    %v3238 = vpop.f32.mrf.mxu0
    %v3239 = vadd.f32 0.0, %v3238
    %v3240 = vpop.f32.mrf.mxu0
    %v3241 = vadd.f32 0.0, %v3240
    %3242 = vmatmul.bf16.gmra.mxu0 %v2656
    %v3243 = vpop.f32.mrf.mxu0
    %v3244 = vadd.f32 0.0, %v3243
    %v3245 = vpop.f32.mrf.mxu0
    %v3246 = vadd.f32 0.0, %v3245
    %3247 = vmatmul.bf16.gmra.mxu0 %v2657
    %v3248 = vpop.f32.mrf.mxu0
    %v3249 = vadd.f32 0.0, %v3248
    %v3250 = vpop.f32.mrf.mxu0
    %v3251 = vadd.f32 0.0, %v3250
    %3252 = vmatmul.bf16.gmra.mxu0 %v2658
    %v3253 = vpop.f32.mrf.mxu0
    %v3254 = vadd.f32 0.0, %v3253
    %v3255 = vpop.f32.mrf.mxu0
    %v3256 = vadd.f32 0.0, %v3255
    %3257 = vmatmul.bf16.gmra.mxu0 %v2659
    %v3258 = vpop.f32.mrf.mxu0
    %v3259 = vadd.f32 0.0, %v3258
    %v3260 = vpop.f32.mrf.mxu0
    %v3261 = vadd.f32 0.0, %v3260
    %3262 = vmatmul.bf16.gmra.mxu0 %v2660
    %v3263 = vpop.f32.mrf.mxu0
    %v3264 = vadd.f32 0.0, %v3263
    %v3265 = vpop.f32.mrf.mxu0
    %v3266 = vadd.f32 0.0, %v3265
    %3267 = vmatmul.bf16.gmra.mxu0 %v2661
    %v3268 = vpop.f32.mrf.mxu0
    %v3269 = vadd.f32 0.0, %v3268
    %v3270 = vpop.f32.mrf.mxu0
    %v3271 = vadd.f32 0.0, %v3270
    %3272 = vmatmul.bf16.gmra.mxu0 %v2662
    %v3273 = vpop.f32.mrf.mxu0
    %v3274 = vadd.f32 0.0, %v3273
    %v3275 = vpop.f32.mrf.mxu0
    %v3276 = vadd.f32 0.0, %v3275
    %3277 = vmatmul.bf16.gmra.mxu0 %v2663
    %v3278 = vpop.f32.mrf.mxu0
    %v3279 = vadd.f32 0.0, %v3278
    %v3280 = vpop.f32.mrf.mxu0
    %v3281 = vadd.f32 0.0, %v3280
    %3282 = vmatmul.bf16.gmra.mxu0 %v2664
    %v3283 = vpop.f32.mrf.mxu0
    %v3284 = vadd.f32 0.0, %v3283
    %v3285 = vpop.f32.mrf.mxu0
    %v3286 = vadd.f32 0.0, %v3285
    %3287 = vmatmul.bf16.gmra.mxu0 %v2665
    %v3288 = vpop.f32.mrf.mxu0
    %v3289 = vadd.f32 0.0, %v3288
    %v3290 = vpop.f32.mrf.mxu0
    %v3291 = vadd.f32 0.0, %v3290
    %3292 = vmatmul.bf16.gmra.mxu0 %v2666
    %v3293 = vpop.f32.mrf.mxu0
    %v3294 = vadd.f32 0.0, %v3293
    %v3295 = vpop.f32.mrf.mxu0
    %v3296 = vadd.f32 0.0, %v3295
    %3297 = vmatmul.bf16.gmra.mxu0 %v2667
    %v3298 = vpop.f32.mrf.mxu0
    %v3299 = vadd.f32 0.0, %v3298
    %v3300 = vpop.f32.mrf.mxu0
    %v3301 = vadd.f32 0.0, %v3300
    %3302 = vmatmul.bf16.gmra.mxu0 %v2668
    %v3303 = vpop.f32.mrf.mxu0
    %v3304 = vadd.f32 0.0, %v3303
    %v3305 = vpop.f32.mrf.mxu0
    %v3306 = vadd.f32 0.0, %v3305
    %3307 = vmatmul.bf16.gmra.mxu0 %v2669
    %v3308 = vpop.f32.mrf.mxu0
    %v3309 = vadd.f32 0.0, %v3308
    %v3310 = vpop.f32.mrf.mxu0
    %v3311 = vadd.f32 0.0, %v3310
    %3312 = vmatmul.bf16.gmra.mxu0 %v2670
    %v3313 = vpop.f32.mrf.mxu0
    %v3314 = vadd.f32 0.0, %v3313
    %v3315 = vpop.f32.mrf.mxu0
    %v3316 = vadd.f32 0.0, %v3315
    %3317 = vmatmul.bf16.gmra.mxu0 %v2671
    %v3318 = vpop.f32.mrf.mxu0
    %v3319 = vadd.f32 0.0, %v3318
    %v3320 = vpop.f32.mrf.mxu0
    %v3321 = vadd.f32 0.0, %v3320
    %3322 = vmatmul.bf16.gmra.mxu0 %v2672
    %v3323 = vpop.f32.mrf.mxu0
    %v3324 = vadd.f32 0.0, %v3323
    %v3325 = vpop.f32.mrf.mxu0
    %v3326 = vadd.f32 0.0, %v3325
    %3327 = vmatmul.bf16.gmra.mxu0 %v2673
    %v3328 = vpop.f32.mrf.mxu0
    %v3329 = vadd.f32 0.0, %v3328
    %v3330 = vpop.f32.mrf.mxu0
    %v3331 = vadd.f32 0.0, %v3330
    %3332 = vmatmul.bf16.gmra.mxu0 %v2674
    %v3333 = vpop.f32.mrf.mxu0
    %v3334 = vadd.f32 0.0, %v3333
    %v3335 = vpop.f32.mrf.mxu0
    %v3336 = vadd.f32 0.0, %v3335
    %3337 = vmatmul.bf16.gmra.mxu0 %v2675
    %v3338 = vpop.f32.mrf.mxu0
    %v3339 = vadd.f32 0.0, %v3338
    %v3340 = vpop.f32.mrf.mxu0
    %v3341 = vadd.f32 0.0, %v3340
    %3342 = vdwg.mxu0
    %vm3407 = vcmask 1046528
    %v3408 = vrot.slane %v2846, 1
    %v3409 = vrot.slane %v2848, 1
    %v3410 = vsel %vm3407, %v3408, %v3409
    %v3411 = vrot.slane %v2851, 1
    %v3412 = vsel %vm3407, %v3409, %v3411
    %v3413 = vrot.slane %v2853, 1
    %v3414 = vsel %vm3407, %v3411, %v3413
    %v3415 = vrot.slane %v2856, 1
    %v3416 = vsel %vm3407, %v3413, %v3415
    %v3417 = vrot.slane %v2858, 1
    %v3418 = vsel %vm3407, %v3415, %v3417
    %v3419 = vrot.slane %v2861, 1
    %v3420 = vsel %vm3407, %v3417, %v3419
    %v3421 = vrot.slane %v2863, 1
    %v3422 = vsel %vm3407, %v3419, %v3421
    %v3423 = vrot.slane %v2866, 1
    %v3424 = vsel %vm3407, %v3421, %v3423
    %v3425 = vrot.slane %v2868, 1
    %v3426 = vsel %vm3407, %v3423, %v3425
    %v3427 = vrot.slane %v2871, 1
    %v3428 = vsel %vm3407, %v3425, %v3427
    %v3429 = vrot.slane %v2873, 1
    %v3430 = vsel %vm3407, %v3427, %v3429
    %v3431 = vrot.slane %v2876, 1
    %v3432 = vsel %vm3407, %v3429, %v3431
    %v3433 = vrot.slane %v2878, 1
    %v3434 = vsel %vm3407, %v3431, %v3433
    %v3435 = vrot.slane %v2881, 1
    %v3436 = vsel %vm3407, %v3433, %v3435
    %v3437 = vrot.slane %v2883, 1
    %v3438 = vsel %vm3407, %v3435, %v3437
    %v3439 = vrot.slane %v2886, 1
    %v3440 = vsel %vm3407, %v3437, %v3439
    %v3441 = vrot.slane %v2888, 1
    %v3442 = vsel %vm3407, %v3439, %v3441
    %v3443 = vrot.slane %v2891, 1
    %v3444 = vsel %vm3407, %v3441, %v3443
    %v3445 = vrot.slane %v2893, 1
    %v3446 = vsel %vm3407, %v3443, %v3445
    %v3447 = vrot.slane %v2896, 1
    %v3448 = vsel %vm3407, %v3445, %v3447
    %v3449 = vrot.slane %v2898, 1
    %v3450 = vsel %vm3407, %v3447, %v3449
    %v3451 = vrot.slane %v2901, 1
    %v3452 = vsel %vm3407, %v3449, %v3451
    %v3453 = vrot.slane %v2903, 1
    %v3454 = vsel %vm3407, %v3451, %v3453
    %v3455 = vrot.slane %v2906, 1
    %v3456 = vsel %vm3407, %v3453, %v3455
    %v3457 = vrot.slane %v2908, 1
    %v3458 = vsel %vm3407, %v3455, %v3457
    %v3459 = vrot.slane %v2911, 1
    %v3460 = vsel %vm3407, %v3457, %v3459
    %v3461 = vrot.slane %v2913, 1
    %v3462 = vsel %vm3407, %v3459, %v3461
    %v3463 = vrot.slane %v2916, 1
    %v3464 = vsel %vm3407, %v3461, %v3463
    %v3465 = vrot.slane %v2918, 1
    %v3466 = vsel %vm3407, %v3463, %v3465
    %v3467 = vrot.slane %v2921, 1
    %v3468 = vsel %vm3407, %v3465, %v3467
    %v3469 = vrot.slane %v2923, 1
    %v3470 = vsel %vm3407, %v3467, %v3469
    %v3471 = vrot.slane %v2926, 1
    %v3472 = vsel %vm3407, %v3469, %v3471
    %v3473 = vrot.slane %v2928, 1
    %v3474 = vsel %vm3407, %v3471, %v3473
    %v3475 = vrot.slane %v2931, 1
    %v3476 = vsel %vm3407, %v3473, %v3475
    %v3477 = vrot.slane %v2933, 1
    %v3478 = vsel %vm3407, %v3475, %v3477
    %v3479 = vrot.slane %v2936, 1
    %v3480 = vsel %vm3407, %v3477, %v3479
    %v3481 = vrot.slane %v2938, 1
    %v3482 = vsel %vm3407, %v3479, %v3481
    %v3483 = vrot.slane %v2941, 1
    %v3484 = vsel %vm3407, %v3481, %v3483
    %v3485 = vrot.slane %v2943, 1
    %v3486 = vsel %vm3407, %v3483, %v3485
    %v3487 = vrot.slane %v2946, 1
    %v3488 = vsel %vm3407, %v3485, %v3487
    %v3489 = vrot.slane %v2948, 1
    %v3490 = vsel %vm3407, %v3487, %v3489
    %v3491 = vrot.slane %v2951, 1
    %v3492 = vsel %vm3407, %v3489, %v3491
    %v3493 = vrot.slane %v2953, 1
    %v3494 = vsel %vm3407, %v3491, %v3493
    %v3495 = vrot.slane %v2956, 1
    %v3496 = vsel %vm3407, %v3493, %v3495
    %v3497 = vrot.slane %v2958, 1
    %v3498 = vsel %vm3407, %v3495, %v3497
    %v3499 = vrot.slane %v2961, 1
    %v3500 = vsel %vm3407, %v3497, %v3499
    %v3501 = vrot.slane %v2963, 1
    %v3502 = vsel %vm3407, %v3499, %v3501
    %v3503 = vrot.slane %v2966, 1
    %v3504 = vsel %vm3407, %v3501, %v3503
    %v3505 = vrot.slane %v2968, 1
    %v3506 = vsel %vm3407, %v3503, %v3505
    %v3507 = vrot.slane %v2971, 1
    %v3508 = vsel %vm3407, %v3505, %v3507
    %v3509 = vrot.slane %v2973, 1
    %v3510 = vsel %vm3407, %v3507, %v3509
    %v3511 = vrot.slane %v2976, 1
    %v3512 = vsel %vm3407, %v3509, %v3511
    %v3513 = vrot.slane %v2978, 1
    %v3514 = vsel %vm3407, %v3511, %v3513
    %v3515 = vrot.slane %v2981, 1
    %v3516 = vsel %vm3407, %v3513, %v3515
    %v3517 = vrot.slane %v2983, 1
    %v3518 = vsel %vm3407, %v3515, %v3517
    %v3519 = vrot.slane %v2986, 1
    %v3520 = vsel %vm3407, %v3517, %v3519
    %v3521 = vrot.slane %v2988, 1
    %v3522 = vsel %vm3407, %v3519, %v3521
    %v3523 = vrot.slane %v2991, 1
    %v3524 = vsel %vm3407, %v3521, %v3523
    %v3525 = vrot.slane %v2993, 1
    %v3526 = vsel %vm3407, %v3523, %v3525
    %v3527 = vrot.slane %v2996, 1
    %v3528 = vsel %vm3407, %v3525, %v3527
    %v3529 = vrot.slane %v2998, 1
    %v3530 = vsel %vm3407, %v3527, %v3529
    %v3531 = vrot.slane %v3001, 1
    %v3532 = vsel %vm3407, %v3529, %v3531
    %v3533 = vrot.slane %v3003, 1
    %v3534 = vsel %vm3407, %v3531, %v3533
    %v3600 = vsel %vm3407, %v3533, %v3408
    %v3601 = vadd.f32 %v2485, %v3410
    %v3602 = vadd.f32 %v2487, %v3412
    %v3603 = vadd.f32 %v2490, %v3414
    %v3604 = vadd.f32 %v2492, %v3416
    %v3605 = vadd.f32 %v2495, %v3418
    %v3606 = vadd.f32 %v2497, %v3420
    %v3607 = vadd.f32 %v2500, %v3422
    %v3608 = vadd.f32 %v2502, %v3424
    %v3609 = vadd.f32 %v2505, %v3426
    %v3610 = vadd.f32 %v2507, %v3428
    %v3611 = vadd.f32 %v2510, %v3430
    %v3612 = vadd.f32 %v2512, %v3432
    %v3613 = vadd.f32 %v2515, %v3434
    %v3614 = vadd.f32 %v2517, %v3436
    %v3615 = vadd.f32 %v2520, %v3438
    %v3616 = vadd.f32 %v2522, %v3440
    %v3617 = vadd.f32 %v2525, %v3442
    %v3618 = vadd.f32 %v2527, %v3444
    %v3619 = vadd.f32 %v2530, %v3446
    %v3620 = vadd.f32 %v2532, %v3448
    %v3621 = vadd.f32 %v2535, %v3450
    %v3622 = vadd.f32 %v2537, %v3452
    %v3623 = vadd.f32 %v2540, %v3454
    %v3624 = vadd.f32 %v2542, %v3456
    %v3625 = vadd.f32 %v2545, %v3458
    %v3626 = vadd.f32 %v2547, %v3460
    %v3627 = vadd.f32 %v2550, %v3462
    %v3628 = vadd.f32 %v2552, %v3464
    %v3629 = vadd.f32 %v2555, %v3466
    %v3630 = vadd.f32 %v2557, %v3468
    %v3631 = vadd.f32 %v2560, %v3470
    %v3632 = vadd.f32 %v2562, %v3472
    %v3633 = vadd.f32 %v2565, %v3474
    %v3634 = vadd.f32 %v2567, %v3476
    %v3635 = vadd.f32 %v2570, %v3478
    %v3636 = vadd.f32 %v2572, %v3480
    %v3637 = vadd.f32 %v2575, %v3482
    %v3638 = vadd.f32 %v2577, %v3484
    %v3639 = vadd.f32 %v2580, %v3486
    %v3640 = vadd.f32 %v2582, %v3488
    %v3641 = vadd.f32 %v2585, %v3490
    %v3642 = vadd.f32 %v2587, %v3492
    %v3643 = vadd.f32 %v2590, %v3494
    %v3644 = vadd.f32 %v2592, %v3496
    %v3645 = vadd.f32 %v2595, %v3498
    %v3646 = vadd.f32 %v2597, %v3500
    %v3647 = vadd.f32 %v2600, %v3502
    %v3648 = vadd.f32 %v2602, %v3504
    %v3649 = vadd.f32 %v2605, %v3506
    %v3650 = vadd.f32 %v2607, %v3508
    %v3651 = vadd.f32 %v2610, %v3510
    %v3652 = vadd.f32 %v2612, %v3512
    %v3653 = vadd.f32 %v2615, %v3514
    %v3654 = vadd.f32 %v2617, %v3516
    %v3655 = vadd.f32 %v2620, %v3518
    %v3656 = vadd.f32 %v2622, %v3520
    %v3657 = vadd.f32 %v2625, %v3522
    %v3658 = vadd.f32 %v2627, %v3524
    %v3659 = vadd.f32 %v2630, %v3526
    %v3660 = vadd.f32 %v2632, %v3528
    %v3661 = vadd.f32 %v2635, %v3530
    %v3662 = vadd.f32 %v2637, %v3532
    %v3663 = vadd.f32 %v2640, %v3534
    %v3664 = vadd.f32 %v2642, %v3600
    %vm3729 = vcmask 1045504
    %v3730 = vrot.slane %v3015, 2
    %v3731 = vrot.slane %v3017, 2
    %v3732 = vsel %vm3729, %v3730, %v3731
    %v3733 = vrot.slane %v3020, 2
    %v3734 = vsel %vm3729, %v3731, %v3733
    %v3735 = vrot.slane %v3022, 2
    %v3736 = vsel %vm3729, %v3733, %v3735
    %v3737 = vrot.slane %v3025, 2
    %v3738 = vsel %vm3729, %v3735, %v3737
    %v3739 = vrot.slane %v3027, 2
    %v3740 = vsel %vm3729, %v3737, %v3739
    %v3741 = vrot.slane %v3030, 2
    %v3742 = vsel %vm3729, %v3739, %v3741
    %v3743 = vrot.slane %v3032, 2
    %v3744 = vsel %vm3729, %v3741, %v3743
    %v3745 = vrot.slane %v3035, 2
    %v3746 = vsel %vm3729, %v3743, %v3745
    %v3747 = vrot.slane %v3037, 2
    %v3748 = vsel %vm3729, %v3745, %v3747
    %v3749 = vrot.slane %v3040, 2
    %v3750 = vsel %vm3729, %v3747, %v3749
    %v3751 = vrot.slane %v3042, 2
    %v3752 = vsel %vm3729, %v3749, %v3751
    %v3753 = vrot.slane %v3045, 2
    %v3754 = vsel %vm3729, %v3751, %v3753
    %v3755 = vrot.slane %v3047, 2
    %v3756 = vsel %vm3729, %v3753, %v3755
    %v3757 = vrot.slane %v3050, 2
    %v3758 = vsel %vm3729, %v3755, %v3757
    %v3759 = vrot.slane %v3052, 2
    %v3760 = vsel %vm3729, %v3757, %v3759
    %v3761 = vrot.slane %v3055, 2
    %v3762 = vsel %vm3729, %v3759, %v3761
    %v3763 = vrot.slane %v3057, 2
    %v3764 = vsel %vm3729, %v3761, %v3763
    %v3765 = vrot.slane %v3060, 2
    %v3766 = vsel %vm3729, %v3763, %v3765
    %v3767 = vrot.slane %v3062, 2
    %v3768 = vsel %vm3729, %v3765, %v3767
    %v3769 = vrot.slane %v3065, 2
    %v3770 = vsel %vm3729, %v3767, %v3769
    %v3771 = vrot.slane %v3067, 2
    %v3772 = vsel %vm3729, %v3769, %v3771
    %v3773 = vrot.slane %v3070, 2
    %v3774 = vsel %vm3729, %v3771, %v3773
    %v3775 = vrot.slane %v3072, 2
    %v3776 = vsel %vm3729, %v3773, %v3775
    %v3777 = vrot.slane %v3075, 2
    %v3778 = vsel %vm3729, %v3775, %v3777
    %v3779 = vrot.slane %v3077, 2
    %v3780 = vsel %vm3729, %v3777, %v3779
    %v3781 = vrot.slane %v3080, 2
    %v3782 = vsel %vm3729, %v3779, %v3781
    %v3783 = vrot.slane %v3082, 2
    %v3784 = vsel %vm3729, %v3781, %v3783
    %v3785 = vrot.slane %v3085, 2
    %v3786 = vsel %vm3729, %v3783, %v3785
    %v3787 = vrot.slane %v3087, 2
    %v3788 = vsel %vm3729, %v3785, %v3787
    %v3789 = vrot.slane %v3090, 2
    %v3790 = vsel %vm3729, %v3787, %v3789
    %v3791 = vrot.slane %v3092, 2
    %v3792 = vsel %vm3729, %v3789, %v3791
    %v3793 = vrot.slane %v3095, 2
    %v3794 = vsel %vm3729, %v3791, %v3793
    %v3795 = vrot.slane %v3097, 2
    %v3796 = vsel %vm3729, %v3793, %v3795
    %v3797 = vrot.slane %v3100, 2
    %v3798 = vsel %vm3729, %v3795, %v3797
    %v3799 = vrot.slane %v3102, 2
    %v3800 = vsel %vm3729, %v3797, %v3799
    %v3801 = vrot.slane %v3105, 2
    %v3802 = vsel %vm3729, %v3799, %v3801
    %v3803 = vrot.slane %v3107, 2
    %v3804 = vsel %vm3729, %v3801, %v3803
    %v3805 = vrot.slane %v3110, 2
    %v3806 = vsel %vm3729, %v3803, %v3805
    %v3807 = vrot.slane %v3112, 2
    %v3808 = vsel %vm3729, %v3805, %v3807
    %v3809 = vrot.slane %v3115, 2
    %v3810 = vsel %vm3729, %v3807, %v3809
    %v3811 = vrot.slane %v3117, 2
    %v3812 = vsel %vm3729, %v3809, %v3811
    %v3813 = vrot.slane %v3120, 2
    %v3814 = vsel %vm3729, %v3811, %v3813
    %v3815 = vrot.slane %v3122, 2
    %v3816 = vsel %vm3729, %v3813, %v3815
    %v3817 = vrot.slane %v3125, 2
    %v3818 = vsel %vm3729, %v3815, %v3817
    %v3819 = vrot.slane %v3127, 2
    %v3820 = vsel %vm3729, %v3817, %v3819
    %v3821 = vrot.slane %v3130, 2
    %v3822 = vsel %vm3729, %v3819, %v3821
    %v3823 = vrot.slane %v3132, 2
    %v3824 = vsel %vm3729, %v3821, %v3823
    %v3825 = vrot.slane %v3135, 2
    %v3826 = vsel %vm3729, %v3823, %v3825
    %v3827 = vrot.slane %v3137, 2
    %v3828 = vsel %vm3729, %v3825, %v3827
    %v3829 = vrot.slane %v3140, 2
    %v3830 = vsel %vm3729, %v3827, %v3829
    %v3831 = vrot.slane %v3142, 2
    %v3832 = vsel %vm3729, %v3829, %v3831
    %v3833 = vrot.slane %v3145, 2
    %v3834 = vsel %vm3729, %v3831, %v3833
    %v3835 = vrot.slane %v3147, 2
    %v3836 = vsel %vm3729, %v3833, %v3835
    %v3837 = vrot.slane %v3150, 2
    %v3838 = vsel %vm3729, %v3835, %v3837
    %v3839 = vrot.slane %v3152, 2
    %v3840 = vsel %vm3729, %v3837, %v3839
    %v3841 = vrot.slane %v3155, 2
    %v3842 = vsel %vm3729, %v3839, %v3841
    %v3843 = vrot.slane %v3157, 2
    %v3844 = vsel %vm3729, %v3841, %v3843
    %v3845 = vrot.slane %v3160, 2
    %v3846 = vsel %vm3729, %v3843, %v3845
    %v3847 = vrot.slane %v3162, 2
    %v3848 = vsel %vm3729, %v3845, %v3847
    %v3849 = vrot.slane %v3165, 2
    %v3850 = vsel %vm3729, %v3847, %v3849
    %v3851 = vrot.slane %v3167, 2
    %v3852 = vsel %vm3729, %v3849, %v3851
    %v3853 = vrot.slane %v3170, 2
    %v3854 = vsel %vm3729, %v3851, %v3853
    %v3855 = vrot.slane %v3172, 2
    %v3856 = vsel %vm3729, %v3853, %v3855
    %v3922 = vsel %vm3729, %v3855, %v3730
    %v3923 = vadd.f32 %v3601, %v3732
    %v3924 = vadd.f32 %v3602, %v3734
    %v3925 = vadd.f32 %v3603, %v3736
    %v3926 = vadd.f32 %v3604, %v3738
    %v3927 = vadd.f32 %v3605, %v3740
    %v3928 = vadd.f32 %v3606, %v3742
    %v3929 = vadd.f32 %v3607, %v3744
    %v3930 = vadd.f32 %v3608, %v3746
    %v3931 = vadd.f32 %v3609, %v3748
    %v3932 = vadd.f32 %v3610, %v3750
    %v3933 = vadd.f32 %v3611, %v3752
    %v3934 = vadd.f32 %v3612, %v3754
    %v3935 = vadd.f32 %v3613, %v3756
    %v3936 = vadd.f32 %v3614, %v3758
    %v3937 = vadd.f32 %v3615, %v3760
    %v3938 = vadd.f32 %v3616, %v3762
    %v3939 = vadd.f32 %v3617, %v3764
    %v3940 = vadd.f32 %v3618, %v3766
    %v3941 = vadd.f32 %v3619, %v3768
    %v3942 = vadd.f32 %v3620, %v3770
    %v3943 = vadd.f32 %v3621, %v3772
    %v3944 = vadd.f32 %v3622, %v3774
    %v3945 = vadd.f32 %v3623, %v3776
    %v3946 = vadd.f32 %v3624, %v3778
    %v3947 = vadd.f32 %v3625, %v3780
    %v3948 = vadd.f32 %v3626, %v3782
    %v3949 = vadd.f32 %v3627, %v3784
    %v3950 = vadd.f32 %v3628, %v3786
    %v3951 = vadd.f32 %v3629, %v3788
    %v3952 = vadd.f32 %v3630, %v3790
    %v3953 = vadd.f32 %v3631, %v3792
    %v3954 = vadd.f32 %v3632, %v3794
    %v3955 = vadd.f32 %v3633, %v3796
    %v3956 = vadd.f32 %v3634, %v3798
    %v3957 = vadd.f32 %v3635, %v3800
    %v3958 = vadd.f32 %v3636, %v3802
    %v3959 = vadd.f32 %v3637, %v3804
    %v3960 = vadd.f32 %v3638, %v3806
    %v3961 = vadd.f32 %v3639, %v3808
    %v3962 = vadd.f32 %v3640, %v3810
    %v3963 = vadd.f32 %v3641, %v3812
    %v3964 = vadd.f32 %v3642, %v3814
    %v3965 = vadd.f32 %v3643, %v3816
    %v3966 = vadd.f32 %v3644, %v3818
    %v3967 = vadd.f32 %v3645, %v3820
    %v3968 = vadd.f32 %v3646, %v3822
    %v3969 = vadd.f32 %v3647, %v3824
    %v3970 = vadd.f32 %v3648, %v3826
    %v3971 = vadd.f32 %v3649, %v3828
    %v3972 = vadd.f32 %v3650, %v3830
    %v3973 = vadd.f32 %v3651, %v3832
    %v3974 = vadd.f32 %v3652, %v3834
    %v3975 = vadd.f32 %v3653, %v3836
    %v3976 = vadd.f32 %v3654, %v3838
    %v3977 = vadd.f32 %v3655, %v3840
    %v3978 = vadd.f32 %v3656, %v3842
    %v3979 = vadd.f32 %v3657, %v3844
    %v3980 = vadd.f32 %v3658, %v3846
    %v3981 = vadd.f32 %v3659, %v3848
    %v3982 = vadd.f32 %v3660, %v3850
    %v3983 = vadd.f32 %v3661, %v3852
    %v3984 = vadd.f32 %v3662, %v3854
    %v3985 = vadd.f32 %v3663, %v3856
    %v3986 = vadd.f32 %v3664, %v3922
    %vm4051 = vcmask 1044480
    %v4052 = vrot.slane %v3184, 3
    %v4053 = vrot.slane %v3186, 3
    %v4054 = vsel %vm4051, %v4052, %v4053
    %v4055 = vrot.slane %v3189, 3
    %v4056 = vsel %vm4051, %v4053, %v4055
    %v4057 = vrot.slane %v3191, 3
    %v4058 = vsel %vm4051, %v4055, %v4057
    %v4059 = vrot.slane %v3194, 3
    %v4060 = vsel %vm4051, %v4057, %v4059
    %v4061 = vrot.slane %v3196, 3
    %v4062 = vsel %vm4051, %v4059, %v4061
    %v4063 = vrot.slane %v3199, 3
    %v4064 = vsel %vm4051, %v4061, %v4063
    %v4065 = vrot.slane %v3201, 3
    %v4066 = vsel %vm4051, %v4063, %v4065
    %v4067 = vrot.slane %v3204, 3
    %v4068 = vsel %vm4051, %v4065, %v4067
    %v4069 = vrot.slane %v3206, 3
    %v4070 = vsel %vm4051, %v4067, %v4069
    %v4071 = vrot.slane %v3209, 3
    %v4072 = vsel %vm4051, %v4069, %v4071
    %v4073 = vrot.slane %v3211, 3
    %v4074 = vsel %vm4051, %v4071, %v4073
    %v4075 = vrot.slane %v3214, 3
    %v4076 = vsel %vm4051, %v4073, %v4075
    %v4077 = vrot.slane %v3216, 3
    %v4078 = vsel %vm4051, %v4075, %v4077
    %v4079 = vrot.slane %v3219, 3
    %v4080 = vsel %vm4051, %v4077, %v4079
    %v4081 = vrot.slane %v3221, 3
    %v4082 = vsel %vm4051, %v4079, %v4081
    %v4083 = vrot.slane %v3224, 3
    %v4084 = vsel %vm4051, %v4081, %v4083
    %v4085 = vrot.slane %v3226, 3
    %v4086 = vsel %vm4051, %v4083, %v4085
    %v4087 = vrot.slane %v3229, 3
    %v4088 = vsel %vm4051, %v4085, %v4087
    %v4089 = vrot.slane %v3231, 3
    %v4090 = vsel %vm4051, %v4087, %v4089
    %v4091 = vrot.slane %v3234, 3
    %v4092 = vsel %vm4051, %v4089, %v4091
    %v4093 = vrot.slane %v3236, 3
    %v4094 = vsel %vm4051, %v4091, %v4093
    %v4095 = vrot.slane %v3239, 3
    %v4096 = vsel %vm4051, %v4093, %v4095
    %v4097 = vrot.slane %v3241, 3
    %v4098 = vsel %vm4051, %v4095, %v4097
    %v4099 = vrot.slane %v3244, 3
    %v4100 = vsel %vm4051, %v4097, %v4099
    %v4101 = vrot.slane %v3246, 3
    %v4102 = vsel %vm4051, %v4099, %v4101
    %v4103 = vrot.slane %v3249, 3
    %v4104 = vsel %vm4051, %v4101, %v4103
    %v4105 = vrot.slane %v3251, 3
    %v4106 = vsel %vm4051, %v4103, %v4105
    %v4107 = vrot.slane %v3254, 3
    %v4108 = vsel %vm4051, %v4105, %v4107
    %v4109 = vrot.slane %v3256, 3
    %v4110 = vsel %vm4051, %v4107, %v4109
    %v4111 = vrot.slane %v3259, 3
    %v4112 = vsel %vm4051, %v4109, %v4111
    %v4113 = vrot.slane %v3261, 3
    %v4114 = vsel %vm4051, %v4111, %v4113
    %v4115 = vrot.slane %v3264, 3
    %v4116 = vsel %vm4051, %v4113, %v4115
    %v4117 = vrot.slane %v3266, 3
    %v4118 = vsel %vm4051, %v4115, %v4117
    %v4119 = vrot.slane %v3269, 3
    %v4120 = vsel %vm4051, %v4117, %v4119
    %v4121 = vrot.slane %v3271, 3
    %v4122 = vsel %vm4051, %v4119, %v4121
    %v4123 = vrot.slane %v3274, 3
    %v4124 = vsel %vm4051, %v4121, %v4123
    %v4125 = vrot.slane %v3276, 3
    %v4126 = vsel %vm4051, %v4123, %v4125
    %v4127 = vrot.slane %v3279, 3
    %v4128 = vsel %vm4051, %v4125, %v4127
    %v4129 = vrot.slane %v3281, 3
    %v4130 = vsel %vm4051, %v4127, %v4129
    %v4131 = vrot.slane %v3284, 3
    %v4132 = vsel %vm4051, %v4129, %v4131
    %v4133 = vrot.slane %v3286, 3
    %v4134 = vsel %vm4051, %v4131, %v4133
    %v4135 = vrot.slane %v3289, 3
    %v4136 = vsel %vm4051, %v4133, %v4135
    %v4137 = vrot.slane %v3291, 3
    %v4138 = vsel %vm4051, %v4135, %v4137
    %v4139 = vrot.slane %v3294, 3
    %v4140 = vsel %vm4051, %v4137, %v4139
    %v4141 = vrot.slane %v3296, 3
    %v4142 = vsel %vm4051, %v4139, %v4141
    %v4143 = vrot.slane %v3299, 3
    %v4144 = vsel %vm4051, %v4141, %v4143
    %v4145 = vrot.slane %v3301, 3
    %v4146 = vsel %vm4051, %v4143, %v4145
    %v4147 = vrot.slane %v3304, 3
    %v4148 = vsel %vm4051, %v4145, %v4147
    %v4149 = vrot.slane %v3306, 3
    %v4150 = vsel %vm4051, %v4147, %v4149
    %v4151 = vrot.slane %v3309, 3
    %v4152 = vsel %vm4051, %v4149, %v4151
    %v4153 = vrot.slane %v3311, 3
    %v4154 = vsel %vm4051, %v4151, %v4153
    %v4155 = vrot.slane %v3314, 3
    %v4156 = vsel %vm4051, %v4153, %v4155
    %v4157 = vrot.slane %v3316, 3
    %v4158 = vsel %vm4051, %v4155, %v4157
    %v4159 = vrot.slane %v3319, 3
    %v4160 = vsel %vm4051, %v4157, %v4159
    %v4161 = vrot.slane %v3321, 3
    %v4162 = vsel %vm4051, %v4159, %v4161
    %v4163 = vrot.slane %v3324, 3
    %v4164 = vsel %vm4051, %v4161, %v4163
    %v4165 = vrot.slane %v3326, 3
    %v4166 = vsel %vm4051, %v4163, %v4165
    %v4167 = vrot.slane %v3329, 3
    %v4168 = vsel %vm4051, %v4165, %v4167
    %v4169 = vrot.slane %v3331, 3
    %v4170 = vsel %vm4051, %v4167, %v4169
    %v4171 = vrot.slane %v3334, 3
    %v4172 = vsel %vm4051, %v4169, %v4171
    %v4173 = vrot.slane %v3336, 3
    %v4174 = vsel %vm4051, %v4171, %v4173
    %v4175 = vrot.slane %v3339, 3
    %v4176 = vsel %vm4051, %v4173, %v4175
    %v4177 = vrot.slane %v3341, 3
    %v4178 = vsel %vm4051, %v4175, %v4177
    %v4244 = vsel %vm4051, %v4177, %v4052
    %v4245 = vadd.f32 %v3923, %v4054
    %v4246 = vadd.f32 %v3924, %v4056
    %v4247 = vadd.f32 %v3925, %v4058
    %v4248 = vadd.f32 %v3926, %v4060
    %v4249 = vadd.f32 %v3927, %v4062
    %v4250 = vadd.f32 %v3928, %v4064
    %v4251 = vadd.f32 %v3929, %v4066
    %v4252 = vadd.f32 %v3930, %v4068
    %v4253 = vadd.f32 %v3931, %v4070
    %v4254 = vadd.f32 %v3932, %v4072
    %v4255 = vadd.f32 %v3933, %v4074
    %v4256 = vadd.f32 %v3934, %v4076
    %v4257 = vadd.f32 %v3935, %v4078
    %v4258 = vadd.f32 %v3936, %v4080
    %v4259 = vadd.f32 %v3937, %v4082
    %v4260 = vadd.f32 %v3938, %v4084
    %v4261 = vadd.f32 %v3939, %v4086
    %v4262 = vadd.f32 %v3940, %v4088
    %v4263 = vadd.f32 %v3941, %v4090
    %v4264 = vadd.f32 %v3942, %v4092
    %v4265 = vadd.f32 %v3943, %v4094
    %v4266 = vadd.f32 %v3944, %v4096
    %v4267 = vadd.f32 %v3945, %v4098
    %v4268 = vadd.f32 %v3946, %v4100
    %v4269 = vadd.f32 %v3947, %v4102
    %v4270 = vadd.f32 %v3948, %v4104
    %v4271 = vadd.f32 %v3949, %v4106
    %v4272 = vadd.f32 %v3950, %v4108
    %v4273 = vadd.f32 %v3951, %v4110
    %v4274 = vadd.f32 %v3952, %v4112
    %v4275 = vadd.f32 %v3953, %v4114
    %v4276 = vadd.f32 %v3954, %v4116
    %v4277 = vadd.f32 %v3955, %v4118
    %v4278 = vadd.f32 %v3956, %v4120
    %v4279 = vadd.f32 %v3957, %v4122
    %v4280 = vadd.f32 %v3958, %v4124
    %v4281 = vadd.f32 %v3959, %v4126
    %v4282 = vadd.f32 %v3960, %v4128
    %v4283 = vadd.f32 %v3961, %v4130
    %v4284 = vadd.f32 %v3962, %v4132
    %v4285 = vadd.f32 %v3963, %v4134
    %v4286 = vadd.f32 %v3964, %v4136
    %v4287 = vadd.f32 %v3965, %v4138
    %v4288 = vadd.f32 %v3966, %v4140
    %v4289 = vadd.f32 %v3967, %v4142
    %v4290 = vadd.f32 %v3968, %v4144
    %v4291 = vadd.f32 %v3969, %v4146
    %v4292 = vadd.f32 %v3970, %v4148
    %v4293 = vadd.f32 %v3971, %v4150
    %v4294 = vadd.f32 %v3972, %v4152
    %v4295 = vadd.f32 %v3973, %v4154
    %v4296 = vadd.f32 %v3974, %v4156
    %v4297 = vadd.f32 %v3975, %v4158
    %v4298 = vadd.f32 %v3976, %v4160
    %v4299 = vadd.f32 %v3977, %v4162
    %v4300 = vadd.f32 %v3978, %v4164
    %v4301 = vadd.f32 %v3979, %v4166
    %v4302 = vadd.f32 %v3980, %v4168
    %v4303 = vadd.f32 %v3981, %v4170
    %v4304 = vadd.f32 %v3982, %v4172
    %v4305 = vadd.f32 %v3983, %v4174
    %v4306 = vadd.f32 %v3984, %v4176
    %v4307 = vadd.f32 %v3985, %v4178
    %v4308 = vadd.f32 %v3986, %v4244
    %v4309 = vlaneseq
    %v4310 = vand.u32 %v4309, 127
    %vm4311 = vcmp.ge.s32.totalorder %v4310, 0
    %vm4312 = vcmp.lt.s32.totalorder %v4310, 8
    %vm4313 = vmand %vm4311, %vm4312
    %v4314 = vsel %vm4313, 14, 15
    %vm4315 = vcmp.ge.s32.totalorder %v4310, 16
    %vm4316 = vcmp.lt.s32.totalorder %v4310, 24
    %vm4317 = vmand %vm4315, %vm4316
    %v4318 = vsel %vm4317, 13, %v4314
    %vm4319 = vcmp.ge.s32.totalorder %v4310, 40
    %vm4320 = vcmp.lt.s32.totalorder %v4310, 48
    %vm4321 = vmand %vm4319, %vm4320
    %v4322 = vsel %vm4321, 12, %v4318
    %v4323 = vlaneseq
    %v4324 = vshrl.u32 %v4323, 7
    %v4325 = vadd.s32 %v4324, 8
    %vm4326 = vcmp.le.s32.totalorder %v4324, %v4322
    %vm4327 = vcmp.le.s32.totalorder %v4325, %v4322
    %v4328 = vsel %vm4326, %v4245, -inf
    %v4329 = vsel %vm4327, %v4246, -inf
    %v4330 = vsel %vm4326, %v4247, -inf
    %v4331 = vsel %vm4327, %v4248, -inf
    %v4332 = vsel %vm4326, %v4249, -inf
    %v4333 = vsel %vm4327, %v4250, -inf
    %v4334 = vsel %vm4326, %v4251, -inf
    %v4335 = vsel %vm4327, %v4252, -inf
    %v4336 = vsel %vm4326, %v4253, -inf
    %v4337 = vsel %vm4327, %v4254, -inf
    %v4338 = vsel %vm4326, %v4255, -inf
    %v4339 = vsel %vm4327, %v4256, -inf
    %v4340 = vsel %vm4326, %v4257, -inf
    %v4341 = vsel %vm4327, %v4258, -inf
    %v4342 = vsel %vm4326, %v4259, -inf
    %v4343 = vsel %vm4327, %v4260, -inf
    %v4344 = vsel %vm4326, %v4261, -inf
    %v4345 = vsel %vm4327, %v4262, -inf
    %v4346 = vsel %vm4326, %v4263, -inf
    %v4347 = vsel %vm4327, %v4264, -inf
    %v4348 = vsel %vm4326, %v4265, -inf
    %v4349 = vsel %vm4327, %v4266, -inf
    %v4350 = vsel %vm4326, %v4267, -inf
    %v4351 = vsel %vm4327, %v4268, -inf
    %v4352 = vsel %vm4326, %v4269, -inf
    %v4353 = vsel %vm4327, %v4270, -inf
    %v4354 = vsel %vm4326, %v4271, -inf
    %v4355 = vsel %vm4327, %v4272, -inf
    %v4356 = vsel %vm4326, %v4273, -inf
    %v4357 = vsel %vm4327, %v4274, -inf
    %v4358 = vsel %vm4326, %v4275, -inf
    %v4359 = vsel %vm4327, %v4276, -inf
    %v4360 = vsel %vm4326, %v4277, -inf
    %v4361 = vsel %vm4327, %v4278, -inf
    %v4362 = vsel %vm4326, %v4279, -inf
    %v4363 = vsel %vm4327, %v4280, -inf
    %v4364 = vsel %vm4326, %v4281, -inf
    %v4365 = vsel %vm4327, %v4282, -inf
    %v4366 = vsel %vm4326, %v4283, -inf
    %v4367 = vsel %vm4327, %v4284, -inf
    %v4368 = vsel %vm4326, %v4285, -inf
    %v4369 = vsel %vm4327, %v4286, -inf
    %v4370 = vsel %vm4326, %v4287, -inf
    %v4371 = vsel %vm4327, %v4288, -inf
    %v4372 = vsel %vm4326, %v4289, -inf
    %v4373 = vsel %vm4327, %v4290, -inf
    %v4374 = vsel %vm4326, %v4291, -inf
    %v4375 = vsel %vm4327, %v4292, -inf
    %v4376 = vsel %vm4326, %v4293, -inf
    %v4377 = vsel %vm4327, %v4294, -inf
    %v4378 = vsel %vm4326, %v4295, -inf
    %v4379 = vsel %vm4327, %v4296, -inf
    %v4380 = vsel %vm4326, %v4297, -inf
    %v4381 = vsel %vm4327, %v4298, -inf
    %v4382 = vsel %vm4326, %v4299, -inf
    %v4383 = vsel %vm4327, %v4300, -inf
    %v4384 = vsel %vm4326, %v4301, -inf
    %v4385 = vsel %vm4327, %v4302, -inf
    %v4386 = vsel %vm4326, %v4303, -inf
    %v4387 = vsel %vm4327, %v4304, -inf
    %v4388 = vsel %vm4326, %v4305, -inf
    %v4389 = vsel %vm4327, %v4306, -inf
    %v4390 = vsel %vm4326, %v4307, -inf
    %v4391 = vsel %vm4327, %v4308, -inf
    %v4392 = vmax.f32 %v4328, %v4329
    %v4393 = vrot.slane %v4392, 4
    %v4394 = vmax.f32 %v4392, %v4393
    %v4395 = vrot.slane %v4394, 2
    %v4396 = vmax.f32 %v4394, %v4395
    %v4397 = vrot.slane %v4396, 1
    %v4398 = vmax.f32 %v4396, %v4397
    %v4399 = vmax.f32 %v4330, %v4331
    %v4400 = vrot.slane %v4399, 4
    %v4401 = vmax.f32 %v4399, %v4400
    %v4402 = vrot.slane %v4401, 2
    %v4403 = vmax.f32 %v4401, %v4402
    %v4404 = vrot.slane %v4403, 1
    %v4405 = vmax.f32 %v4403, %v4404
    %v4406 = vmax.f32 %v4332, %v4333
    %v4407 = vrot.slane %v4406, 4
    %v4408 = vmax.f32 %v4406, %v4407
    %v4409 = vrot.slane %v4408, 2
    %v4410 = vmax.f32 %v4408, %v4409
    %v4411 = vrot.slane %v4410, 1
    %v4412 = vmax.f32 %v4410, %v4411
    %v4413 = vmax.f32 %v4334, %v4335
    %v4414 = vrot.slane %v4413, 4
    %v4415 = vmax.f32 %v4413, %v4414
    %v4416 = vrot.slane %v4415, 2
    %v4417 = vmax.f32 %v4415, %v4416
    %v4418 = vrot.slane %v4417, 1
    %v4419 = vmax.f32 %v4417, %v4418
    %v4420 = vmax.f32 %v4336, %v4337
    %v4421 = vrot.slane %v4420, 4
    %v4422 = vmax.f32 %v4420, %v4421
    %v4423 = vrot.slane %v4422, 2
    %v4424 = vmax.f32 %v4422, %v4423
    %v4425 = vrot.slane %v4424, 1
    %v4426 = vmax.f32 %v4424, %v4425
    %v4427 = vmax.f32 %v4338, %v4339
    %v4428 = vrot.slane %v4427, 4
    %v4429 = vmax.f32 %v4427, %v4428
    %v4430 = vrot.slane %v4429, 2
    %v4431 = vmax.f32 %v4429, %v4430
    %v4432 = vrot.slane %v4431, 1
    %v4433 = vmax.f32 %v4431, %v4432
    %v4434 = vmax.f32 %v4340, %v4341
    %v4435 = vrot.slane %v4434, 4
    %v4436 = vmax.f32 %v4434, %v4435
    %v4437 = vrot.slane %v4436, 2
    %v4438 = vmax.f32 %v4436, %v4437
    %v4439 = vrot.slane %v4438, 1
    %v4440 = vmax.f32 %v4438, %v4439
    %v4441 = vmax.f32 %v4342, %v4343
    %v4442 = vrot.slane %v4441, 4
    %v4443 = vmax.f32 %v4441, %v4442
    %v4444 = vrot.slane %v4443, 2
    %v4445 = vmax.f32 %v4443, %v4444
    %v4446 = vrot.slane %v4445, 1
    %v4447 = vmax.f32 %v4445, %v4446
    %v4448 = vmax.f32 %v4344, %v4345
    %v4449 = vrot.slane %v4448, 4
    %v4450 = vmax.f32 %v4448, %v4449
    %v4451 = vrot.slane %v4450, 2
    %v4452 = vmax.f32 %v4450, %v4451
    %v4453 = vrot.slane %v4452, 1
    %v4454 = vmax.f32 %v4452, %v4453
    %v4455 = vmax.f32 %v4346, %v4347
    %v4456 = vrot.slane %v4455, 4
    %v4457 = vmax.f32 %v4455, %v4456
    %v4458 = vrot.slane %v4457, 2
    %v4459 = vmax.f32 %v4457, %v4458
    %v4460 = vrot.slane %v4459, 1
    %v4461 = vmax.f32 %v4459, %v4460
    %v4462 = vmax.f32 %v4348, %v4349
    %v4463 = vrot.slane %v4462, 4
    %v4464 = vmax.f32 %v4462, %v4463
    %v4465 = vrot.slane %v4464, 2
    %v4466 = vmax.f32 %v4464, %v4465
    %v4467 = vrot.slane %v4466, 1
    %v4468 = vmax.f32 %v4466, %v4467
    %v4469 = vmax.f32 %v4350, %v4351
    %v4470 = vrot.slane %v4469, 4
    %v4471 = vmax.f32 %v4469, %v4470
    %v4472 = vrot.slane %v4471, 2
    %v4473 = vmax.f32 %v4471, %v4472
    %v4474 = vrot.slane %v4473, 1
    %v4475 = vmax.f32 %v4473, %v4474
    %v4476 = vmax.f32 %v4352, %v4353
    %v4477 = vrot.slane %v4476, 4
    %v4478 = vmax.f32 %v4476, %v4477
    %v4479 = vrot.slane %v4478, 2
    %v4480 = vmax.f32 %v4478, %v4479
    %v4481 = vrot.slane %v4480, 1
    %v4482 = vmax.f32 %v4480, %v4481
    %v4483 = vmax.f32 %v4354, %v4355
    %v4484 = vrot.slane %v4483, 4
    %v4485 = vmax.f32 %v4483, %v4484
    %v4486 = vrot.slane %v4485, 2
    %v4487 = vmax.f32 %v4485, %v4486
    %v4488 = vrot.slane %v4487, 1
    %v4489 = vmax.f32 %v4487, %v4488
    %v4490 = vmax.f32 %v4356, %v4357
    %v4491 = vrot.slane %v4490, 4
    %v4492 = vmax.f32 %v4490, %v4491
    %v4493 = vrot.slane %v4492, 2
    %v4494 = vmax.f32 %v4492, %v4493
    %v4495 = vrot.slane %v4494, 1
    %v4496 = vmax.f32 %v4494, %v4495
    %v4497 = vmax.f32 %v4358, %v4359
    %v4498 = vrot.slane %v4497, 4
    %v4499 = vmax.f32 %v4497, %v4498
    %v4500 = vrot.slane %v4499, 2
    %v4501 = vmax.f32 %v4499, %v4500
    %v4502 = vrot.slane %v4501, 1
    %v4503 = vmax.f32 %v4501, %v4502
    %v4504 = vmax.f32 %v4360, %v4361
    %v4505 = vrot.slane %v4504, 4
    %v4506 = vmax.f32 %v4504, %v4505
    %v4507 = vrot.slane %v4506, 2
    %v4508 = vmax.f32 %v4506, %v4507
    %v4509 = vrot.slane %v4508, 1
    %v4510 = vmax.f32 %v4508, %v4509
    %v4511 = vmax.f32 %v4362, %v4363
    %v4512 = vrot.slane %v4511, 4
    %v4513 = vmax.f32 %v4511, %v4512
    %v4514 = vrot.slane %v4513, 2
    %v4515 = vmax.f32 %v4513, %v4514
    %v4516 = vrot.slane %v4515, 1
    %v4517 = vmax.f32 %v4515, %v4516
    %v4518 = vmax.f32 %v4364, %v4365
    %v4519 = vrot.slane %v4518, 4
    %v4520 = vmax.f32 %v4518, %v4519
    %v4521 = vrot.slane %v4520, 2
    %v4522 = vmax.f32 %v4520, %v4521
    %v4523 = vrot.slane %v4522, 1
    %v4524 = vmax.f32 %v4522, %v4523
    %v4525 = vmax.f32 %v4366, %v4367
    %v4526 = vrot.slane %v4525, 4
    %v4527 = vmax.f32 %v4525, %v4526
    %v4528 = vrot.slane %v4527, 2
    %v4529 = vmax.f32 %v4527, %v4528
    %v4530 = vrot.slane %v4529, 1
    %v4531 = vmax.f32 %v4529, %v4530
    %v4532 = vmax.f32 %v4368, %v4369
    %v4533 = vrot.slane %v4532, 4
    %v4534 = vmax.f32 %v4532, %v4533
    %v4535 = vrot.slane %v4534, 2
    %v4536 = vmax.f32 %v4534, %v4535
    %v4537 = vrot.slane %v4536, 1
    %v4538 = vmax.f32 %v4536, %v4537
    %v4539 = vmax.f32 %v4370, %v4371
    %v4540 = vrot.slane %v4539, 4
    %v4541 = vmax.f32 %v4539, %v4540
    %v4542 = vrot.slane %v4541, 2
    %v4543 = vmax.f32 %v4541, %v4542
    %v4544 = vrot.slane %v4543, 1
    %v4545 = vmax.f32 %v4543, %v4544
    %v4546 = vmax.f32 %v4372, %v4373
    %v4547 = vrot.slane %v4546, 4
    %v4548 = vmax.f32 %v4546, %v4547
    %v4549 = vrot.slane %v4548, 2
    %v4550 = vmax.f32 %v4548, %v4549
    %v4551 = vrot.slane %v4550, 1
    %v4552 = vmax.f32 %v4550, %v4551
    %v4553 = vmax.f32 %v4374, %v4375
    %v4554 = vrot.slane %v4553, 4
    %v4555 = vmax.f32 %v4553, %v4554
    %v4556 = vrot.slane %v4555, 2
    %v4557 = vmax.f32 %v4555, %v4556
    %v4558 = vrot.slane %v4557, 1
    %v4559 = vmax.f32 %v4557, %v4558
    %v4560 = vmax.f32 %v4376, %v4377
    %v4561 = vrot.slane %v4560, 4
    %v4562 = vmax.f32 %v4560, %v4561
    %v4563 = vrot.slane %v4562, 2
    %v4564 = vmax.f32 %v4562, %v4563
    %v4565 = vrot.slane %v4564, 1
    %v4566 = vmax.f32 %v4564, %v4565
    %v4567 = vmax.f32 %v4378, %v4379
    %v4568 = vrot.slane %v4567, 4
    %v4569 = vmax.f32 %v4567, %v4568
    %v4570 = vrot.slane %v4569, 2
    %v4571 = vmax.f32 %v4569, %v4570
    %v4572 = vrot.slane %v4571, 1
    %v4573 = vmax.f32 %v4571, %v4572
    %v4574 = vmax.f32 %v4380, %v4381
    %v4575 = vrot.slane %v4574, 4
    %v4576 = vmax.f32 %v4574, %v4575
    %v4577 = vrot.slane %v4576, 2
    %v4578 = vmax.f32 %v4576, %v4577
    %v4579 = vrot.slane %v4578, 1
    %v4580 = vmax.f32 %v4578, %v4579
    %v4581 = vmax.f32 %v4382, %v4383
    %v4582 = vrot.slane %v4581, 4
    %v4583 = vmax.f32 %v4581, %v4582
    %v4584 = vrot.slane %v4583, 2
    %v4585 = vmax.f32 %v4583, %v4584
    %v4586 = vrot.slane %v4585, 1
    %v4587 = vmax.f32 %v4585, %v4586
    %v4588 = vmax.f32 %v4384, %v4385
    %v4589 = vrot.slane %v4588, 4
    %v4590 = vmax.f32 %v4588, %v4589
    %v4591 = vrot.slane %v4590, 2
    %v4592 = vmax.f32 %v4590, %v4591
    %v4593 = vrot.slane %v4592, 1
    %v4594 = vmax.f32 %v4592, %v4593
    %v4595 = vmax.f32 %v4386, %v4387
    %v4596 = vrot.slane %v4595, 4
    %v4597 = vmax.f32 %v4595, %v4596
    %v4598 = vrot.slane %v4597, 2
    %v4599 = vmax.f32 %v4597, %v4598
    %v4600 = vrot.slane %v4599, 1
    %v4601 = vmax.f32 %v4599, %v4600
    %v4602 = vmax.f32 %v4388, %v4389
    %v4603 = vrot.slane %v4602, 4
    %v4604 = vmax.f32 %v4602, %v4603
    %v4605 = vrot.slane %v4604, 2
    %v4606 = vmax.f32 %v4604, %v4605
    %v4607 = vrot.slane %v4606, 1
    %v4608 = vmax.f32 %v4606, %v4607
    %v4609 = vmax.f32 %v4390, %v4391
    %v4610 = vrot.slane %v4609, 4
    %v4611 = vmax.f32 %v4609, %v4610
    %v4612 = vrot.slane %v4611, 2
    %v4613 = vmax.f32 %v4611, %v4612
    %v4614 = vrot.slane %v4613, 1
    %v4615 = vmax.f32 %v4613, %v4614
    %v4616 = vld [vmem:[%s3] sm:$0x1]
    %v4618 = vperm.slane %v4616, 0
    %v4620 = vadd.f32 %v4398, %v4618
    %v4621 = vadd.f32 %v4405, %v4618
    %v4622 = vadd.f32 %v4412, %v4618
    %v4623 = vadd.f32 %v4419, %v4618
    %v4624 = vadd.f32 %v4426, %v4618
    %v4625 = vadd.f32 %v4433, %v4618
    %v4626 = vadd.f32 %v4440, %v4618
    %v4627 = vadd.f32 %v4447, %v4618
    %v4628 = vadd.f32 %v4454, %v4618
    %v4629 = vadd.f32 %v4461, %v4618
    %v4630 = vadd.f32 %v4468, %v4618
    %v4631 = vadd.f32 %v4475, %v4618
    %v4632 = vadd.f32 %v4482, %v4618
    %v4633 = vadd.f32 %v4489, %v4618
    %v4634 = vadd.f32 %v4496, %v4618
    %v4635 = vadd.f32 %v4503, %v4618
    %v4636 = vadd.f32 %v4510, %v4618
    %v4637 = vadd.f32 %v4517, %v4618
    %v4638 = vadd.f32 %v4524, %v4618
    %v4639 = vadd.f32 %v4531, %v4618
    %v4640 = vadd.f32 %v4538, %v4618
    %v4641 = vadd.f32 %v4545, %v4618
    %v4642 = vadd.f32 %v4552, %v4618
    %v4643 = vadd.f32 %v4559, %v4618
    %v4644 = vadd.f32 %v4566, %v4618
    %v4645 = vadd.f32 %v4573, %v4618
    %v4646 = vadd.f32 %v4580, %v4618
    %v4647 = vadd.f32 %v4587, %v4618
    %v4648 = vadd.f32 %v4594, %v4618
    %v4649 = vadd.f32 %v4601, %v4618
    %v4650 = vadd.f32 %v4608, %v4618
    %v4651 = vadd.f32 %v4615, %v4618
    %v4652 = vmax.f32 %v4620, 0.0
    %v4653 = vmax.f32 %v4621, 0.0
    %v4654 = vmax.f32 %v4622, 0.0
    %v4655 = vmax.f32 %v4623, 0.0
    %v4656 = vmax.f32 %v4624, 0.0
    %v4657 = vmax.f32 %v4625, 0.0
    %v4658 = vmax.f32 %v4626, 0.0
    %v4659 = vmax.f32 %v4627, 0.0
    %v4660 = vmax.f32 %v4628, 0.0
    %v4661 = vmax.f32 %v4629, 0.0
    %v4662 = vmax.f32 %v4630, 0.0
    %v4663 = vmax.f32 %v4631, 0.0
    %v4664 = vmax.f32 %v4632, 0.0
    %v4665 = vmax.f32 %v4633, 0.0
    %v4666 = vmax.f32 %v4634, 0.0
    %v4667 = vmax.f32 %v4635, 0.0
    %v4668 = vmax.f32 %v4636, 0.0
    %v4669 = vmax.f32 %v4637, 0.0
    %v4670 = vmax.f32 %v4638, 0.0
    %v4671 = vmax.f32 %v4639, 0.0
    %v4672 = vmax.f32 %v4640, 0.0
    %v4673 = vmax.f32 %v4641, 0.0
    %v4674 = vmax.f32 %v4642, 0.0
    %v4675 = vmax.f32 %v4643, 0.0
    %v4676 = vmax.f32 %v4644, 0.0
    %v4677 = vmax.f32 %v4645, 0.0
    %v4678 = vmax.f32 %v4646, 0.0
    %v4679 = vmax.f32 %v4647, 0.0
    %v4680 = vmax.f32 %v4648, 0.0
    %v4681 = vmax.f32 %v4649, 0.0
    %v4682 = vmax.f32 %v4650, 0.0
    %v4683 = vmax.f32 %v4651, 0.0
    %v4684 = vpack.c.bf16 %v4652, %v4652
    %v4685 = vpack.c.bf16 %v4653, %v4653
    %v4686 = vpack.c.bf16 %v4654, %v4654
    %v4687 = vpack.c.bf16 %v4655, %v4655
    %v4688 = vpack.c.bf16 %v4656, %v4656
    %v4689 = vpack.c.bf16 %v4657, %v4657
    %v4690 = vpack.c.bf16 %v4658, %v4658
    %v4691 = vpack.c.bf16 %v4659, %v4659
    %v4692 = vpack.c.bf16 %v4660, %v4660
    %v4693 = vpack.c.bf16 %v4661, %v4661
    %v4694 = vpack.c.bf16 %v4662, %v4662
    %v4695 = vpack.c.bf16 %v4663, %v4663
    %v4696 = vpack.c.bf16 %v4664, %v4664
    %v4697 = vpack.c.bf16 %v4665, %v4665
    %v4698 = vpack.c.bf16 %v4666, %v4666
    %v4699 = vpack.c.bf16 %v4667, %v4667
    %v4700 = vpack.c.bf16 %v4668, %v4668
    %v4701 = vpack.c.bf16 %v4669, %v4669
    %v4702 = vpack.c.bf16 %v4670, %v4670
    %v4703 = vpack.c.bf16 %v4671, %v4671
    %v4704 = vpack.c.bf16 %v4672, %v4672
    %v4705 = vpack.c.bf16 %v4673, %v4673
    %v4706 = vpack.c.bf16 %v4674, %v4674
    %v4707 = vpack.c.bf16 %v4675, %v4675
    %v4708 = vpack.c.bf16 %v4676, %v4676
    %v4709 = vpack.c.bf16 %v4677, %v4677
    %v4710 = vpack.c.bf16 %v4678, %v4678
    %v4711 = vpack.c.bf16 %v4679, %v4679
    %v4712 = vpack.c.bf16 %v4680, %v4680
    %v4713 = vpack.c.bf16 %v4681, %v4681
    %v4714 = vpack.c.bf16 %v4682, %v4682
    %v4715 = vpack.c.bf16 %v4683, %v4683
    %v4716 = vld [vmem:[#allocation9] sm:$0xf]
    %v4717 = vld [vmem:[#allocation9 + $0x4] sm:$0xf]
    %v4718 = vld [vmem:[#allocation9 + $0x8] sm:$0xf]
    %v4719 = vld [vmem:[#allocation9 + $0xc] sm:$0xf]
    %v4720 = vld [vmem:[#allocation9 + $0x10] sm:$0xf]
    %v4721 = vld [vmem:[#allocation9 + $0x14] sm:$0xf]
    %v4722 = vld [vmem:[#allocation9 + $0x18] sm:$0xf]
    %v4723 = vld [vmem:[#allocation9 + $0x1c] sm:$0xf]
    %v4724 = vld [vmem:[#allocation9 + $0x20] sm:$0xf]
    %v4725 = vld [vmem:[#allocation9 + $0x24] sm:$0xf]
    %v4726 = vld [vmem:[#allocation9 + $0x28] sm:$0xf]
    %v4727 = vld [vmem:[#allocation9 + $0x2c] sm:$0xf]
    %v4728 = vld [vmem:[#allocation9 + $0x30] sm:$0xf]
    %v4729 = vld [vmem:[#allocation9 + $0x34] sm:$0xf]
    %v4730 = vld [vmem:[#allocation9 + $0x38] sm:$0xf]
    %v4731 = vld [vmem:[#allocation9 + $0x3c] sm:$0xf]
    %v4732 = vld [vmem:[%s5] sm:$0x1]
    %v4734 = vperm.slane %v4732, 0
    %v4768 = vunpack.c.l.b16 %v4684
    %v4769 = vunpack.c.l.b16 %v4685
    %v4770 = vunpack.c.l.b16 %v4686
    %v4771 = vunpack.c.l.b16 %v4687
    %v4772 = vunpack.c.l.b16 %v4688
    %v4773 = vunpack.c.l.b16 %v4689
    %v4774 = vunpack.c.l.b16 %v4690
    %v4775 = vunpack.c.l.b16 %v4691
    %v4776 = vunpack.c.l.b16 %v4692
    %v4777 = vunpack.c.l.b16 %v4693
    %v4778 = vunpack.c.l.b16 %v4694
    %v4779 = vunpack.c.l.b16 %v4695
    %v4780 = vunpack.c.l.b16 %v4696
    %v4781 = vunpack.c.l.b16 %v4697
    %v4782 = vunpack.c.l.b16 %v4698
    %v4783 = vunpack.c.l.b16 %v4699
    %v4784 = vunpack.c.l.b16 %v4700
    %v4785 = vunpack.c.l.b16 %v4701
    %v4786 = vunpack.c.l.b16 %v4702
    %v4787 = vunpack.c.l.b16 %v4703
    %v4788 = vunpack.c.l.b16 %v4704
    %v4789 = vunpack.c.l.b16 %v4705
    %v4790 = vunpack.c.l.b16 %v4706
    %v4791 = vunpack.c.l.b16 %v4707
    %v4792 = vunpack.c.l.b16 %v4708
    %v4793 = vunpack.c.l.b16 %v4709
    %v4794 = vunpack.c.l.b16 %v4710
    %v4795 = vunpack.c.l.b16 %v4711
    %v4796 = vunpack.c.l.b16 %v4712
    %v4797 = vunpack.c.l.b16 %v4713
    %v4798 = vunpack.c.l.b16 %v4714
    %v4799 = vunpack.c.l.b16 %v4715
    %v4800 = vrot.slane %v4769, 7
    %vm4801 = vcmask 1041409
    %v4802 = vsel %vm4801, %v4800, %v4768
    %v4803 = vrot.slane %v4770, 6
    %vm4804 = vcmask 1042434
    %v4805 = vsel %vm4804, %v4803, %v4802
    %v4806 = vrot.slane %v4771, 5
    %vm4807 = vcmask 1043459
    %v4808 = vsel %vm4807, %v4806, %v4805
    %v4809 = vrot.slane %v4772, 4
    %vm4810 = vcmask 1044484
    %v4811 = vsel %vm4810, %v4809, %v4808
    %v4812 = vrot.slane %v4773, 3
    %vm4813 = vcmask 1045509
    %v4814 = vsel %vm4813, %v4812, %v4811
    %v4815 = vrot.slane %v4774, 2
    %vm4816 = vcmask 1046534
    %v4817 = vsel %vm4816, %v4815, %v4814
    %v4818 = vrot.slane %v4775, 1
    %vm4819 = vcmask 1047559
    %v4820 = vsel %vm4819, %v4818, %v4817
    %v4821 = vrot.slane %v4777, 7
    %v4822 = vsel %vm4801, %v4821, %v4776
    %v4823 = vrot.slane %v4778, 6
    %v4824 = vsel %vm4804, %v4823, %v4822
    %v4825 = vrot.slane %v4779, 5
    %v4826 = vsel %vm4807, %v4825, %v4824
    %v4827 = vrot.slane %v4780, 4
    %v4828 = vsel %vm4810, %v4827, %v4826
    %v4829 = vrot.slane %v4781, 3
    %v4830 = vsel %vm4813, %v4829, %v4828
    %v4831 = vrot.slane %v4782, 2
    %v4832 = vsel %vm4816, %v4831, %v4830
    %v4833 = vrot.slane %v4783, 1
    %v4834 = vsel %vm4819, %v4833, %v4832
    %v4835 = vrot.slane %v4785, 7
    %v4836 = vsel %vm4801, %v4835, %v4784
    %v4837 = vrot.slane %v4786, 6
    %v4838 = vsel %vm4804, %v4837, %v4836
    %v4839 = vrot.slane %v4787, 5
    %v4840 = vsel %vm4807, %v4839, %v4838
    %v4841 = vrot.slane %v4788, 4
    %v4842 = vsel %vm4810, %v4841, %v4840
    %v4843 = vrot.slane %v4789, 3
    %v4844 = vsel %vm4813, %v4843, %v4842
    %v4845 = vrot.slane %v4790, 2
    %v4846 = vsel %vm4816, %v4845, %v4844
    %v4847 = vrot.slane %v4791, 1
    %v4848 = vsel %vm4819, %v4847, %v4846
    %v4849 = vrot.slane %v4793, 7
    %v4850 = vsel %vm4801, %v4849, %v4792
    %v4851 = vrot.slane %v4794, 6
    %v4852 = vsel %vm4804, %v4851, %v4850
    %v4853 = vrot.slane %v4795, 5
    %v4854 = vsel %vm4807, %v4853, %v4852
    %v4855 = vrot.slane %v4796, 4
    %v4856 = vsel %vm4810, %v4855, %v4854
    %v4857 = vrot.slane %v4797, 3
    %v4858 = vsel %vm4813, %v4857, %v4856
    %v4859 = vrot.slane %v4798, 2
    %v4860 = vsel %vm4816, %v4859, %v4858
    %v4861 = vrot.slane %v4799, 1
    %v4862 = vsel %vm4819, %v4861, %v4860
    %v4863 = vpack.c.b16 %v4834, %v4820
    %v4864 = vpack.c.b16 %v4862, %v4848
    %v4883 = vunpack.c.l.b16 %v4716
    %v4884 = vunpack.c.l.b16 %v4717
    %v4885 = vunpack.c.l.b16 %v4718
    %v4886 = vunpack.c.l.b16 %v4719
    %v4887 = vunpack.c.l.b16 %v4720
    %v4888 = vunpack.c.l.b16 %v4721
    %v4889 = vunpack.c.l.b16 %v4722
    %v4890 = vunpack.c.l.b16 %v4723
    %v4891 = vunpack.c.l.b16 %v4724
    %v4892 = vunpack.c.l.b16 %v4725
    %v4893 = vunpack.c.l.b16 %v4726
    %v4894 = vunpack.c.l.b16 %v4727
    %v4895 = vunpack.c.l.b16 %v4728
    %v4896 = vunpack.c.l.b16 %v4729
    %v4897 = vunpack.c.l.b16 %v4730
    %v4898 = vunpack.c.l.b16 %v4731
    %v4899 = vpack.c.b16 %v4884, %v4883
    %v4900 = vpack.c.b16 %v4886, %v4885
    %v4901 = vpack.c.b16 %v4888, %v4887
    %v4902 = vpack.c.b16 %v4890, %v4889
    %v4903 = vpack.c.b16 %v4892, %v4891
    %v4904 = vpack.c.b16 %v4894, %v4893
    %v4905 = vpack.c.b16 %v4896, %v4895
    %v4906 = vpack.c.b16 %v4898, %v4897
    %4915 = vmatpush.bf16.msra.mxu0 %v4906
    %4916 = vmatpush.bf16.msra.mxu0 %v4905
    %4917 = vmatpush.bf16.msra.mxu0 %v4904
    %4918 = vmatpush.bf16.msra.mxu0 %v4903
    %4919 = vmatpush.bf16.msra.mxu0 %v4902
    %4920 = vmatpush.bf16.msra.mxu0 %v4901
    %4921 = vmatpush.bf16.msra.mxu0 %v4900
    %4922 = vmatpush.bf16.msra.mxu0 %v4899
    %4923 = vmatmul.bf16.gmra.mxu0 %v4863
    %v4924 = vpop.f32.mrf.mxu0
    %v4925 = vadd.f32 %v4734, %v4924
    %v4926 = vpop.f32.mrf.mxu0
    %v4927 = vadd.f32 %v4734, %v4926
    %4928 = vmatmul.bf16.gmra.mxu0 %v4864
    %v4929 = vpop.f32.mrf.mxu0
    %v4930 = vadd.f32 %v4734, %v4929
    %v4931 = vpop.f32.mrf.mxu0
    %v4932 = vadd.f32 %v4734, %v4931
    %4933 = vdwg.mxu0
    %v4934 = vmax.f32 %v4925, 0.0
    %v4935 = vmax.f32 %v4927, 0.0
    %v4936 = vmax.f32 %v4930, 0.0
    %v4937 = vmax.f32 %v4932, 0.0
    %v4938 = vld [vmem:[%s6] sm:$0x1]
    %s4939 = sld [smem:[#allocation2]]
    %v4940 = vstv %s4939
    %4941 = vmatpush.xpose.msra.mxu0 0.0
    %4942 = vmatpush.xpose.msra.mxu0 0.0
    %4943 = vmatpush.xpose.msra.mxu0 0.0
    %4944 = vmatpush.xpose.msra.mxu0 0.0
    %4945 = vmatpush.xpose.msra.mxu0 0.0
    %4946 = vmatpush.xpose.msra.mxu0 0.0
    %4947 = vmatpush.xpose.msra.mxu0 0.0
    %4948 = vmatpush.xpose.msra.mxu0 0.0
    %4949 = vmatpush.xpose.msra.mxu0 0.0
    %4950 = vmatpush.xpose.msra.mxu0 0.0
    %4951 = vmatpush.xpose.msra.mxu0 0.0
    %4952 = vmatpush.xpose.msra.mxu0 0.0
    %4953 = vmatpush.xpose.msra.mxu0 %v4937
    %4954 = vmatpush.xpose.msra.mxu0 %v4936
    %4955 = vmatpush.xpose.msra.mxu0 %v4935
    %4956 = vmatpush.xpose.msra.mxu0 %v4934
    %4957 = vmatmul.f32.gmra.mxu0 %v4938
    %v4958 = vpop.f32.mrf.mxu0
    %v4959 = vadd.f32 %v4940, %v4958
    %4960 = vdwg.mxu0
    %vm4961 = vcmask 253952
    %4962 = vst.msk [vmem:[#allocation11] sm:$0x1] %vm4961, %v4959
    // Predicated region
    $region50: #{tpu_custom_call.1} parent=1 // pred_check
      _
    $region51: #{tpu_custom_call.1} parent=1 // pred_check_branch
      %4964 = sbr.rel (0) target = $region53
    $region52: #{tpu_custom_call.1} parent=1 // pred_region
      %4966 = vsyncadd [#allocation5], 0
      %s4968 = sshll.u32 [#allocation11], 4
      %s4969 = int_to_ptr.vmem [resolvable:$true] %s4968
      %s4970 = sshll.u32 %s8, 4
      %s4971 = int_to_ptr.hbm [resolvable:$true] %s4970
      %4973 = dma.vmem_to_hbm [thread:$0]  %s4969, 16, %s4971, [#allocation5]
    $region53: #{tpu_custom_call.1} parent=1 // pred_fallthru
      _
    // Predicated region
    $region54: #{tpu_custom_call.1} parent=1 // pred_check
      _
    $region55: #{tpu_custom_call.1} parent=1 // pred_check_branch
      %4975 = sbr.rel (0) target = $region57
    $region56: #{tpu_custom_call.1} parent=1 // pred_region
      %4977 = dma.done [#allocation5], 16
    $region57: #{tpu_custom_call.1} parent=1 // pred_fallthru
      _
    %4978 = vsyncpa [#allocation4], 1
    %4979 = vsyncpa [#allocation7], 1
    %4980 = vsyncpa [#allocation10], 1
    %4981 = vsyncpa [#allocation5], 1

</llo_original>
